<compile_context>
chip_gen: v7x
topology: tpu7x:2x2x1
jax: 0.10.0
libtpu: 0.0.40
codegen_flags: <defaults>
</compile_context>

<pallas_src>
import jax
import jax.numpy as jnp
from jax.experimental import pallas as pl
from jax.experimental.pallas import tpu as pltpu

_LANE = 128
_NUM_PHASES = 5          # 4 BN-statistics phases + 1 apply/residual phase
_BN_EPS = 1e-5           # torch.nn.BatchNorm1d default


def _make_block_kernel(n_points):
    inv_n = 1.0 / float(n_points)

    def kernel(xf_ref, w1_ref, w2_ref, w3_ref, fold_ref, gb_ref,   # inputs
               o_ref,                                              # output
               stats_ref, scale_ref, shift_ref):                   # scratch
        ph = pl.program_id(0)
        t = pl.program_id(1)
        nt = pl.num_programs(1)

        def affine(h, s):
            # Fused BN: h * scale + shift (scale/shift precomputed once per phase).
            return h * scale_ref[s:s + 1, :] + shift_ref[s:s + 1, :]

        def mm(a_f32, w_ref):
            # bf16 MXU operands, f32 accumulation; vector math stays f32.
            return jnp.dot(a_f32.astype(jnp.bfloat16), w_ref[...],
                           preferred_element_type=jnp.float32)

        def chain(stage):
            """Recompute the block up to `stage` for the current row tile."""
            h1 = jnp.dot(xf_ref[...], w1_ref[...],
                         preferred_element_type=jnp.float32)        # linear1
            if stage == 0:
                return h1
            a1 = jnp.maximum(affine(h1, 0), 0.0)                    # relu(bn1)
            # transformer2.linear bias dropped: exact no-op before training-mode BN.
            h2 = mm(a1, w2_ref)                                     # transformer2.linear
            if stage == 1:
                return h2
            a2 = jnp.maximum(affine(h2, 1), 0.0)                    # relu(transformer2.bn)
            if stage == 2:
                return a2
            a3 = jnp.maximum(affine(a2, 2), 0.0)                    # relu(bn2)
            h3 = mm(a3, w3_ref)                                     # linear3
            if stage == 3:
                return h3
            a4 = affine(h3, 3)                                      # bn3
            resid = xf_ref[...].astype(jnp.float32)                 # re-read residual
            return jnp.maximum(a4 + resid, 0.0)

        @pl.when(t == 0)
        def _():
            stats_ref[...] = jnp.zeros_like(stats_ref)

        for s in range(_NUM_PHASES - 1):
            @pl.when(ph == s)
            def _(s=s):
                h = chain(s)
                # Fused statistics pass: sum and sum-of-squares together.
                stats_ref[0:1, :] += jnp.sum(h, axis=0, keepdims=True)
                stats_ref[1:2, :] += jnp.sum(h * h, axis=0, keepdims=True)

                @pl.when(t == nt - 1)
                def _():
                    # Collapse lane groups to per-channel totals and broadcast them
                    # back across the groups with one small MXU pass.
                    tot = jnp.dot(stats_ref[...], fold_ref[...],
                                  preferred_element_type=jnp.float32)
                    mean = tot[0:1, :] * inv_n
                    var = jnp.maximum(tot[1:2, :] * inv_n - mean * mean, 0.0)
                    gamma = gb_ref[2 * s:2 * s + 1, :]
                    beta = gb_ref[2 * s + 1:2 * s + 2, :]
                    scale = gamma * jax.lax.rsqrt(var + _BN_EPS)
                    scale_ref[s:s + 1, :] = scale
                    shift_ref[s:s + 1, :] = beta - mean * scale

        @pl.when(ph == _NUM_PHASES - 1)
        def _():
            o_ref[...] = chain(_NUM_PHASES - 1).astype(o_ref.dtype)

    return kernel


def _pick_folded_tile(n_rows, target):
    """Largest divisor of n_rows that is a multiple of 8 and <= target, else n_rows."""
    if n_rows <= target:
        return n_rows
    for cand in range(min(target, n_rows), 7, -1):
        if n_rows % cand == 0 and cand % 8 == 0:
            return cand
    # TODO(synk): pad the folded row count and mask the statistics accumulation
    # instead of falling back to a single (possibly huge) tile.
    return n_rows


def point_transformer_block(pxo, params, *, tile_points=1024, interpret=False):
    """Forward of PointTransformerBlock.  pxo = (p, x, o); returns [p, y, o]."""
    p, x, o = pxo
    n_pts, c_in = x.shape
    ch = params["w1"].shape[1]
    assert c_in == ch, "residual requires in_planes == planes * expansion"

    # ---- lane-density folding: view G consecutive points as one 128-wide row ----
    if ch <= _LANE:
        assert _LANE % ch == 0, "channel count must divide 128"
        # TODO(synk): channel counts that do not divide 128 need channel padding
        # (zero gamma/beta on the pad lanes) before folding.
        grp = _LANE // ch
    else:
        assert ch % _LANE == 0, "channel count must be a multiple of 128"
        grp = 1
    lanes = grp * ch
    assert n_pts % grp == 0, "point count must be a multiple of the fold group"
    # TODO(synk): ragged N (not a multiple of fold group / tile) needs zero padding
    # plus a row-validity mask in the statistics accumulation.
    n_rows = n_pts // grp

    tile_f = _pick_folded_tile(n_rows, max(8, tile_points // grp))
    n_tiles = n_rows // tile_f

    # ---- parameter preparation (tiny, wrapper side) ----
    eye_g = jnp.eye(grp, dtype=jnp.float32)
    w1f = jnp.kron(eye_g, params["w1"].astype(jnp.float32)).astype(jnp.bfloat16)
    w2f = jnp.kron(eye_g, params["w2"].astype(jnp.float32)).astype(jnp.bfloat16)
    w3f = jnp.kron(eye_g, params["w3"].astype(jnp.float32)).astype(jnp.bfloat16)
    fold = jnp.tile(jnp.eye(ch, dtype=jnp.float32), (grp, grp))            # (L, L)
    gb = jnp.stack([jnp.tile(params[k].reshape(-1).astype(jnp.float32), grp)
                    for k in ("g1", "b1", "g2i", "b2i", "g2", "b2", "g3", "b3")])
    # NOTE: params["bias2"] is intentionally unused (no-op before training-mode BN).

    xf = x.astype(jnp.bfloat16).reshape(n_rows, lanes)

    kernel = _make_block_kernel(n_pts)
    const = lambda ph, t: (0, 0)

    grid_spec = pltpu.PrefetchScalarGridSpec(
        num_scalar_prefetch=0,
        grid=(_NUM_PHASES, n_tiles),
        in_specs=[
            pl.BlockSpec((tile_f, lanes), lambda ph, t: (t, 0)),   # x tiles (streamed)
            pl.BlockSpec((lanes, lanes), const),                   # W1 (VMEM resident)
            pl.BlockSpec((lanes, lanes), const),                   # W2
            pl.BlockSpec((lanes, lanes), const),                   # W3
            pl.BlockSpec((lanes, lanes), const),                   # stats fold matrix
            pl.BlockSpec((8, lanes), const),                       # gammas / betas
        ],
        out_specs=pl.BlockSpec(
            (tile_f, lanes),
            # Only the last (apply) phase produces output; park earlier phases on
            # block 0 so no garbage writebacks are issued.
            lambda ph, t: (jnp.where(ph == _NUM_PHASES - 1, t, 0), 0)),
        scratch_shapes=[
            pltpu.VMEM((8, lanes), jnp.float32),   # rows 0/1: running sum / sumsq
            pltpu.VMEM((4, lanes), jnp.float32),   # per-stage BN scale
            pltpu.VMEM((4, lanes), jnp.float32),   # per-stage BN shift
        ],
    )

    yf = pl.pallas_call(
        kernel,
        out_shape=jax.ShapeDtypeStruct((n_rows, lanes), jnp.float32),
        grid_spec=grid_spec,
        compiler_params=pltpu.CompilerParams(
            # Global-BN accumulation lives in scratch -> grid steps must run in order.
            dimension_semantics=("arbitrary", "arbitrary"),
            # Actual footprint is ~1 MiB; stay well under every chip's physical VMEM.
            vmem_limit_bytes=32 * 1024 * 1024,
        ),
        interpret=interpret,
    )(xf, w1f, w2f, w3f, fold, gb)

    y = yf.reshape(n_pts, ch).astype(x.dtype)
    return [p, y, o]


def init_params(key, in_planes, planes):
    """Deterministic synthetic parameters matching the module's shapes."""
    ks = jax.random.split(key, 4)

    def unif(k, shape, fan_in):
        bound = 1.0 / (fan_in ** 0.5)
        return jax.random.uniform(k, shape, jnp.float32, -bound, bound)

    return {
        "w1": unif(ks[0], (in_planes, planes), in_planes),       # linear1 (no bias)
        "g1": jnp.full((planes,), 1.10, jnp.float32),
        "b1": jnp.full((planes,), 0.05, jnp.float32),
        "w2": unif(ks[1], (planes, planes), planes),             # transformer2.linear
        "bias2": unif(ks[2], (planes,), planes),
        "g2i": jnp.full((planes,), 0.90, jnp.float32),
        "b2i": jnp.full((planes,), -0.02, jnp.float32),
        "g2": jnp.full((planes,), 1.05, jnp.float32),
        "b2": jnp.full((planes,), 0.01, jnp.float32),
        "w3": unif(ks[3], (planes, planes), planes),             # linear3 (no bias)
        "g3": jnp.full((planes,), 0.95, jnp.float32),
        "b3": jnp.full((planes,), 0.03, jnp.float32),
    }


def reference_forward(pxo, params):
    """Pure-JAX reference with the same numerics (bf16 matmul operands, f32 BN)."""
    p, x, o = pxo

    def bn(h, gamma, beta):
        mean = jnp.mean(h, axis=0, keepdims=True)
        var = jnp.mean(h * h, axis=0, keepdims=True) - mean * mean
        return gamma * (h - mean) * jax.lax.rsqrt(var + _BN_EPS) + beta

    def mm(a, w):
        return jnp.dot(a.astype(jnp.bfloat16), w.astype(jnp.bfloat16),
                       preferred_element_type=jnp.float32)

    xx = x.astype(jnp.bfloat16).astype(jnp.float32)   # kernel streams x as bf16
    identity = xx
    h = jnp.maximum(bn(mm(xx, params["w1"]), params["g1"], params["b1"]), 0.0)
    h = mm(h, params["w2"]) + params["bias2"]         # bias kept: exact no-op pre-BN
    h = jnp.maximum(bn(h, params["g2i"], params["b2i"]), 0.0)
    h = jnp.maximum(bn(h, params["g2"], params["b2"]), 0.0)
    h = bn(mm(h, params["w3"]), params["g3"], params["b3"])
    return [p, jnp.maximum(h + identity, 0.0), o]


if __name__ == "__main__":
    key = jax.random.PRNGKey(0)
    k_p, k_x, k_w = jax.random.split(key, 3)

    N = 2048                 # points (folded to 512 lane-dense rows, 2 row tiles)
    in_planes = planes = 32  # residual requires in_planes == planes * expansion

    p = jax.random.normal(k_p, (N, 3), jnp.float32)       # coordinates (pass-through)
    x = jax.random.normal(k_x, (N, in_planes), jnp.float32)
    o = jnp.array([N], dtype=jnp.int32)                    # batch offsets (pass-through)
    params = init_params(k_w, in_planes, planes)

    p_out, y, o_out = point_transformer_block((p, x, o), params)
    y = jax.block_until_ready(y)

    _, y_ref, _ = reference_forward((p, x, o), params)
    y_ref = jax.block_until_ready(y_ref)

    assert y.shape == (N, planes)
    assert bool(jnp.all(y >= 0.0))                         # final ReLU
    max_err = float(jnp.max(jnp.abs(y - y_ref)))
    assert bool(jnp.allclose(y, y_ref, rtol=2e-2, atol=2e-2)), max_err
    print("KERNEL_OK")
</pallas_src>

<mosaic_0001>
module attributes {stable_mosaic.version = 11 : i64} {
  func.func @kernel(%arg0: i32, %arg1: i32, %arg2: memref<256x128xbf16, #tpu.memory_space<vmem>>, %arg3: memref<128x128xbf16, #tpu.memory_space<vmem>>, %arg4: memref<128x128xbf16, #tpu.memory_space<vmem>>, %arg5: memref<128x128xbf16, #tpu.memory_space<vmem>>, %arg6: memref<128x128xf32, #tpu.memory_space<vmem>>, %arg7: memref<8x128xf32, #tpu.memory_space<vmem>>, %arg8: memref<256x128xf32, #tpu.memory_space<vmem>>, %arg9: memref<8x128xf32, #tpu.memory_space<vmem>>, %arg10: memref<4x128xf32, #tpu.memory_space<vmem>>, %arg11: memref<4x128xf32, #tpu.memory_space<vmem>>) attributes {dimension_semantics = [#tpu.dimension_semantics<arbitrary>, #tpu.dimension_semantics<arbitrary>], iteration_bounds = array<i64: 5, 2>, scalar_prefetch = 0 : i64, scratch_operands = 3 : i64, tpu.core_type = #tpu.core_type<tc>, window_params = [{transform_indices = @transform_0, window_bounds = array<i64: 256, 128>}, {pipeline_mode = #tpu.pipeline_mode<synchronous>, transform_indices = @transform_1, window_bounds = array<i64: 128, 128>}, {pipeline_mode = #tpu.pipeline_mode<synchronous>, transform_indices = @transform_2, window_bounds = array<i64: 128, 128>}, {pipeline_mode = #tpu.pipeline_mode<synchronous>, transform_indices = @transform_3, window_bounds = array<i64: 128, 128>}, {pipeline_mode = #tpu.pipeline_mode<synchronous>, transform_indices = @transform_4, window_bounds = array<i64: 128, 128>}, {pipeline_mode = #tpu.pipeline_mode<synchronous>, transform_indices = @transform_5, window_bounds = array<i64: 8, 128>}, {transform_indices = @transform_6, window_bounds = array<i64: 256, 128>}]} {
    %c0_i32 = arith.constant 0 : i32
    %0 = arith.cmpi eq, %arg1, %c0_i32 : i32
    %1 = arith.extui %0 : i1 to i32
    %c0_i32_0 = arith.constant 0 : i32
    %2 = arith.cmpi ne, %1, %c0_i32_0 : i32
    scf.if %2 {
      %cst = arith.constant 0.000000e+00 : f32
      %18 = vector.broadcast %cst : f32 to vector<8x128xf32>
      %c0 = arith.constant 0 : index
      %c0_7 = arith.constant 0 : index
      %19 = vector.load %arg9[%c0, %c0_7] : memref<8x128xf32, #tpu.memory_space<vmem>>, vector<8x128xf32>
      tpu.vector_store %arg9[%c0, %c0_7], %18 {strides = array<i32>} : memref<8x128xf32, #tpu.memory_space<vmem>>, vector<8x128xf32>,
    } else {
    }
    %c0_i32_1 = arith.constant 0 : i32
    %3 = arith.cmpi eq, %arg0, %c0_i32_1 : i32
    %4 = arith.extui %3 : i1 to i32
    %c0_i32_2 = arith.constant 0 : i32
    %5 = arith.cmpi ne, %4, %c0_i32_2 : i32
    scf.if %5 {
      %c0 = arith.constant 0 : index
      %c0_7 = arith.constant 0 : index
      %18 = vector.load %arg2[%c0, %c0_7] : memref<256x128xbf16, #tpu.memory_space<vmem>>, vector<256x128xbf16>
      %c0_8 = arith.constant 0 : index
      %c0_9 = arith.constant 0 : index
      %19 = vector.load %arg3[%c0_8, %c0_9] : memref<128x128xbf16, #tpu.memory_space<vmem>>, vector<128x128xbf16>
      %cst = arith.constant dense<0.000000e+00> : vector<256x128xf32>
      %20 = tpu.matmul %18, %19, %cst {dimension_numbers = #tpu.dot_dimension_numbers<[1], [0], [0], [1], [0, 0, 1, 1], [], []>} : vector<256x128xbf16>, vector<128x128xbf16>, vector<256x128xf32> -> vector<256x128xf32>
      %c0_10 = arith.constant 0 : index
      %c0_11 = arith.constant 0 : index
      %21 = vector.load %arg9[%c0_10, %c0_11] : memref<8x128xf32, #tpu.memory_space<vmem>>, vector<1x128xf32>
      %cst_12 = arith.constant dense<0.000000e+00> : vector<128xf32>
      %22 = vector.multi_reduction <add>, %20, %cst_12 [0] : vector<256x128xf32> to vector<128xf32>
      %23 = vector.shape_cast %22 : vector<128xf32> to vector<1x128xf32>
      %24 = arith.addf %21, %23 : vector<1x128xf32>
      %c0_13 = arith.constant 0 : index
      %c0_14 = arith.constant 0 : index
      %25 = vector.load %arg9[%c0_13, %c0_14] : memref<8x128xf32, #tpu.memory_space<vmem>>, vector<1x128xf32>
      tpu.vector_store %arg9[%c0_13, %c0_14], %24 {strides = array<i32>} : memref<8x128xf32, #tpu.memory_space<vmem>>, vector<1x128xf32>,
      %c1 = arith.constant 1 : index
      %c0_15 = arith.constant 0 : index
      %26 = vector.load %arg9[%c1, %c0_15] : memref<8x128xf32, #tpu.memory_space<vmem>>, vector<1x128xf32>
      %27 = arith.mulf %20, %20 : vector<256x128xf32>
      %cst_16 = arith.constant dense<0.000000e+00> : vector<128xf32>
      %28 = vector.multi_reduction <add>, %27, %cst_16 [0] : vector<256x128xf32> to vector<128xf32>
      %29 = vector.shape_cast %28 : vector<128xf32> to vector<1x128xf32>
      %30 = arith.addf %26, %29 : vector<1x128xf32>
      %c1_17 = arith.constant 1 : index
      %c0_18 = arith.constant 0 : index
      %31 = vector.load %arg9[%c1_17, %c0_18] : memref<8x128xf32, #tpu.memory_space<vmem>>, vector<1x128xf32>
      tpu.vector_store %arg9[%c1_17, %c0_18], %30 {strides = array<i32>} : memref<8x128xf32, #tpu.memory_space<vmem>>, vector<1x128xf32>,
      %c1_i32_19 = arith.constant 1 : i32
      %32 = arith.cmpi eq, %arg1, %c1_i32_19 : i32
      %33 = arith.extui %32 : i1 to i32
      %c0_i32_20 = arith.constant 0 : i32
      %34 = arith.cmpi ne, %33, %c0_i32_20 : i32
      scf.if %34 {
        %c0_21 = arith.constant 0 : index
        %c0_22 = arith.constant 0 : index
        %35 = vector.load %arg9[%c0_21, %c0_22] : memref<8x128xf32, #tpu.memory_space<vmem>>, vector<8x128xf32>
        %c0_23 = arith.constant 0 : index
        %c0_24 = arith.constant 0 : index
        %36 = vector.load %arg6[%c0_23, %c0_24] : memref<128x128xf32, #tpu.memory_space<vmem>>, vector<128x128xf32>
        %cst_25 = arith.constant dense<0.000000e+00> : vector<8x128xf32>
        %37 = tpu.matmul %35, %36, %cst_25 {dimension_numbers = #tpu.dot_dimension_numbers<[1], [0], [0], [1], [0, 0, 1, 1], [], []>} : vector<8x128xf32>, vector<128x128xf32>, vector<8x128xf32> -> vector<8x128xf32>
        %38 = vector.extract_strided_slice %37 {offsets = [0, 0], sizes = [1, 128], strides = [1, 1]} : vector<8x128xf32> to vector<1x128xf32>
        %cst_26 = arith.constant 4.8828125E-4 : f32
        %39 = vector.broadcast %cst_26 : f32 to vector<1x128xf32>
        %40 = arith.mulf %38, %39 : vector<1x128xf32>
        %41 = vector.extract_strided_slice %37 {offsets = [1, 0], sizes = [1, 128], strides = [1, 1]} : vector<8x128xf32> to vector<1x128xf32>
        %cst_27 = arith.constant 4.8828125E-4 : f32
        %42 = vector.broadcast %cst_27 : f32 to vector<1x128xf32>
        %43 = arith.mulf %41, %42 : vector<1x128xf32>
        %44 = arith.mulf %40, %40 : vector<1x128xf32>
        %45 = arith.subf %43, %44 : vector<1x128xf32>
        %cst_28 = arith.constant 0.000000e+00 : f32
        %46 = vector.broadcast %cst_28 : f32 to vector<1x128xf32>
        %47 = arith.maximumf %45, %46 : vector<1x128xf32>
        %c0_29 = arith.constant 0 : index
        %c0_30 = arith.constant 0 : index
        %48 = vector.load %arg7[%c0_29, %c0_30] : memref<8x128xf32, #tpu.memory_space<vmem>>, vector<1x128xf32>
        %c1_31 = arith.constant 1 : index
        %c0_32 = arith.constant 0 : index
        %49 = vector.load %arg7[%c1_31, %c0_32] : memref<8x128xf32, #tpu.memory_space<vmem>>, vector<1x128xf32>
        %cst_33 = arith.constant 9.99999974E-6 : f32
        %50 = vector.broadcast %cst_33 : f32 to vector<1x128xf32>
        %51 = arith.addf %47, %50 : vector<1x128xf32>
        %52 = math.rsqrt %51 : vector<1x128xf32>
        %53 = arith.mulf %48, %52 : vector<1x128xf32>
        %c0_34 = arith.constant 0 : index
        %c0_35 = arith.constant 0 : index
        %54 = vector.load %arg10[%c0_34, %c0_35] : memref<4x128xf32, #tpu.memory_space<vmem>>, vector<1x128xf32>
        tpu.vector_store %arg10[%c0_34, %c0_35], %53 {strides = array<i32>} : memref<4x128xf32, #tpu.memory_space<vmem>>, vector<1x128xf32>,
        %55 = arith.mulf %40, %53 : vector<1x128xf32>
        %56 = arith.subf %49, %55 : vector<1x128xf32>
        %c0_36 = arith.constant 0 : index
        %c0_37 = arith.constant 0 : index
        %57 = vector.load %arg11[%c0_36, %c0_37] : memref<4x128xf32, #tpu.memory_space<vmem>>, vector<1x128xf32>
        tpu.vector_store %arg11[%c0_36, %c0_37], %56 {strides = array<i32>} : memref<4x128xf32, #tpu.memory_space<vmem>>, vector<1x128xf32>,
      } else {
      }
    } else {
    }
    %c1_i32 = arith.constant 1 : i32
    %6 = arith.cmpi eq, %arg0, %c1_i32 : i32
    %7 = arith.extui %6 : i1 to i32
    %c0_i32_3 = arith.constant 0 : i32
    %8 = arith.cmpi ne, %7, %c0_i32_3 : i32
    scf.if %8 {
      %c0 = arith.constant 0 : index
      %c0_7 = arith.constant 0 : index
      %18 = vector.load %arg2[%c0, %c0_7] : memref<256x128xbf16, #tpu.memory_space<vmem>>, vector<256x128xbf16>
      %c0_8 = arith.constant 0 : index
      %c0_9 = arith.constant 0 : index
      %19 = vector.load %arg3[%c0_8, %c0_9] : memref<128x128xbf16, #tpu.memory_space<vmem>>, vector<128x128xbf16>
      %cst = arith.constant dense<0.000000e+00> : vector<256x128xf32>
      %20 = tpu.matmul %18, %19, %cst {dimension_numbers = #tpu.dot_dimension_numbers<[1], [0], [0], [1], [0, 0, 1, 1], [], []>} : vector<256x128xbf16>, vector<128x128xbf16>, vector<256x128xf32> -> vector<256x128xf32>
      %c0_10 = arith.constant 0 : index
      %c0_11 = arith.constant 0 : index
      %21 = vector.load %arg10[%c0_10, %c0_11] : memref<4x128xf32, #tpu.memory_space<vmem>>, vector<1x128xf32>
      %22 = vector.broadcast %21 : vector<1x128xf32> to vector<256x128xf32>
      %23 = arith.mulf %20, %22 : vector<256x128xf32>
      %c0_12 = arith.constant 0 : index
      %c0_13 = arith.constant 0 : index
      %24 = vector.load %arg11[%c0_12, %c0_13] : memref<4x128xf32, #tpu.memory_space<vmem>>, vector<1x128xf32>
      %25 = vector.broadcast %24 : vector<1x128xf32> to vector<256x128xf32>
      %26 = arith.addf %23, %25 : vector<256x128xf32>
      %cst_14 = arith.constant 0.000000e+00 : f32
      %27 = vector.broadcast %cst_14 : f32 to vector<256x128xf32>
      %28 = arith.maximumf %26, %27 : vector<256x128xf32>
      %29 = arith.truncf %28 : vector<256x128xf32> to vector<256x128xbf16>
      %c0_15 = arith.constant 0 : index
      %c0_16 = arith.constant 0 : index
      %30 = vector.load %arg4[%c0_15, %c0_16] : memref<128x128xbf16, #tpu.memory_space<vmem>>, vector<128x128xbf16>
      %cst_17 = arith.constant dense<0.000000e+00> : vector<256x128xf32>
      %31 = tpu.matmul %29, %30, %cst_17 {dimension_numbers = #tpu.dot_dimension_numbers<[1], [0], [0], [1], [0, 0, 1, 1], [], []>} : vector<256x128xbf16>, vector<128x128xbf16>, vector<256x128xf32> -> vector<256x128xf32>
      %c0_18 = arith.constant 0 : index
      %c0_19 = arith.constant 0 : index
      %32 = vector.load %arg9[%c0_18, %c0_19] : memref<8x128xf32, #tpu.memory_space<vmem>>, vector<1x128xf32>
      %cst_20 = arith.constant dense<0.000000e+00> : vector<128xf32>
      %33 = vector.multi_reduction <add>, %31, %cst_20 [0] : vector<256x128xf32> to vector<128xf32>
      %34 = vector.shape_cast %33 : vector<128xf32> to vector<1x128xf32>
      %35 = arith.addf %32, %34 : vector<1x128xf32>
      %c0_21 = arith.constant 0 : index
      %c0_22 = arith.constant 0 : index
      %36 = vector.load %arg9[%c0_21, %c0_22] : memref<8x128xf32, #tpu.memory_space<vmem>>, vector<1x128xf32>
      tpu.vector_store %arg9[%c0_21, %c0_22], %35 {strides = array<i32>} : memref<8x128xf32, #tpu.memory_space<vmem>>, vector<1x128xf32>,
      %c1 = arith.constant 1 : index
      %c0_23 = arith.constant 0 : index
      %37 = vector.load %arg9[%c1, %c0_23] : memref<8x128xf32, #tpu.memory_space<vmem>>, vector<1x128xf32>
      %38 = arith.mulf %31, %31 : vector<256x128xf32>
      %cst_24 = arith.constant dense<0.000000e+00> : vector<128xf32>
      %39 = vector.multi_reduction <add>, %38, %cst_24 [0] : vector<256x128xf32> to vector<128xf32>
      %40 = vector.shape_cast %39 : vector<128xf32> to vector<1x128xf32>
      %41 = arith.addf %37, %40 : vector<1x128xf32>
      %c1_25 = arith.constant 1 : index
      %c0_26 = arith.constant 0 : index
      %42 = vector.load %arg9[%c1_25, %c0_26] : memref<8x128xf32, #tpu.memory_space<vmem>>, vector<1x128xf32>
      tpu.vector_store %arg9[%c1_25, %c0_26], %41 {strides = array<i32>} : memref<8x128xf32, #tpu.memory_space<vmem>>, vector<1x128xf32>,
      %c1_i32_27 = arith.constant 1 : i32
      %43 = arith.cmpi eq, %arg1, %c1_i32_27 : i32
      %44 = arith.extui %43 : i1 to i32
      %c0_i32_28 = arith.constant 0 : i32
      %45 = arith.cmpi ne, %44, %c0_i32_28 : i32
      scf.if %45 {
        %c0_29 = arith.constant 0 : index
        %c0_30 = arith.constant 0 : index
        %46 = vector.load %arg9[%c0_29, %c0_30] : memref<8x128xf32, #tpu.memory_space<vmem>>, vector<8x128xf32>
        %c0_31 = arith.constant 0 : index
        %c0_32 = arith.constant 0 : index
        %47 = vector.load %arg6[%c0_31, %c0_32] : memref<128x128xf32, #tpu.memory_space<vmem>>, vector<128x128xf32>
        %cst_33 = arith.constant dense<0.000000e+00> : vector<8x128xf32>
        %48 = tpu.matmul %46, %47, %cst_33 {dimension_numbers = #tpu.dot_dimension_numbers<[1], [0], [0], [1], [0, 0, 1, 1], [], []>} : vector<8x128xf32>, vector<128x128xf32>, vector<8x128xf32> -> vector<8x128xf32>
        %49 = vector.extract_strided_slice %48 {offsets = [0, 0], sizes = [1, 128], strides = [1, 1]} : vector<8x128xf32> to vector<1x128xf32>
        %cst_34 = arith.constant 4.8828125E-4 : f32
        %50 = vector.broadcast %cst_34 : f32 to vector<1x128xf32>
        %51 = arith.mulf %49, %50 : vector<1x128xf32>
        %52 = vector.extract_strided_slice %48 {offsets = [1, 0], sizes = [1, 128], strides = [1, 1]} : vector<8x128xf32> to vector<1x128xf32>
        %cst_35 = arith.constant 4.8828125E-4 : f32
        %53 = vector.broadcast %cst_35 : f32 to vector<1x128xf32>
        %54 = arith.mulf %52, %53 : vector<1x128xf32>
        %55 = arith.mulf %51, %51 : vector<1x128xf32>
        %56 = arith.subf %54, %55 : vector<1x128xf32>
        %cst_36 = arith.constant 0.000000e+00 : f32
        %57 = vector.broadcast %cst_36 : f32 to vector<1x128xf32>
        %58 = arith.maximumf %56, %57 : vector<1x128xf32>
        %c2 = arith.constant 2 : index
        %c0_37 = arith.constant 0 : index
        %59 = vector.load %arg7[%c2, %c0_37] : memref<8x128xf32, #tpu.memory_space<vmem>>, vector<1x128xf32>
        %c3 = arith.constant 3 : index
        %c0_38 = arith.constant 0 : index
        %60 = vector.load %arg7[%c3, %c0_38] : memref<8x128xf32, #tpu.memory_space<vmem>>, vector<1x128xf32>
        %cst_39 = arith.constant 9.99999974E-6 : f32
        %61 = vector.broadcast %cst_39 : f32 to vector<1x128xf32>
        %62 = arith.addf %58, %61 : vector<1x128xf32>
        %63 = math.rsqrt %62 : vector<1x128xf32>
        %64 = arith.mulf %59, %63 : vector<1x128xf32>
        %c1_40 = arith.constant 1 : index
        %c0_41 = arith.constant 0 : index
        %65 = vector.load %arg10[%c1_40, %c0_41] : memref<4x128xf32, #tpu.memory_space<vmem>>, vector<1x128xf32>
        tpu.vector_store %arg10[%c1_40, %c0_41], %64 {strides = array<i32>} : memref<4x128xf32, #tpu.memory_space<vmem>>, vector<1x128xf32>,
        %66 = arith.mulf %51, %64 : vector<1x128xf32>
        %67 = arith.subf %60, %66 : vector<1x128xf32>
        %c1_42 = arith.constant 1 : index
        %c0_43 = arith.constant 0 : index
        %68 = vector.load %arg11[%c1_42, %c0_43] : memref<4x128xf32, #tpu.memory_space<vmem>>, vector<1x128xf32>
        tpu.vector_store %arg11[%c1_42, %c0_43], %67 {strides = array<i32>} : memref<4x128xf32, #tpu.memory_space<vmem>>, vector<1x128xf32>,
      } else {
      }
    } else {
    }
    %c2_i32 = arith.constant 2 : i32
    %9 = arith.cmpi eq, %arg0, %c2_i32 : i32
    %10 = arith.extui %9 : i1 to i32
    %c0_i32_4 = arith.constant 0 : i32
    %11 = arith.cmpi ne, %10, %c0_i32_4 : i32
    scf.if %11 {
      %c0 = arith.constant 0 : index
      %c0_7 = arith.constant 0 : index
      %18 = vector.load %arg2[%c0, %c0_7] : memref<256x128xbf16, #tpu.memory_space<vmem>>, vector<256x128xbf16>
      %c0_8 = arith.constant 0 : index
      %c0_9 = arith.constant 0 : index
      %19 = vector.load %arg3[%c0_8, %c0_9] : memref<128x128xbf16, #tpu.memory_space<vmem>>, vector<128x128xbf16>
      %cst = arith.constant dense<0.000000e+00> : vector<256x128xf32>
      %20 = tpu.matmul %18, %19, %cst {dimension_numbers = #tpu.dot_dimension_numbers<[1], [0], [0], [1], [0, 0, 1, 1], [], []>} : vector<256x128xbf16>, vector<128x128xbf16>, vector<256x128xf32> -> vector<256x128xf32>
      %c0_10 = arith.constant 0 : index
      %c0_11 = arith.constant 0 : index
      %21 = vector.load %arg10[%c0_10, %c0_11] : memref<4x128xf32, #tpu.memory_space<vmem>>, vector<1x128xf32>
      %22 = vector.broadcast %21 : vector<1x128xf32> to vector<256x128xf32>
      %23 = arith.mulf %20, %22 : vector<256x128xf32>
      %c0_12 = arith.constant 0 : index
      %c0_13 = arith.constant 0 : index
      %24 = vector.load %arg11[%c0_12, %c0_13] : memref<4x128xf32, #tpu.memory_space<vmem>>, vector<1x128xf32>
      %25 = vector.broadcast %24 : vector<1x128xf32> to vector<256x128xf32>
      %26 = arith.addf %23, %25 : vector<256x128xf32>
      %cst_14 = arith.constant 0.000000e+00 : f32
      %27 = vector.broadcast %cst_14 : f32 to vector<256x128xf32>
      %28 = arith.maximumf %26, %27 : vector<256x128xf32>
      %29 = arith.truncf %28 : vector<256x128xf32> to vector<256x128xbf16>
      %c0_15 = arith.constant 0 : index
      %c0_16 = arith.constant 0 : index
      %30 = vector.load %arg4[%c0_15, %c0_16] : memref<128x128xbf16, #tpu.memory_space<vmem>>, vector<128x128xbf16>
      %cst_17 = arith.constant dense<0.000000e+00> : vector<256x128xf32>
      %31 = tpu.matmul %29, %30, %cst_17 {dimension_numbers = #tpu.dot_dimension_numbers<[1], [0], [0], [1], [0, 0, 1, 1], [], []>} : vector<256x128xbf16>, vector<128x128xbf16>, vector<256x128xf32> -> vector<256x128xf32>
      %c1 = arith.constant 1 : index
      %c0_18 = arith.constant 0 : index
      %32 = vector.load %arg10[%c1, %c0_18] : memref<4x128xf32, #tpu.memory_space<vmem>>, vector<1x128xf32>
      %33 = vector.broadcast %32 : vector<1x128xf32> to vector<256x128xf32>
      %34 = arith.mulf %31, %33 : vector<256x128xf32>
      %c1_19 = arith.constant 1 : index
      %c0_20 = arith.constant 0 : index
      %35 = vector.load %arg11[%c1_19, %c0_20] : memref<4x128xf32, #tpu.memory_space<vmem>>, vector<1x128xf32>
      %36 = vector.broadcast %35 : vector<1x128xf32> to vector<256x128xf32>
      %37 = arith.addf %34, %36 : vector<256x128xf32>
      %cst_21 = arith.constant 0.000000e+00 : f32
      %38 = vector.broadcast %cst_21 : f32 to vector<256x128xf32>
      %39 = arith.maximumf %37, %38 : vector<256x128xf32>
      %c0_22 = arith.constant 0 : index
      %c0_23 = arith.constant 0 : index
      %40 = vector.load %arg9[%c0_22, %c0_23] : memref<8x128xf32, #tpu.memory_space<vmem>>, vector<1x128xf32>
      %cst_24 = arith.constant dense<0.000000e+00> : vector<128xf32>
      %41 = vector.multi_reduction <add>, %39, %cst_24 [0] : vector<256x128xf32> to vector<128xf32>
      %42 = vector.shape_cast %41 : vector<128xf32> to vector<1x128xf32>
      %43 = arith.addf %40, %42 : vector<1x128xf32>
      %c0_25 = arith.constant 0 : index
      %c0_26 = arith.constant 0 : index
      %44 = vector.load %arg9[%c0_25, %c0_26] : memref<8x128xf32, #tpu.memory_space<vmem>>, vector<1x128xf32>
      tpu.vector_store %arg9[%c0_25, %c0_26], %43 {strides = array<i32>} : memref<8x128xf32, #tpu.memory_space<vmem>>, vector<1x128xf32>,
      %c1_27 = arith.constant 1 : index
      %c0_28 = arith.constant 0 : index
      %45 = vector.load %arg9[%c1_27, %c0_28] : memref<8x128xf32, #tpu.memory_space<vmem>>, vector<1x128xf32>
      %46 = arith.mulf %39, %39 : vector<256x128xf32>
      %cst_29 = arith.constant dense<0.000000e+00> : vector<128xf32>
      %47 = vector.multi_reduction <add>, %46, %cst_29 [0] : vector<256x128xf32> to vector<128xf32>
      %48 = vector.shape_cast %47 : vector<128xf32> to vector<1x128xf32>
      %49 = arith.addf %45, %48 : vector<1x128xf32>
      %c1_30 = arith.constant 1 : index
      %c0_31 = arith.constant 0 : index
      %50 = vector.load %arg9[%c1_30, %c0_31] : memref<8x128xf32, #tpu.memory_space<vmem>>, vector<1x128xf32>
      tpu.vector_store %arg9[%c1_30, %c0_31], %49 {strides = array<i32>} : memref<8x128xf32, #tpu.memory_space<vmem>>, vector<1x128xf32>,
      %c1_i32_32 = arith.constant 1 : i32
      %51 = arith.cmpi eq, %arg1, %c1_i32_32 : i32
      %52 = arith.extui %51 : i1 to i32
      %c0_i32_33 = arith.constant 0 : i32
      %53 = arith.cmpi ne, %52, %c0_i32_33 : i32
      scf.if %53 {
        %c0_34 = arith.constant 0 : index
        %c0_35 = arith.constant 0 : index
        %54 = vector.load %arg9[%c0_34, %c0_35] : memref<8x128xf32, #tpu.memory_space<vmem>>, vector<8x128xf32>
        %c0_36 = arith.constant 0 : index
        %c0_37 = arith.constant 0 : index
        %55 = vector.load %arg6[%c0_36, %c0_37] : memref<128x128xf32, #tpu.memory_space<vmem>>, vector<128x128xf32>
        %cst_38 = arith.constant dense<0.000000e+00> : vector<8x128xf32>
        %56 = tpu.matmul %54, %55, %cst_38 {dimension_numbers = #tpu.dot_dimension_numbers<[1], [0], [0], [1], [0, 0, 1, 1], [], []>} : vector<8x128xf32>, vector<128x128xf32>, vector<8x128xf32> -> vector<8x128xf32>
        %57 = vector.extract_strided_slice %56 {offsets = [0, 0], sizes = [1, 128], strides = [1, 1]} : vector<8x128xf32> to vector<1x128xf32>
        %cst_39 = arith.constant 4.8828125E-4 : f32
        %58 = vector.broadcast %cst_39 : f32 to vector<1x128xf32>
        %59 = arith.mulf %57, %58 : vector<1x128xf32>
        %60 = vector.extract_strided_slice %56 {offsets = [1, 0], sizes = [1, 128], strides = [1, 1]} : vector<8x128xf32> to vector<1x128xf32>
        %cst_40 = arith.constant 4.8828125E-4 : f32
        %61 = vector.broadcast %cst_40 : f32 to vector<1x128xf32>
        %62 = arith.mulf %60, %61 : vector<1x128xf32>
        %63 = arith.mulf %59, %59 : vector<1x128xf32>
        %64 = arith.subf %62, %63 : vector<1x128xf32>
        %cst_41 = arith.constant 0.000000e+00 : f32
        %65 = vector.broadcast %cst_41 : f32 to vector<1x128xf32>
        %66 = arith.maximumf %64, %65 : vector<1x128xf32>
        %c4 = arith.constant 4 : index
        %c0_42 = arith.constant 0 : index
        %67 = vector.load %arg7[%c4, %c0_42] : memref<8x128xf32, #tpu.memory_space<vmem>>, vector<1x128xf32>
        %c5 = arith.constant 5 : index
        %c0_43 = arith.constant 0 : index
        %68 = vector.load %arg7[%c5, %c0_43] : memref<8x128xf32, #tpu.memory_space<vmem>>, vector<1x128xf32>
        %cst_44 = arith.constant 9.99999974E-6 : f32
        %69 = vector.broadcast %cst_44 : f32 to vector<1x128xf32>
        %70 = arith.addf %66, %69 : vector<1x128xf32>
        %71 = math.rsqrt %70 : vector<1x128xf32>
        %72 = arith.mulf %67, %71 : vector<1x128xf32>
        %c2 = arith.constant 2 : index
        %c0_45 = arith.constant 0 : index
        %73 = vector.load %arg10[%c2, %c0_45] : memref<4x128xf32, #tpu.memory_space<vmem>>, vector<1x128xf32>
        tpu.vector_store %arg10[%c2, %c0_45], %72 {strides = array<i32>} : memref<4x128xf32, #tpu.memory_space<vmem>>, vector<1x128xf32>,
        %74 = arith.mulf %59, %72 : vector<1x128xf32>
        %75 = arith.subf %68, %74 : vector<1x128xf32>
        %c2_46 = arith.constant 2 : index
        %c0_47 = arith.constant 0 : index
        %76 = vector.load %arg11[%c2_46, %c0_47] : memref<4x128xf32, #tpu.memory_space<vmem>>, vector<1x128xf32>
        tpu.vector_store %arg11[%c2_46, %c0_47], %75 {strides = array<i32>} : memref<4x128xf32, #tpu.memory_space<vmem>>, vector<1x128xf32>,
      } else {
      }
    } else {
    }
    %c3_i32 = arith.constant 3 : i32
    %12 = arith.cmpi eq, %arg0, %c3_i32 : i32
    %13 = arith.extui %12 : i1 to i32
    %c0_i32_5 = arith.constant 0 : i32
    %14 = arith.cmpi ne, %13, %c0_i32_5 : i32
    scf.if %14 {
      %c0 = arith.constant 0 : index
      %c0_7 = arith.constant 0 : index
      %18 = vector.load %arg2[%c0, %c0_7] : memref<256x128xbf16, #tpu.memory_space<vmem>>, vector<256x128xbf16>
      %c0_8 = arith.constant 0 : index
      %c0_9 = arith.constant 0 : index
      %19 = vector.load %arg3[%c0_8, %c0_9] : memref<128x128xbf16, #tpu.memory_space<vmem>>, vector<128x128xbf16>
      %cst = arith.constant dense<0.000000e+00> : vector<256x128xf32>
      %20 = tpu.matmul %18, %19, %cst {dimension_numbers = #tpu.dot_dimension_numbers<[1], [0], [0], [1], [0, 0, 1, 1], [], []>} : vector<256x128xbf16>, vector<128x128xbf16>, vector<256x128xf32> -> vector<256x128xf32>
      %c0_10 = arith.constant 0 : index
      %c0_11 = arith.constant 0 : index
      %21 = vector.load %arg10[%c0_10, %c0_11] : memref<4x128xf32, #tpu.memory_space<vmem>>, vector<1x128xf32>
      %22 = vector.broadcast %21 : vector<1x128xf32> to vector<256x128xf32>
      %23 = arith.mulf %20, %22 : vector<256x128xf32>
      %c0_12 = arith.constant 0 : index
      %c0_13 = arith.constant 0 : index
      %24 = vector.load %arg11[%c0_12, %c0_13] : memref<4x128xf32, #tpu.memory_space<vmem>>, vector<1x128xf32>
      %25 = vector.broadcast %24 : vector<1x128xf32> to vector<256x128xf32>
      %26 = arith.addf %23, %25 : vector<256x128xf32>
      %cst_14 = arith.constant 0.000000e+00 : f32
      %27 = vector.broadcast %cst_14 : f32 to vector<256x128xf32>
      %28 = arith.maximumf %26, %27 : vector<256x128xf32>
      %29 = arith.truncf %28 : vector<256x128xf32> to vector<256x128xbf16>
      %c0_15 = arith.constant 0 : index
      %c0_16 = arith.constant 0 : index
      %30 = vector.load %arg4[%c0_15, %c0_16] : memref<128x128xbf16, #tpu.memory_space<vmem>>, vector<128x128xbf16>
      %cst_17 = arith.constant dense<0.000000e+00> : vector<256x128xf32>
      %31 = tpu.matmul %29, %30, %cst_17 {dimension_numbers = #tpu.dot_dimension_numbers<[1], [0], [0], [1], [0, 0, 1, 1], [], []>} : vector<256x128xbf16>, vector<128x128xbf16>, vector<256x128xf32> -> vector<256x128xf32>
      %c1 = arith.constant 1 : index
      %c0_18 = arith.constant 0 : index
      %32 = vector.load %arg10[%c1, %c0_18] : memref<4x128xf32, #tpu.memory_space<vmem>>, vector<1x128xf32>
      %33 = vector.broadcast %32 : vector<1x128xf32> to vector<256x128xf32>
      %34 = arith.mulf %31, %33 : vector<256x128xf32>
      %c1_19 = arith.constant 1 : index
      %c0_20 = arith.constant 0 : index
      %35 = vector.load %arg11[%c1_19, %c0_20] : memref<4x128xf32, #tpu.memory_space<vmem>>, vector<1x128xf32>
      %36 = vector.broadcast %35 : vector<1x128xf32> to vector<256x128xf32>
      %37 = arith.addf %34, %36 : vector<256x128xf32>
      %cst_21 = arith.constant 0.000000e+00 : f32
      %38 = vector.broadcast %cst_21 : f32 to vector<256x128xf32>
      %39 = arith.maximumf %37, %38 : vector<256x128xf32>
      %c2 = arith.constant 2 : index
      %c0_22 = arith.constant 0 : index
      %40 = vector.load %arg10[%c2, %c0_22] : memref<4x128xf32, #tpu.memory_space<vmem>>, vector<1x128xf32>
      %41 = vector.broadcast %40 : vector<1x128xf32> to vector<256x128xf32>
      %42 = arith.mulf %39, %41 : vector<256x128xf32>
      %c2_23 = arith.constant 2 : index
      %c0_24 = arith.constant 0 : index
      %43 = vector.load %arg11[%c2_23, %c0_24] : memref<4x128xf32, #tpu.memory_space<vmem>>, vector<1x128xf32>
      %44 = vector.broadcast %43 : vector<1x128xf32> to vector<256x128xf32>
      %45 = arith.addf %42, %44 : vector<256x128xf32>
      %cst_25 = arith.constant 0.000000e+00 : f32
      %46 = vector.broadcast %cst_25 : f32 to vector<256x128xf32>
      %47 = arith.maximumf %45, %46 : vector<256x128xf32>
      %48 = arith.truncf %47 : vector<256x128xf32> to vector<256x128xbf16>
      %c0_26 = arith.constant 0 : index
      %c0_27 = arith.constant 0 : index
      %49 = vector.load %arg5[%c0_26, %c0_27] : memref<128x128xbf16, #tpu.memory_space<vmem>>, vector<128x128xbf16>
      %cst_28 = arith.constant dense<0.000000e+00> : vector<256x128xf32>
      %50 = tpu.matmul %48, %49, %cst_28 {dimension_numbers = #tpu.dot_dimension_numbers<[1], [0], [0], [1], [0, 0, 1, 1], [], []>} : vector<256x128xbf16>, vector<128x128xbf16>, vector<256x128xf32> -> vector<256x128xf32>
      %c0_29 = arith.constant 0 : index
      %c0_30 = arith.constant 0 : index
      %51 = vector.load %arg9[%c0_29, %c0_30] : memref<8x128xf32, #tpu.memory_space<vmem>>, vector<1x128xf32>
      %cst_31 = arith.constant dense<0.000000e+00> : vector<128xf32>
      %52 = vector.multi_reduction <add>, %50, %cst_31 [0] : vector<256x128xf32> to vector<128xf32>
      %53 = vector.shape_cast %52 : vector<128xf32> to vector<1x128xf32>
      %54 = arith.addf %51, %53 : vector<1x128xf32>
      %c0_32 = arith.constant 0 : index
      %c0_33 = arith.constant 0 : index
      %55 = vector.load %arg9[%c0_32, %c0_33] : memref<8x128xf32, #tpu.memory_space<vmem>>, vector<1x128xf32>
      tpu.vector_store %arg9[%c0_32, %c0_33], %54 {strides = array<i32>} : memref<8x128xf32, #tpu.memory_space<vmem>>, vector<1x128xf32>,
      %c1_34 = arith.constant 1 : index
      %c0_35 = arith.constant 0 : index
      %56 = vector.load %arg9[%c1_34, %c0_35] : memref<8x128xf32, #tpu.memory_space<vmem>>, vector<1x128xf32>
      %57 = arith.mulf %50, %50 : vector<256x128xf32>
      %cst_36 = arith.constant dense<0.000000e+00> : vector<128xf32>
      %58 = vector.multi_reduction <add>, %57, %cst_36 [0] : vector<256x128xf32> to vector<128xf32>
      %59 = vector.shape_cast %58 : vector<128xf32> to vector<1x128xf32>
      %60 = arith.addf %56, %59 : vector<1x128xf32>
      %c1_37 = arith.constant 1 : index
      %c0_38 = arith.constant 0 : index
      %61 = vector.load %arg9[%c1_37, %c0_38] : memref<8x128xf32, #tpu.memory_space<vmem>>, vector<1x128xf32>
      tpu.vector_store %arg9[%c1_37, %c0_38], %60 {strides = array<i32>} : memref<8x128xf32, #tpu.memory_space<vmem>>, vector<1x128xf32>,
      %c1_i32_39 = arith.constant 1 : i32
      %62 = arith.cmpi eq, %arg1, %c1_i32_39 : i32
      %63 = arith.extui %62 : i1 to i32
      %c0_i32_40 = arith.constant 0 : i32
      %64 = arith.cmpi ne, %63, %c0_i32_40 : i32
      scf.if %64 {
        %c0_41 = arith.constant 0 : index
        %c0_42 = arith.constant 0 : index
        %65 = vector.load %arg9[%c0_41, %c0_42] : memref<8x128xf32, #tpu.memory_space<vmem>>, vector<8x128xf32>
        %c0_43 = arith.constant 0 : index
        %c0_44 = arith.constant 0 : index
        %66 = vector.load %arg6[%c0_43, %c0_44] : memref<128x128xf32, #tpu.memory_space<vmem>>, vector<128x128xf32>
        %cst_45 = arith.constant dense<0.000000e+00> : vector<8x128xf32>
        %67 = tpu.matmul %65, %66, %cst_45 {dimension_numbers = #tpu.dot_dimension_numbers<[1], [0], [0], [1], [0, 0, 1, 1], [], []>} : vector<8x128xf32>, vector<128x128xf32>, vector<8x128xf32> -> vector<8x128xf32>
        %68 = vector.extract_strided_slice %67 {offsets = [0, 0], sizes = [1, 128], strides = [1, 1]} : vector<8x128xf32> to vector<1x128xf32>
        %cst_46 = arith.constant 4.8828125E-4 : f32
        %69 = vector.broadcast %cst_46 : f32 to vector<1x128xf32>
        %70 = arith.mulf %68, %69 : vector<1x128xf32>
        %71 = vector.extract_strided_slice %67 {offsets = [1, 0], sizes = [1, 128], strides = [1, 1]} : vector<8x128xf32> to vector<1x128xf32>
        %cst_47 = arith.constant 4.8828125E-4 : f32
        %72 = vector.broadcast %cst_47 : f32 to vector<1x128xf32>
        %73 = arith.mulf %71, %72 : vector<1x128xf32>
        %74 = arith.mulf %70, %70 : vector<1x128xf32>
        %75 = arith.subf %73, %74 : vector<1x128xf32>
        %cst_48 = arith.constant 0.000000e+00 : f32
        %76 = vector.broadcast %cst_48 : f32 to vector<1x128xf32>
        %77 = arith.maximumf %75, %76 : vector<1x128xf32>
        %c6 = arith.constant 6 : index
        %c0_49 = arith.constant 0 : index
        %78 = vector.load %arg7[%c6, %c0_49] : memref<8x128xf32, #tpu.memory_space<vmem>>, vector<1x128xf32>
        %c7 = arith.constant 7 : index
        %c0_50 = arith.constant 0 : index
        %79 = vector.load %arg7[%c7, %c0_50] : memref<8x128xf32, #tpu.memory_space<vmem>>, vector<1x128xf32>
        %cst_51 = arith.constant 9.99999974E-6 : f32
        %80 = vector.broadcast %cst_51 : f32 to vector<1x128xf32>
        %81 = arith.addf %77, %80 : vector<1x128xf32>
        %82 = math.rsqrt %81 : vector<1x128xf32>
        %83 = arith.mulf %78, %82 : vector<1x128xf32>
        %c3 = arith.constant 3 : index
        %c0_52 = arith.constant 0 : index
        %84 = vector.load %arg10[%c3, %c0_52] : memref<4x128xf32, #tpu.memory_space<vmem>>, vector<1x128xf32>
        tpu.vector_store %arg10[%c3, %c0_52], %83 {strides = array<i32>} : memref<4x128xf32, #tpu.memory_space<vmem>>, vector<1x128xf32>,
        %85 = arith.mulf %70, %83 : vector<1x128xf32>
        %86 = arith.subf %79, %85 : vector<1x128xf32>
        %c3_53 = arith.constant 3 : index
        %c0_54 = arith.constant 0 : index
        %87 = vector.load %arg11[%c3_53, %c0_54] : memref<4x128xf32, #tpu.memory_space<vmem>>, vector<1x128xf32>
        tpu.vector_store %arg11[%c3_53, %c0_54], %86 {strides = array<i32>} : memref<4x128xf32, #tpu.memory_space<vmem>>, vector<1x128xf32>,
      } else {
      }
    } else {
    }
    %c4_i32 = arith.constant 4 : i32
    %15 = arith.cmpi eq, %arg0, %c4_i32 : i32
    %16 = arith.extui %15 : i1 to i32
    %c0_i32_6 = arith.constant 0 : i32
    %17 = arith.cmpi ne, %16, %c0_i32_6 : i32
    scf.if %17 {
      %c0 = arith.constant 0 : index
      %c0_7 = arith.constant 0 : index
      %18 = vector.load %arg2[%c0, %c0_7] : memref<256x128xbf16, #tpu.memory_space<vmem>>, vector<256x128xbf16>
      %c0_8 = arith.constant 0 : index
      %c0_9 = arith.constant 0 : index
      %19 = vector.load %arg3[%c0_8, %c0_9] : memref<128x128xbf16, #tpu.memory_space<vmem>>, vector<128x128xbf16>
      %cst = arith.constant dense<0.000000e+00> : vector<256x128xf32>
      %20 = tpu.matmul %18, %19, %cst {dimension_numbers = #tpu.dot_dimension_numbers<[1], [0], [0], [1], [0, 0, 1, 1], [], []>} : vector<256x128xbf16>, vector<128x128xbf16>, vector<256x128xf32> -> vector<256x128xf32>
      %c0_10 = arith.constant 0 : index
      %c0_11 = arith.constant 0 : index
      %21 = vector.load %arg10[%c0_10, %c0_11] : memref<4x128xf32, #tpu.memory_space<vmem>>, vector<1x128xf32>
      %22 = vector.broadcast %21 : vector<1x128xf32> to vector<256x128xf32>
      %23 = arith.mulf %20, %22 : vector<256x128xf32>
      %c0_12 = arith.constant 0 : index
      %c0_13 = arith.constant 0 : index
      %24 = vector.load %arg11[%c0_12, %c0_13] : memref<4x128xf32, #tpu.memory_space<vmem>>, vector<1x128xf32>
      %25 = vector.broadcast %24 : vector<1x128xf32> to vector<256x128xf32>
      %26 = arith.addf %23, %25 : vector<256x128xf32>
      %cst_14 = arith.constant 0.000000e+00 : f32
      %27 = vector.broadcast %cst_14 : f32 to vector<256x128xf32>
      %28 = arith.maximumf %26, %27 : vector<256x128xf32>
      %29 = arith.truncf %28 : vector<256x128xf32> to vector<256x128xbf16>
      %c0_15 = arith.constant 0 : index
      %c0_16 = arith.constant 0 : index
      %30 = vector.load %arg4[%c0_15, %c0_16] : memref<128x128xbf16, #tpu.memory_space<vmem>>, vector<128x128xbf16>
      %cst_17 = arith.constant dense<0.000000e+00> : vector<256x128xf32>
      %31 = tpu.matmul %29, %30, %cst_17 {dimension_numbers = #tpu.dot_dimension_numbers<[1], [0], [0], [1], [0, 0, 1, 1], [], []>} : vector<256x128xbf16>, vector<128x128xbf16>, vector<256x128xf32> -> vector<256x128xf32>
      %c1 = arith.constant 1 : index
      %c0_18 = arith.constant 0 : index
      %32 = vector.load %arg10[%c1, %c0_18] : memref<4x128xf32, #tpu.memory_space<vmem>>, vector<1x128xf32>
      %33 = vector.broadcast %32 : vector<1x128xf32> to vector<256x128xf32>
      %34 = arith.mulf %31, %33 : vector<256x128xf32>
      %c1_19 = arith.constant 1 : index
      %c0_20 = arith.constant 0 : index
      %35 = vector.load %arg11[%c1_19, %c0_20] : memref<4x128xf32, #tpu.memory_space<vmem>>, vector<1x128xf32>
      %36 = vector.broadcast %35 : vector<1x128xf32> to vector<256x128xf32>
      %37 = arith.addf %34, %36 : vector<256x128xf32>
      %cst_21 = arith.constant 0.000000e+00 : f32
      %38 = vector.broadcast %cst_21 : f32 to vector<256x128xf32>
      %39 = arith.maximumf %37, %38 : vector<256x128xf32>
      %c2 = arith.constant 2 : index
      %c0_22 = arith.constant 0 : index
      %40 = vector.load %arg10[%c2, %c0_22] : memref<4x128xf32, #tpu.memory_space<vmem>>, vector<1x128xf32>
      %41 = vector.broadcast %40 : vector<1x128xf32> to vector<256x128xf32>
      %42 = arith.mulf %39, %41 : vector<256x128xf32>
      %c2_23 = arith.constant 2 : index
      %c0_24 = arith.constant 0 : index
      %43 = vector.load %arg11[%c2_23, %c0_24] : memref<4x128xf32, #tpu.memory_space<vmem>>, vector<1x128xf32>
      %44 = vector.broadcast %43 : vector<1x128xf32> to vector<256x128xf32>
      %45 = arith.addf %42, %44 : vector<256x128xf32>
      %cst_25 = arith.constant 0.000000e+00 : f32
      %46 = vector.broadcast %cst_25 : f32 to vector<256x128xf32>
      %47 = arith.maximumf %45, %46 : vector<256x128xf32>
      %48 = arith.truncf %47 : vector<256x128xf32> to vector<256x128xbf16>
      %c0_26 = arith.constant 0 : index
      %c0_27 = arith.constant 0 : index
      %49 = vector.load %arg5[%c0_26, %c0_27] : memref<128x128xbf16, #tpu.memory_space<vmem>>, vector<128x128xbf16>
      %cst_28 = arith.constant dense<0.000000e+00> : vector<256x128xf32>
      %50 = tpu.matmul %48, %49, %cst_28 {dimension_numbers = #tpu.dot_dimension_numbers<[1], [0], [0], [1], [0, 0, 1, 1], [], []>} : vector<256x128xbf16>, vector<128x128xbf16>, vector<256x128xf32> -> vector<256x128xf32>
      %c3 = arith.constant 3 : index
      %c0_29 = arith.constant 0 : index
      %51 = vector.load %arg10[%c3, %c0_29] : memref<4x128xf32, #tpu.memory_space<vmem>>, vector<1x128xf32>
      %52 = vector.broadcast %51 : vector<1x128xf32> to vector<256x128xf32>
      %53 = arith.mulf %50, %52 : vector<256x128xf32>
      %c3_30 = arith.constant 3 : index
      %c0_31 = arith.constant 0 : index
      %54 = vector.load %arg11[%c3_30, %c0_31] : memref<4x128xf32, #tpu.memory_space<vmem>>, vector<1x128xf32>
      %55 = vector.broadcast %54 : vector<1x128xf32> to vector<256x128xf32>
      %56 = arith.addf %53, %55 : vector<256x128xf32>
      %c0_32 = arith.constant 0 : index
      %c0_33 = arith.constant 0 : index
      %57 = vector.load %arg2[%c0_32, %c0_33] : memref<256x128xbf16, #tpu.memory_space<vmem>>, vector<256x128xbf16>
      %58 = arith.extf %57 : vector<256x128xbf16> to vector<256x128xf32>
      %59 = arith.addf %56, %58 : vector<256x128xf32>
      %cst_34 = arith.constant 0.000000e+00 : f32
      %60 = vector.broadcast %cst_34 : f32 to vector<256x128xf32>
      %61 = arith.maximumf %59, %60 : vector<256x128xf32>
      %c0_35 = arith.constant 0 : index
      %c0_36 = arith.constant 0 : index
      %62 = vector.load %arg8[%c0_35, %c0_36] : memref<256x128xf32, #tpu.memory_space<vmem>>, vector<256x128xf32>
      tpu.vector_store %arg8[%c0_35, %c0_36], %61 {strides = array<i32>} : memref<256x128xf32, #tpu.memory_space<vmem>>, vector<256x128xf32>,
    } else {
    }
    return
  }
  func.func @transform_0(%arg0: i32, %arg1: i32) -> (i32, i32) {
    %c0_i32 = arith.constant 0 : i32
    %c0_i32_0 = arith.constant 0 : i32
    return %arg1, %c0_i32 : i32, i32
  }
  func.func @transform_1(%arg0: i32, %arg1: i32) -> (i32, i32) {
    %c0_i32 = arith.constant 0 : i32
    %c0_i32_0 = arith.constant 0 : i32
    %c0_i32_1 = arith.constant 0 : i32
    return %c0_i32, %c0_i32_0 : i32, i32
  }
  func.func @transform_2(%arg0: i32, %arg1: i32) -> (i32, i32) {
    %c0_i32 = arith.constant 0 : i32
    %c0_i32_0 = arith.constant 0 : i32
    %c0_i32_1 = arith.constant 0 : i32
    return %c0_i32, %c0_i32_0 : i32, i32
  }
  func.func @transform_3(%arg0: i32, %arg1: i32) -> (i32, i32) {
    %c0_i32 = arith.constant 0 : i32
    %c0_i32_0 = arith.constant 0 : i32
    %c0_i32_1 = arith.constant 0 : i32
    return %c0_i32, %c0_i32_0 : i32, i32
  }
  func.func @transform_4(%arg0: i32, %arg1: i32) -> (i32, i32) {
    %c0_i32 = arith.constant 0 : i32
    %c0_i32_0 = arith.constant 0 : i32
    %c0_i32_1 = arith.constant 0 : i32
    return %c0_i32, %c0_i32_0 : i32, i32
  }
  func.func @transform_5(%arg0: i32, %arg1: i32) -> (i32, i32) {
    %c0_i32 = arith.constant 0 : i32
    %c0_i32_0 = arith.constant 0 : i32
    %c0_i32_1 = arith.constant 0 : i32
    return %c0_i32, %c0_i32_0 : i32, i32
  }
  func.func @transform_6(%arg0: i32, %arg1: i32) -> (i32, i32) {
    %c4_i32 = arith.constant 4 : i32
    %0 = arith.cmpi eq, %arg0, %c4_i32 : i32
    %c0_i32 = arith.constant 0 : i32
    %1 = arith.select %0, %arg1, %c0_i32 : i32
    %c0_i32_0 = arith.constant 0 : i32
    %c0_i32_1 = arith.constant 0 : i32
    return %1, %c0_i32_0 : i32, i32
  }
}

</mosaic_0001>

<llo_original>
// kernel: tpu_custom_call.1
$region0: #{tpu_custom_call.1}
  #allocation0 [shape = 'u32[]', space=smem, size = 0x4, offset = 0x4, fixed_abs, tag = 'smem constant byte address 0x4 - core index']
  #allocation1 [shape = 'u32[144,128]{1,0:T(1,128)}', space=vmem, size = 0x12000, scoped, tag = 'internal scratch']
  #allocation2 [shape = 'f32[8,128]{1,0:T(8,128)}', space=vmem, size = 0x1000, scoped, tag = 'scratch operand']
  #allocation3 [shape = 'f32[4,128]{1,0:T(4,128)}', space=vmem, size = 0x800, scoped, tag = 'scratch operand']
  #allocation4 [shape = 'f32[4,128]{1,0:T(4,128)}', space=vmem, size = 0x800, scoped, tag = 'scratch operand']
  %s0 = inlined_call_operand.hbm [shape: bf16[512,128], index: 0, kind: input, shape index: {}]
  %s1 = inlined_call_operand.hbm [shape: bf16[128,128], index: 1, kind: input, shape index: {}]
  %s2 = inlined_call_operand.hbm [shape: bf16[128,128], index: 2, kind: input, shape index: {}]
  %s3 = inlined_call_operand.hbm [shape: bf16[128,128], index: 3, kind: input, shape index: {}]
  %s4 = inlined_call_operand.hbm [shape: f32[128,128], index: 4, kind: input, shape index: {}]
  %s5 = inlined_call_operand.vmem [shape: f32[8,128], index: 5, kind: input, shape index: {}]
  %s6 = inlined_call_operand.hbm [shape: f32[512,128], index: 6, kind: output, shape index: {}]
  %s7 = sld [smem:[#allocation0]]
  $region117: #{tpu_custom_call.1} parent=0
    _
  %s9 = ssub.s32 1, %s7
  %s10 = scalar_select 0, %s9, %s7
  $region1: #{tpu_custom_call.1} parent=0
    #allocation5 [shape = 'u8[131072]{0}', space=vmem, size = 0x20000, scoped, tag = 'input window, operand 0']
    #allocation6 [shape = 's32[2]{0}', space=sflag, size = 0x8, scoped, tag = 'scoped memory for tpu_custom_call.1']
    #allocation7 [shape = 's32[2]{0}', space=sflag, size = 0x8, scoped, tag = 'scoped memory for tpu_custom_call.1']
    #allocation8 [shape = 'u8[32768]{0}', space=vmem, size = 0x8000, scoped, tag = 'input window, operand 1, single buffered']
    #allocation9 [shape = 's32[1]{0}', space=sflag, size = 0x4, scoped, tag = 'scoped memory for tpu_custom_call.1']
    #allocation10 [shape = 'u8[32768]{0}', space=vmem, size = 0x8000, scoped, tag = 'input window, operand 2, single buffered']
    #allocation11 [shape = 'u8[32768]{0}', space=vmem, size = 0x8000, scoped, tag = 'input window, operand 3, single buffered']
    #allocation12 [shape = 's32[1]{0}', space=sflag, size = 0x4, scoped, tag = 'scoped memory for tpu_custom_call.1']
    #allocation13 [shape = 'u8[65536]{0}', space=vmem, size = 0x10000, scoped, tag = 'input window, operand 4, single buffered']
    #allocation14 [shape = 'u8[262144]{0}', space=vmem, size = 0x40000, scoped, tag = 'output window, operand 0']
    %11 = vsyncpa [#allocation6], 0
    %s12 = scalar_lea.sflag [#allocation6], 1
    %13 = vsyncpa %s12, 0
    %14 = vsyncpa [#allocation9], 0
    %15 = vsyncpa [#allocation12], 0
    %16 = vsyncpa [#allocation7], 0
    %s17 = scalar_lea.sflag [#allocation7], 1
    %18 = vsyncpa %s17, 0
    loop: start=0, step=1, limit=12
    $region2: #{tpu_custom_call.1} parent=1 // loop_pre_header
      _
    $region3: #{tpu_custom_call.1} parent=1 // loop_header
      %s20 = sphi 0, %s24
      %p21 = scmp.ge.s32.totalorder %s20, 12
      %s27 = sphi 0, %s39
      %s28 = sphi 0, %s35
      %s29 = sphi 0, %s27
      %s30 = sphi 0, %s28
      %s31 = sphi 0, %s29
      %s32 = sphi 0, %s30
      %s42 = sphi 0, %s44
      %s45 = sphi 0, %s42
      %s46 = sphi 0, %s45
      %s62 = sphi 0, %s46
      %s66 = sphi 0, %s66
      %s68 = sphi 0, %s66
      %s69 = sphi 0, %s68
      %s83 = sphi 0, %s69
      %s87 = sphi 0, %s87
      %s89 = sphi 0, %s87
      %s90 = sphi 0, %s89
      %s104 = sphi 0, %s90
      %s108 = sphi 0, %s108
      %s110 = sphi 0, %s108
      %s111 = sphi 0, %s110
      %s125 = sphi 0, %s111
      %s129 = sphi 0, %s129
      %s131 = sphi 0, %s129
      %s132 = sphi 0, %s131
      %s146 = sphi 0, %s132
      %s150 = sphi 0, %s150
      %s152 = sphi 0, %s150
      %s153 = sphi 0, %s152
      %s167 = sphi 0, %s153
      %s177 = sphi 0, %s179
      %s180 = sphi 0, %s177
      %s181 = sphi 0, %s180
      %s197 = sphi 0, %s181
    $region4: #{tpu_custom_call.1} parent=1 // loop_header_branch
      %23 = sbr.rel (%p21) target = $region8
    $region5: #{tpu_custom_call.1} parent=1 // loop_body
      %s25 = ssub.s32 %s20, 1
      %s26 = ssub.s32 %s20, 2
      %s33 = sadd.s32 1, %s28
      %p34 = scmp.ge.s32.totalorder %s33, 2
      %s35 = scalar_select %p34, 0, %s33
      %s36 = sadd.s32 1, %s27
      %s37 = scalar_select %p34, %s36, %s27
      %p38 = scmp.ge.s32.totalorder %s37, 5
      %s39 = scalar_select %p38, 0, %s37
      %s40 = ssub.s32 %s28, %s35
      %p41 = scmp.eq.s32.totalorder %s40, 0
      %s43 = sadd.s32 %s42, 1
      %s44 = scalar_select %p41, %s42, %s43
      %p47 = pneg %p41
      %p48 = scmp.eq.s32.totalorder %s20, 9
      %p49 = por %p47, %p48
      %p50 = scmp.ne.s32.totalorder %s42, %s45
      %p51 = scmp.eq.s32.totalorder %s20, 0
      %p52 = por %p50, %p51
      %p53 = scmp.ne.s32.totalorder %s42, %s45
      %p54 = scmp.eq.s32.totalorder %s25, 9
      %p55 = por %p53, %p54
      %p56 = scmp.ne.s32.totalorder %s45, %s46
      %p57 = scmp.eq.s32.totalorder %s25, 0
      %p58 = por %p56, %p57
      %p59 = scmp.ne.s32.totalorder %s45, %s46
      %p60 = scmp.eq.s32.totalorder %s26, 9
      %p61 = por %p59, %p60
      %p63 = scmp.ne.s32.totalorder %s46, %s62
      %p64 = scmp.eq.s32.totalorder %s26, 0
      %p65 = por %p63, %p64
      %s67 = sadd.s32 %s66, 1
      %p70 = scmp.eq.s32.totalorder %s20, 9
      %p71 = scmp.ne.s32.totalorder %s66, %s68
      %p72 = scmp.eq.s32.totalorder %s20, 0
      %p73 = por %p71, %p72
      %p74 = scmp.ne.s32.totalorder %s66, %s68
      %p75 = scmp.eq.s32.totalorder %s25, 9
      %p76 = por %p74, %p75
      %p77 = scmp.ne.s32.totalorder %s68, %s69
      %p78 = scmp.eq.s32.totalorder %s25, 0
      %p79 = por %p77, %p78
      %p80 = scmp.ne.s32.totalorder %s68, %s69
      %p81 = scmp.eq.s32.totalorder %s26, 9
      %p82 = por %p80, %p81
      %p84 = scmp.ne.s32.totalorder %s69, %s83
      %p85 = scmp.eq.s32.totalorder %s26, 0
      %p86 = por %p84, %p85
      %s88 = sadd.s32 %s87, 1
      %p91 = scmp.eq.s32.totalorder %s20, 9
      %p92 = scmp.ne.s32.totalorder %s87, %s89
      %p93 = scmp.eq.s32.totalorder %s20, 0
      %p94 = por %p92, %p93
      %p95 = scmp.ne.s32.totalorder %s87, %s89
      %p96 = scmp.eq.s32.totalorder %s25, 9
      %p97 = por %p95, %p96
      %p98 = scmp.ne.s32.totalorder %s89, %s90
      %p99 = scmp.eq.s32.totalorder %s25, 0
      %p100 = por %p98, %p99
      %p101 = scmp.ne.s32.totalorder %s89, %s90
      %p102 = scmp.eq.s32.totalorder %s26, 9
      %p103 = por %p101, %p102
      %p105 = scmp.ne.s32.totalorder %s90, %s104
      %p106 = scmp.eq.s32.totalorder %s26, 0
      %p107 = por %p105, %p106
      %s109 = sadd.s32 %s108, 1
      %p112 = scmp.eq.s32.totalorder %s20, 9
      %p113 = scmp.ne.s32.totalorder %s108, %s110
      %p114 = scmp.eq.s32.totalorder %s20, 0
      %p115 = por %p113, %p114
      %p116 = scmp.ne.s32.totalorder %s108, %s110
      %p117 = scmp.eq.s32.totalorder %s25, 9
      %p118 = por %p116, %p117
      %p119 = scmp.ne.s32.totalorder %s110, %s111
      %p120 = scmp.eq.s32.totalorder %s25, 0
      %p121 = por %p119, %p120
      %p122 = scmp.ne.s32.totalorder %s110, %s111
      %p123 = scmp.eq.s32.totalorder %s26, 9
      %p124 = por %p122, %p123
      %p126 = scmp.ne.s32.totalorder %s111, %s125
      %p127 = scmp.eq.s32.totalorder %s26, 0
      %p128 = por %p126, %p127
      %s130 = sadd.s32 %s129, 1
      %p133 = scmp.eq.s32.totalorder %s20, 9
      %p134 = scmp.ne.s32.totalorder %s129, %s131
      %p135 = scmp.eq.s32.totalorder %s20, 0
      %p136 = por %p134, %p135
      %p137 = scmp.ne.s32.totalorder %s129, %s131
      %p138 = scmp.eq.s32.totalorder %s25, 9
      %p139 = por %p137, %p138
      %p140 = scmp.ne.s32.totalorder %s131, %s132
      %p141 = scmp.eq.s32.totalorder %s25, 0
      %p142 = por %p140, %p141
      %p143 = scmp.ne.s32.totalorder %s131, %s132
      %p144 = scmp.eq.s32.totalorder %s26, 9
      %p145 = por %p143, %p144
      %p147 = scmp.ne.s32.totalorder %s132, %s146
      %p148 = scmp.eq.s32.totalorder %s26, 0
      %p149 = por %p147, %p148
      %s151 = sadd.s32 %s150, 1
      %p154 = scmp.eq.s32.totalorder %s20, 9
      %p155 = scmp.ne.s32.totalorder %s150, %s152
      %p156 = scmp.eq.s32.totalorder %s20, 0
      %p157 = por %p155, %p156
      %p158 = scmp.ne.s32.totalorder %s150, %s152
      %p159 = scmp.eq.s32.totalorder %s25, 9
      %p160 = por %p158, %p159
      %p161 = scmp.ne.s32.totalorder %s152, %s153
      %p162 = scmp.eq.s32.totalorder %s25, 0
      %p163 = por %p161, %p162
      %p164 = scmp.ne.s32.totalorder %s152, %s153
      %p165 = scmp.eq.s32.totalorder %s26, 9
      %p166 = por %p164, %p165
      %p168 = scmp.ne.s32.totalorder %s153, %s167
      %p169 = scmp.eq.s32.totalorder %s26, 0
      %p170 = por %p168, %p169
      %p171 = scmp.eq.s32.totalorder %s27, 4
      %s172 = scalar_select %p171, %s28, 0
      %p173 = scmp.eq.s32.totalorder %s39, 4
      %s174 = scalar_select %p173, %s35, 0
      %s175 = ssub.s32 %s172, %s174
      %p176 = scmp.eq.s32.totalorder %s175, 0
      %s178 = sadd.s32 %s177, 1
      %s179 = scalar_select %p176, %s177, %s178
      %p182 = pneg %p176
      %p183 = scmp.eq.s32.totalorder %s20, 9
      %p184 = por %p182, %p183
      %p185 = scmp.ne.s32.totalorder %s177, %s180
      %p186 = scmp.eq.s32.totalorder %s20, 0
      %p187 = por %p185, %p186
      %p188 = scmp.ne.s32.totalorder %s177, %s180
      %p189 = scmp.eq.s32.totalorder %s25, 9
      %p190 = por %p188, %p189
      %p191 = scmp.ne.s32.totalorder %s180, %s181
      %p192 = scmp.eq.s32.totalorder %s25, 0
      %p193 = por %p191, %p192
      %p194 = scmp.ne.s32.totalorder %s180, %s181
      %p195 = scmp.eq.s32.totalorder %s26, 9
      %p196 = por %p194, %p195
      %p198 = scmp.ne.s32.totalorder %s181, %s197
      %p199 = scmp.eq.s32.totalorder %s26, 0
      %p200 = por %p198, %p199
      %p201 = scmp.le.s32.totalorder 1, %s20
      %p202 = scmp.lt.s32.totalorder %s20, 11
      %p203 = pnand %p201, %p202
      %p204 = pneg %p203
      // Predicated region
      $region9: #{tpu_custom_call.1} parent=5 // pred_check
        _
      $region10: #{tpu_custom_call.1} parent=5 // pred_check_branch
        %206 = sbr.rel (%p203) target = $region12
      $region11: #{tpu_custom_call.1} parent=5 // pred_region
        %s207 = ssub.s32 %s20, 1
        // Predicated region
        $region13: #{tpu_custom_call.1} parent=11 // pred_check
          %p208 = pneg %p79
        $region14: #{tpu_custom_call.1} parent=11 // pred_check_branch
          %210 = sbr.rel (%p208) target = $region16
        $region15: #{tpu_custom_call.1} parent=11 // pred_region
          %s212 = ssub.s32 1024, 1024
          %213 = vsyncadd [#allocation9], %s212
          %s214 = sshll.u32 [#allocation8], 4
          %s215 = int_to_ptr.vmem [resolvable:$true] %s214
          %220 = dma.hbm_to_vmem [thread:$0]  %s1, 1024, %s215, [#allocation9], 64, 64, 4
        $region16: #{tpu_custom_call.1} parent=11 // pred_fallthru
          _
        // Predicated region
        $region17: #{tpu_custom_call.1} parent=11 // pred_check
          %p221 = pneg %p100
        $region18: #{tpu_custom_call.1} parent=11 // pred_check_branch
          %223 = sbr.rel (%p221) target = $region20
        $region19: #{tpu_custom_call.1} parent=11 // pred_region
          %s225 = ssub.s32 1024, 1024
          %226 = vsyncadd [#allocation9], %s225
          %s227 = sshll.u32 [#allocation10], 4
          %s228 = int_to_ptr.vmem [resolvable:$true] %s227
          %233 = dma.hbm_to_vmem [thread:$0]  %s2, 1024, %s228, [#allocation9], 64, 64, 4
        $region20: #{tpu_custom_call.1} parent=11 // pred_fallthru
          _
        // Predicated region
        $region21: #{tpu_custom_call.1} parent=11 // pred_check
          %p234 = pneg %p121
        $region22: #{tpu_custom_call.1} parent=11 // pred_check_branch
          %236 = sbr.rel (%p234) target = $region24
        $region23: #{tpu_custom_call.1} parent=11 // pred_region
          %s238 = ssub.s32 1024, 1024
          %239 = vsyncadd [#allocation12], %s238
          %s240 = sshll.u32 [#allocation11], 4
          %s241 = int_to_ptr.vmem [resolvable:$true] %s240
          %246 = dma.hbm_to_vmem [thread:$0]  %s3, 1024, %s241, [#allocation12], 64, 64, 4
        $region24: #{tpu_custom_call.1} parent=11 // pred_fallthru
          _
        // Predicated region
        $region25: #{tpu_custom_call.1} parent=11 // pred_check
          %p247 = pneg %p142
        $region26: #{tpu_custom_call.1} parent=11 // pred_check_branch
          %249 = sbr.rel (%p247) target = $region28
        $region27: #{tpu_custom_call.1} parent=11 // pred_region
          %s251 = ssub.s32 2048, 2048
          %252 = vsyncadd [#allocation12], %s251
          %s253 = sshll.u32 [#allocation13], 4
          %s254 = int_to_ptr.vmem [resolvable:$true] %s253
          %259 = dma.hbm_to_vmem [thread:$0]  %s4, 2048, %s254, [#allocation12], 128, 128, 8
        $region28: #{tpu_custom_call.1} parent=11 // pred_fallthru
          _
        // Predicated region
        $region29: #{tpu_custom_call.1} parent=11 // pred_check
          %p260 = pneg %p163
        $region30: #{tpu_custom_call.1} parent=11 // pred_check_branch
          %262 = sbr.rel (%p260) target = $region32
        $region31: #{tpu_custom_call.1} parent=11 // pred_region
          _
        $region32: #{tpu_custom_call.1} parent=11 // pred_fallthru
          _
      $region12: #{tpu_custom_call.1} parent=5 // pred_fallthru
        _
      %p263 = scmp.lt.s32.totalorder %s20, 10
      // Predicated region
      $region33: #{tpu_custom_call.1} parent=5 // pred_check
        %p264 = pneg %p263
      $region34: #{tpu_custom_call.1} parent=5 // pred_check_branch
        %266 = sbr.rel (%p264) target = $region36
      $region35: #{tpu_custom_call.1} parent=5 // pred_region
        // Predicated region
        $region37: #{tpu_custom_call.1} parent=35 // pred_check
          %p267 = pneg %p52
        $region38: #{tpu_custom_call.1} parent=35 // pred_check_branch
          %269 = sbr.rel (%p267) target = $region40
        $region39: #{tpu_custom_call.1} parent=35 // pred_region
          %s270 = sand.u32 %s42, 1
          %s271 = scalar_lea.sflag [#allocation6], %s270
          %s272 = sand.u32 %s42, 1
          %s273 = smul.addr %s272, 128
          %s274 = scalar_lea.vmem [#allocation5], %s273
          %s275 = smul.u32 32, %s28
          %s277 = ssub.s32 2048, 2048
          %278 = vsyncadd %s271, %s277
          %s279 = smul.addr %s275, 64
          %s280 = scalar_lea.hbm %s0, %s279
          %s281 = sshll.u32 %s274, 4
          %s282 = int_to_ptr.vmem [resolvable:$true] %s281
          %287 = dma.hbm_to_vmem [thread:$0]  %s280, 2048, %s282, %s271, 64, 64, 4
        $region40: #{tpu_custom_call.1} parent=35 // pred_fallthru
          _
      $region36: #{tpu_custom_call.1} parent=5 // pred_fallthru
        _
      %p288 = scmp.le.s32.totalorder 1, %s20
      %p289 = scmp.lt.s32.totalorder %s20, 11
      %p290 = pnand %p288, %p289
      %p291 = pneg %p290
      // Predicated region
      $region41: #{tpu_custom_call.1} parent=5 // pred_check
        _
      $region42: #{tpu_custom_call.1} parent=5 // pred_check_branch
        %293 = sbr.rel (%p290) target = $region44
      $region43: #{tpu_custom_call.1} parent=5 // pred_region
        %s294 = ssub.s32 %s20, 1
        %s295 = sand.u32 %s45, 1
        %s296 = scalar_lea.sflag [#allocation6], %s295
        %s297 = sand.u32 %s45, 1
        %s298 = smul.addr %s297, 128
        %s299 = scalar_lea.vmem [#allocation5], %s298
        // Predicated region
        $region45: #{tpu_custom_call.1} parent=43 // pred_check
          %p300 = pneg %p58
        $region46: #{tpu_custom_call.1} parent=43 // pred_check_branch
          %302 = sbr.rel (%p300) target = $region48
        $region47: #{tpu_custom_call.1} parent=43 // pred_region
          %303 = dma.done %s296, 2048
        $region48: #{tpu_custom_call.1} parent=43 // pred_fallthru
          _
        // Predicated region
        $region49: #{tpu_custom_call.1} parent=43 // pred_check
          %p304 = pneg %p79
        $region50: #{tpu_custom_call.1} parent=43 // pred_check_branch
          %306 = sbr.rel (%p304) target = $region52
        $region51: #{tpu_custom_call.1} parent=43 // pred_region
          %307 = dma.done [#allocation9], 1024
        $region52: #{tpu_custom_call.1} parent=43 // pred_fallthru
          _
        // Predicated region
        $region53: #{tpu_custom_call.1} parent=43 // pred_check
          %p308 = pneg %p100
        $region54: #{tpu_custom_call.1} parent=43 // pred_check_branch
          %310 = sbr.rel (%p308) target = $region56
        $region55: #{tpu_custom_call.1} parent=43 // pred_region
          %311 = dma.done [#allocation9], 1024
        $region56: #{tpu_custom_call.1} parent=43 // pred_fallthru
          _
        // Predicated region
        $region57: #{tpu_custom_call.1} parent=43 // pred_check
          %p312 = pneg %p121
        $region58: #{tpu_custom_call.1} parent=43 // pred_check_branch
          %314 = sbr.rel (%p312) target = $region60
        $region59: #{tpu_custom_call.1} parent=43 // pred_region
          %315 = dma.done [#allocation12], 1024
        $region60: #{tpu_custom_call.1} parent=43 // pred_fallthru
          _
        // Predicated region
        $region61: #{tpu_custom_call.1} parent=43 // pred_check
          %p316 = pneg %p142
        $region62: #{tpu_custom_call.1} parent=43 // pred_check_branch
          %318 = sbr.rel (%p316) target = $region64
        $region63: #{tpu_custom_call.1} parent=43 // pred_region
          %319 = dma.done [#allocation12], 2048
        $region64: #{tpu_custom_call.1} parent=43 // pred_fallthru
          _
        %s320 = sand.u32 %s45, 1
        %s321 = scalar_lea.sflag [#allocation6], %s320
        %s322 = sand.u32 %s45, 1
        %s323 = smul.addr %s322, 128
        %s324 = scalar_lea.vmem [#allocation5], %s323
        %p325 = pneg %p58
        %p326 = pneg %p55
        %p327 = pneg %p79
        %p328 = pneg %p76
        %p329 = pneg %p100
        %p330 = pneg %p97
        %p331 = pneg %p121
        %p332 = pneg %p118
        %p333 = pneg %p142
        %p334 = pneg %p139
        %p335 = pneg %p163
        %p336 = pneg %p160
        %p337 = pneg %p193
        %p338 = pneg %p190
        %s339 = sand.u32 %s180, 1
        %s340 = scalar_lea.sflag [#allocation7], %s339
        %s341 = sand.u32 %s180, 1
        %s342 = smul.addr %s341, 256
        %s343 = scalar_lea.vmem [#allocation14], %s342
        %s344 = smul.u32 32, %s30
        %p345 = scmp.eq.s32.totalorder %s29, 4
        %s346 = scalar_select %p345, %s30, 0
        %s347 = smul.u32 32, %s346
        %p349 = scmp.eq.s32.totalorder %s30, 0
        // Predicated region
        $region65: #{tpu_custom_call.1} parent=43 // pred_check
          %p350 = pneg %p349
        $region66: #{tpu_custom_call.1} parent=43 // pred_check_branch
          %352 = sbr.rel (%p350) target = $region68
        $region67: #{tpu_custom_call.1} parent=43 // pred_region
          %353 = vst [vmem:[#allocation2] sm:$0xff] 0.0
        $region68: #{tpu_custom_call.1} parent=43 // pred_fallthru
          _
        %p354 = scmp.eq.s32.totalorder %s29, 0
        // Predicated region
        $region69: #{tpu_custom_call.1} parent=43 // pred_check
          %p355 = pneg %p354
        $region70: #{tpu_custom_call.1} parent=43 // pred_check_branch
          %357 = sbr.rel (%p355) target = $region72
        $region71: #{tpu_custom_call.1} parent=43 // pred_region
          %v358 = vld [vmem:[%s299] sm:$0xf]
          %v359 = vld [vmem:[%s299 + $0x4] sm:$0xf]
          %v360 = vld [vmem:[%s299 + $0x8] sm:$0xf]
          %v361 = vld [vmem:[%s299 + $0xc] sm:$0xf]
          %v362 = vld [vmem:[%s299 + $0x10] sm:$0xf]
          %v363 = vld [vmem:[%s299 + $0x14] sm:$0xf]
          %v364 = vld [vmem:[%s299 + $0x18] sm:$0xf]
          %v365 = vld [vmem:[%s299 + $0x1c] sm:$0xf]
          %v366 = vld [vmem:[%s299 + $0x20] sm:$0xf]
          %v367 = vld [vmem:[%s299 + $0x24] sm:$0xf]
          %v368 = vld [vmem:[%s299 + $0x28] sm:$0xf]
          %v369 = vld [vmem:[%s299 + $0x2c] sm:$0xf]
          %v370 = vld [vmem:[%s299 + $0x30] sm:$0xf]
          %v371 = vld [vmem:[%s299 + $0x34] sm:$0xf]
          %v372 = vld [vmem:[%s299 + $0x38] sm:$0xf]
          %v373 = vld [vmem:[%s299 + $0x3c] sm:$0xf]
          %v374 = vld [vmem:[%s299 + $0x40] sm:$0xf]
          %v375 = vld [vmem:[%s299 + $0x44] sm:$0xf]
          %v376 = vld [vmem:[%s299 + $0x48] sm:$0xf]
          %v377 = vld [vmem:[%s299 + $0x4c] sm:$0xf]
          %v378 = vld [vmem:[%s299 + $0x50] sm:$0xf]
          %v379 = vld [vmem:[%s299 + $0x54] sm:$0xf]
          %v380 = vld [vmem:[%s299 + $0x58] sm:$0xf]
          %v381 = vld [vmem:[%s299 + $0x5c] sm:$0xf]
          %v382 = vld [vmem:[%s299 + $0x60] sm:$0xf]
          %v383 = vld [vmem:[%s299 + $0x64] sm:$0xf]
          %v384 = vld [vmem:[%s299 + $0x68] sm:$0xf]
          %v385 = vld [vmem:[%s299 + $0x6c] sm:$0xf]
          %v386 = vld [vmem:[%s299 + $0x70] sm:$0xf]
          %v387 = vld [vmem:[%s299 + $0x74] sm:$0xf]
          %v388 = vld [vmem:[%s299 + $0x78] sm:$0xf]
          %v389 = vld [vmem:[%s299 + $0x7c] sm:$0xf]
          %v390 = vld [vmem:[#allocation8] sm:$0xf]
          %v391 = vld [vmem:[#allocation8 + $0x4] sm:$0xf]
          %v392 = vld [vmem:[#allocation8 + $0x8] sm:$0xf]
          %v393 = vld [vmem:[#allocation8 + $0xc] sm:$0xf]
          %v394 = vld [vmem:[#allocation8 + $0x10] sm:$0xf]
          %v395 = vld [vmem:[#allocation8 + $0x14] sm:$0xf]
          %v396 = vld [vmem:[#allocation8 + $0x18] sm:$0xf]
          %v397 = vld [vmem:[#allocation8 + $0x1c] sm:$0xf]
          %v398 = vld [vmem:[#allocation8 + $0x20] sm:$0xf]
          %v399 = vld [vmem:[#allocation8 + $0x24] sm:$0xf]
          %v400 = vld [vmem:[#allocation8 + $0x28] sm:$0xf]
          %v401 = vld [vmem:[#allocation8 + $0x2c] sm:$0xf]
          %v402 = vld [vmem:[#allocation8 + $0x30] sm:$0xf]
          %v403 = vld [vmem:[#allocation8 + $0x34] sm:$0xf]
          %v404 = vld [vmem:[#allocation8 + $0x38] sm:$0xf]
          %v405 = vld [vmem:[#allocation8 + $0x3c] sm:$0xf]
          %v438 = vunpack.c.l.b16 %v358
          %v439 = vunpack.c.l.b16 %v359
          %v440 = vunpack.c.l.b16 %v360
          %v441 = vunpack.c.l.b16 %v361
          %v442 = vunpack.c.l.b16 %v362
          %v443 = vunpack.c.l.b16 %v363
          %v444 = vunpack.c.l.b16 %v364
          %v445 = vunpack.c.l.b16 %v365
          %v446 = vunpack.c.l.b16 %v366
          %v447 = vunpack.c.l.b16 %v367
          %v448 = vunpack.c.l.b16 %v368
          %v449 = vunpack.c.l.b16 %v369
          %v450 = vunpack.c.l.b16 %v370
          %v451 = vunpack.c.l.b16 %v371
          %v452 = vunpack.c.l.b16 %v372
          %v453 = vunpack.c.l.b16 %v373
          %v454 = vunpack.c.l.b16 %v374
          %v455 = vunpack.c.l.b16 %v375
          %v456 = vunpack.c.l.b16 %v376
          %v457 = vunpack.c.l.b16 %v377
          %v458 = vunpack.c.l.b16 %v378
          %v459 = vunpack.c.l.b16 %v379
          %v460 = vunpack.c.l.b16 %v380
          %v461 = vunpack.c.l.b16 %v381
          %v462 = vunpack.c.l.b16 %v382
          %v463 = vunpack.c.l.b16 %v383
          %v464 = vunpack.c.l.b16 %v384
          %v465 = vunpack.c.l.b16 %v385
          %v466 = vunpack.c.l.b16 %v386
          %v467 = vunpack.c.l.b16 %v387
          %v468 = vunpack.c.l.b16 %v388
          %v469 = vunpack.c.l.b16 %v389
          %v470 = vpack.c.b16 %v439, %v438
          %v471 = vpack.c.b16 %v441, %v440
          %v472 = vpack.c.b16 %v443, %v442
          %v473 = vpack.c.b16 %v445, %v444
          %v474 = vpack.c.b16 %v447, %v446
          %v475 = vpack.c.b16 %v449, %v448
          %v476 = vpack.c.b16 %v451, %v450
          %v477 = vpack.c.b16 %v453, %v452
          %v478 = vpack.c.b16 %v455, %v454
          %v479 = vpack.c.b16 %v457, %v456
          %v480 = vpack.c.b16 %v459, %v458
          %v481 = vpack.c.b16 %v461, %v460
          %v482 = vpack.c.b16 %v463, %v462
          %v483 = vpack.c.b16 %v465, %v464
          %v484 = vpack.c.b16 %v467, %v466
          %v485 = vpack.c.b16 %v469, %v468
          %v518 = vunpack.c.l.b16 %v390
          %v519 = vunpack.c.l.b16 %v391
          %v520 = vunpack.c.l.b16 %v392
          %v521 = vunpack.c.l.b16 %v393
          %v522 = vunpack.c.l.b16 %v394
          %v523 = vunpack.c.l.b16 %v395
          %v524 = vunpack.c.l.b16 %v396
          %v525 = vunpack.c.l.b16 %v397
          %v526 = vunpack.c.l.b16 %v398
          %v527 = vunpack.c.l.b16 %v399
          %v528 = vunpack.c.l.b16 %v400
          %v529 = vunpack.c.l.b16 %v401
          %v530 = vunpack.c.l.b16 %v402
          %v531 = vunpack.c.l.b16 %v403
          %v532 = vunpack.c.l.b16 %v404
          %v533 = vunpack.c.l.b16 %v405
          %v534 = vpack.c.b16 %v519, %v518
          %v535 = vpack.c.b16 %v521, %v520
          %v536 = vpack.c.b16 %v523, %v522
          %v537 = vpack.c.b16 %v525, %v524
          %v538 = vpack.c.b16 %v527, %v526
          %v539 = vpack.c.b16 %v529, %v528
          %v540 = vpack.c.b16 %v531, %v530
          %v541 = vpack.c.b16 %v533, %v532
          %550 = vmatprep.subr.bf16.mxu0 0
          %551 = vmatpush1.bf16.msra.mxu0 %v534
          %552 = vmatprep.subr.bf16.mxu0 0
          %553 = vmatpush1.bf16.msra.mxu0 %v535
          %554 = vmatprep.subr.bf16.mxu0 0
          %555 = vmatpush1.bf16.msra.mxu0 %v536
          %556 = vmatprep.subr.bf16.mxu0 0
          %557 = vmatpush1.bf16.msra.mxu0 %v537
          %558 = vmatprep.subr.bf16.mxu0 0
          %559 = vmatpush1.bf16.msra.mxu0 %v538
          %560 = vmatprep.subr.bf16.mxu0 0
          %561 = vmatpush1.bf16.msra.mxu0 %v539
          %562 = vmatprep.subr.bf16.mxu0 0
          %563 = vmatpush1.bf16.msra.mxu0 %v540
          %564 = vmatprep.subr.bf16.mxu0 0
          %565 = vmatpush1.bf16.msra.mxu0 %v541
          %566 = vmatprep.subr.bf16.mxu0 0
          %567 = vmatpush1.bf16.msra.mxu0 0
          %568 = vmatprep.subr.bf16.mxu0 0
          %569 = vmatpush1.bf16.msra.mxu0 0
          %570 = vmatprep.subr.bf16.mxu0 0
          %571 = vmatpush1.bf16.msra.mxu0 0
          %572 = vmatprep.subr.bf16.mxu0 0
          %573 = vmatpush1.bf16.msra.mxu0 0
          %574 = vmatprep.subr.bf16.mxu0 0
          %575 = vmatpush1.bf16.msra.mxu0 0
          %576 = vmatprep.subr.bf16.mxu0 0
          %577 = vmatpush1.bf16.msra.mxu0 0
          %578 = vmatprep.subr.bf16.mxu0 0
          %579 = vmatpush1.bf16.msra.mxu0 0
          %580 = vmatprep.subr.bf16.mxu0 0
          %581 = vmatpush1.bf16.msra.mxu0 0
          %582 = vmatprep.mubr.bf16.mxu0 0
          %583 = vmatmul.mubr.bf16.gmra.mrb[0].mxu0 %v470
          %v584 = vpop.f32.mrb[0].mxu0
          %v585 = vadd.f32 0.0, %v584
          %v586 = vpop.f32.mrb[0].mxu0
          %v587 = vpop.f32.mrb[0].mxu0
          %v588 = vadd.f32 0.0, %v587
          %v589 = vpop.f32.mrb[0].mxu0
          %590 = vmatprep.mubr.bf16.mxu0 0
          %591 = vmatmul.mubr.bf16.gmra.mrb[0].mxu0 %v471
          %v592 = vpop.f32.mrb[0].mxu0
          %v593 = vadd.f32 0.0, %v592
          %v594 = vpop.f32.mrb[0].mxu0
          %v595 = vpop.f32.mrb[0].mxu0
          %v596 = vadd.f32 0.0, %v595
          %v597 = vpop.f32.mrb[0].mxu0
          %598 = vmatprep.mubr.bf16.mxu0 0
          %599 = vmatmul.mubr.bf16.gmra.mrb[0].mxu0 %v472
          %v600 = vpop.f32.mrb[0].mxu0
          %v601 = vadd.f32 0.0, %v600
          %v602 = vpop.f32.mrb[0].mxu0
          %v603 = vpop.f32.mrb[0].mxu0
          %v604 = vadd.f32 0.0, %v603
          %v605 = vpop.f32.mrb[0].mxu0
          %606 = vmatprep.mubr.bf16.mxu0 0
          %607 = vmatmul.mubr.bf16.gmra.mrb[0].mxu0 %v473
          %v608 = vpop.f32.mrb[0].mxu0
          %v609 = vadd.f32 0.0, %v608
          %v610 = vpop.f32.mrb[0].mxu0
          %v611 = vpop.f32.mrb[0].mxu0
          %v612 = vadd.f32 0.0, %v611
          %v613 = vpop.f32.mrb[0].mxu0
          %614 = vmatprep.mubr.bf16.mxu0 0
          %615 = vmatmul.mubr.bf16.gmra.mrb[0].mxu0 %v474
          %v616 = vpop.f32.mrb[0].mxu0
          %v617 = vadd.f32 0.0, %v616
          %v618 = vpop.f32.mrb[0].mxu0
          %v619 = vpop.f32.mrb[0].mxu0
          %v620 = vadd.f32 0.0, %v619
          %v621 = vpop.f32.mrb[0].mxu0
          %622 = vmatprep.mubr.bf16.mxu0 0
          %623 = vmatmul.mubr.bf16.gmra.mrb[0].mxu0 %v475
          %v624 = vpop.f32.mrb[0].mxu0
          %v625 = vadd.f32 0.0, %v624
          %v626 = vpop.f32.mrb[0].mxu0
          %v627 = vpop.f32.mrb[0].mxu0
          %v628 = vadd.f32 0.0, %v627
          %v629 = vpop.f32.mrb[0].mxu0
          %630 = vmatprep.mubr.bf16.mxu0 0
          %631 = vmatmul.mubr.bf16.gmra.mrb[0].mxu0 %v476
          %v632 = vpop.f32.mrb[0].mxu0
          %v633 = vadd.f32 0.0, %v632
          %v634 = vpop.f32.mrb[0].mxu0
          %v635 = vpop.f32.mrb[0].mxu0
          %v636 = vadd.f32 0.0, %v635
          %v637 = vpop.f32.mrb[0].mxu0
          %638 = vmatprep.mubr.bf16.mxu0 0
          %639 = vmatmul.mubr.bf16.gmra.mrb[0].mxu0 %v477
          %v640 = vpop.f32.mrb[0].mxu0
          %v641 = vadd.f32 0.0, %v640
          %v642 = vpop.f32.mrb[0].mxu0
          %v643 = vpop.f32.mrb[0].mxu0
          %v644 = vadd.f32 0.0, %v643
          %v645 = vpop.f32.mrb[0].mxu0
          %646 = vmatprep.mubr.bf16.mxu0 0
          %647 = vmatmul.mubr.bf16.gmra.mrb[0].mxu0 %v478
          %v648 = vpop.f32.mrb[0].mxu0
          %v649 = vadd.f32 0.0, %v648
          %v650 = vpop.f32.mrb[0].mxu0
          %v651 = vpop.f32.mrb[0].mxu0
          %v652 = vadd.f32 0.0, %v651
          %v653 = vpop.f32.mrb[0].mxu0
          %654 = vmatprep.mubr.bf16.mxu0 0
          %655 = vmatmul.mubr.bf16.gmra.mrb[0].mxu0 %v479
          %v656 = vpop.f32.mrb[0].mxu0
          %v657 = vadd.f32 0.0, %v656
          %v658 = vpop.f32.mrb[0].mxu0
          %v659 = vpop.f32.mrb[0].mxu0
          %v660 = vadd.f32 0.0, %v659
          %v661 = vpop.f32.mrb[0].mxu0
          %662 = vmatprep.mubr.bf16.mxu0 0
          %663 = vmatmul.mubr.bf16.gmra.mrb[0].mxu0 %v480
          %v664 = vpop.f32.mrb[0].mxu0
          %v665 = vadd.f32 0.0, %v664
          %v666 = vpop.f32.mrb[0].mxu0
          %v667 = vpop.f32.mrb[0].mxu0
          %v668 = vadd.f32 0.0, %v667
          %v669 = vpop.f32.mrb[0].mxu0
          %670 = vmatprep.mubr.bf16.mxu0 0
          %671 = vmatmul.mubr.bf16.gmra.mrb[0].mxu0 %v481
          %v672 = vpop.f32.mrb[0].mxu0
          %v673 = vadd.f32 0.0, %v672
          %v674 = vpop.f32.mrb[0].mxu0
          %v675 = vpop.f32.mrb[0].mxu0
          %v676 = vadd.f32 0.0, %v675
          %v677 = vpop.f32.mrb[0].mxu0
          %678 = vmatprep.mubr.bf16.mxu0 0
          %679 = vmatmul.mubr.bf16.gmra.mrb[0].mxu0 %v482
          %v680 = vpop.f32.mrb[0].mxu0
          %v681 = vadd.f32 0.0, %v680
          %v682 = vpop.f32.mrb[0].mxu0
          %v683 = vpop.f32.mrb[0].mxu0
          %v684 = vadd.f32 0.0, %v683
          %v685 = vpop.f32.mrb[0].mxu0
          %686 = vmatprep.mubr.bf16.mxu0 0
          %687 = vmatmul.mubr.bf16.gmra.mrb[0].mxu0 %v483
          %v688 = vpop.f32.mrb[0].mxu0
          %v689 = vadd.f32 0.0, %v688
          %v690 = vpop.f32.mrb[0].mxu0
          %v691 = vpop.f32.mrb[0].mxu0
          %v692 = vadd.f32 0.0, %v691
          %v693 = vpop.f32.mrb[0].mxu0
          %694 = vmatprep.mubr.bf16.mxu0 0
          %695 = vmatmul.mubr.bf16.gmra.mrb[0].mxu0 %v484
          %v696 = vpop.f32.mrb[0].mxu0
          %v697 = vadd.f32 0.0, %v696
          %v698 = vpop.f32.mrb[0].mxu0
          %v699 = vpop.f32.mrb[0].mxu0
          %v700 = vadd.f32 0.0, %v699
          %v701 = vpop.f32.mrb[0].mxu0
          %702 = vmatprep.mubr.bf16.mxu0 0
          %703 = vmatmul.mubr.bf16.gmra.mrb[0].mxu0 %v485
          %v704 = vpop.f32.mrb[0].mxu0
          %v705 = vadd.f32 0.0, %v704
          %v706 = vpop.f32.mrb[0].mxu0
          %v707 = vpop.f32.mrb[0].mxu0
          %v708 = vadd.f32 0.0, %v707
          %v709 = vpop.f32.mrb[0].mxu0
          %710 = vdwg.mxu0
          %v711 = vld [vmem:[#allocation2] sm:$0x1]
          %v712 = vadd.f32 %v585, %v588
          %v713 = vadd.f32 %v712, %v593
          %v714 = vadd.f32 %v713, %v596
          %v715 = vadd.f32 %v714, %v601
          %v716 = vadd.f32 %v715, %v604
          %v717 = vadd.f32 %v716, %v609
          %v718 = vadd.f32 %v717, %v612
          %v719 = vadd.f32 %v718, %v617
          %v720 = vadd.f32 %v719, %v620
          %v721 = vadd.f32 %v720, %v625
          %v722 = vadd.f32 %v721, %v628
          %v723 = vadd.f32 %v722, %v633
          %v724 = vadd.f32 %v723, %v636
          %v725 = vadd.f32 %v724, %v641
          %v726 = vadd.f32 %v725, %v644
          %v727 = vadd.f32 %v726, %v649
          %v728 = vadd.f32 %v727, %v652
          %v729 = vadd.f32 %v728, %v657
          %v730 = vadd.f32 %v729, %v660
          %v731 = vadd.f32 %v730, %v665
          %v732 = vadd.f32 %v731, %v668
          %v733 = vadd.f32 %v732, %v673
          %v734 = vadd.f32 %v733, %v676
          %v735 = vadd.f32 %v734, %v681
          %v736 = vadd.f32 %v735, %v684
          %v737 = vadd.f32 %v736, %v689
          %v738 = vadd.f32 %v737, %v692
          %v739 = vadd.f32 %v738, %v697
          %v740 = vadd.f32 %v739, %v700
          %v741 = vadd.f32 %v740, %v705
          %v742 = vadd.f32 %v741, %v708
          %v743 = vrot.slane %v742, 4
          %v744 = vadd.f32 %v742, %v743
          %v745 = vrot.slane %v744, 2
          %v746 = vadd.f32 %v744, %v745
          %v747 = vrot.slane %v746, 1
          %v748 = vadd.f32 %v746, %v747
          %v749 = vadd.f32 %v711, %v748
          %750 = vst [vmem:[#allocation2] sm:$0x1] %v749
          %v751 = vld [vmem:[#allocation2 + $0x1] sm:$0x1]
          %v752 = vmul.f32 %v585, %v585
          %v753 = vmul.f32 %v588, %v588
          %v754 = vmul.f32 %v593, %v593
          %v755 = vmul.f32 %v596, %v596
          %v756 = vmul.f32 %v601, %v601
          %v757 = vmul.f32 %v604, %v604
          %v758 = vmul.f32 %v609, %v609
          %v759 = vmul.f32 %v612, %v612
          %v760 = vmul.f32 %v617, %v617
          %v761 = vmul.f32 %v620, %v620
          %v762 = vmul.f32 %v625, %v625
          %v763 = vmul.f32 %v628, %v628
          %v764 = vmul.f32 %v633, %v633
          %v765 = vmul.f32 %v636, %v636
          %v766 = vmul.f32 %v641, %v641
          %v767 = vmul.f32 %v644, %v644
          %v768 = vmul.f32 %v649, %v649
          %v769 = vmul.f32 %v652, %v652
          %v770 = vmul.f32 %v657, %v657
          %v771 = vmul.f32 %v660, %v660
          %v772 = vmul.f32 %v665, %v665
          %v773 = vmul.f32 %v668, %v668
          %v774 = vmul.f32 %v673, %v673
          %v775 = vmul.f32 %v676, %v676
          %v776 = vmul.f32 %v681, %v681
          %v777 = vmul.f32 %v684, %v684
          %v778 = vmul.f32 %v689, %v689
          %v779 = vmul.f32 %v692, %v692
          %v780 = vmul.f32 %v697, %v697
          %v781 = vmul.f32 %v700, %v700
          %v782 = vmul.f32 %v705, %v705
          %v783 = vmul.f32 %v708, %v708
          %v784 = vadd.f32 %v752, %v753
          %v785 = vadd.f32 %v784, %v754
          %v786 = vadd.f32 %v785, %v755
          %v787 = vadd.f32 %v786, %v756
          %v788 = vadd.f32 %v787, %v757
          %v789 = vadd.f32 %v788, %v758
          %v790 = vadd.f32 %v789, %v759
          %v791 = vadd.f32 %v790, %v760
          %v792 = vadd.f32 %v791, %v761
          %v793 = vadd.f32 %v792, %v762
          %v794 = vadd.f32 %v793, %v763
          %v795 = vadd.f32 %v794, %v764
          %v796 = vadd.f32 %v795, %v765
          %v797 = vadd.f32 %v796, %v766
          %v798 = vadd.f32 %v797, %v767
          %v799 = vadd.f32 %v798, %v768
          %v800 = vadd.f32 %v799, %v769
          %v801 = vadd.f32 %v800, %v770
          %v802 = vadd.f32 %v801, %v771
          %v803 = vadd.f32 %v802, %v772
          %v804 = vadd.f32 %v803, %v773
          %v805 = vadd.f32 %v804, %v774
          %v806 = vadd.f32 %v805, %v775
          %v807 = vadd.f32 %v806, %v776
          %v808 = vadd.f32 %v807, %v777
          %v809 = vadd.f32 %v808, %v778
          %v810 = vadd.f32 %v809, %v779
          %v811 = vadd.f32 %v810, %v780
          %v812 = vadd.f32 %v811, %v781
          %v813 = vadd.f32 %v812, %v782
          %v814 = vadd.f32 %v813, %v783
          %v815 = vrot.slane %v814, 4
          %v816 = vadd.f32 %v814, %v815
          %v817 = vrot.slane %v816, 2
          %v818 = vadd.f32 %v816, %v817
          %v819 = vrot.slane %v818, 1
          %v820 = vadd.f32 %v818, %v819
          %v821 = vadd.f32 %v751, %v820
          %822 = vst [vmem:[#allocation2 + $0x1] sm:$0x1] %v821
          %p823 = scmp.eq.s32.totalorder %s30, 1
          // Predicated region
          $region73: #{tpu_custom_call.1} parent=71 // pred_check
            %p824 = pneg %p823
          $region74: #{tpu_custom_call.1} parent=71 // pred_check_branch
            %826 = sbr.rel (%p824) target = $region76
          $region75: #{tpu_custom_call.1} parent=71 // pred_region
            %v827 = vld [vmem:[#allocation2] sm:$0xff]
            %v828 = vld [vmem:[#allocation13] sm:$0xff]
            %v829 = vld [vmem:[#allocation13 + $0x8] sm:$0xff]
            %v830 = vld [vmem:[#allocation13 + $0x10] sm:$0xff]
            %v831 = vld [vmem:[#allocation13 + $0x18] sm:$0xff]
            %v832 = vld [vmem:[#allocation13 + $0x20] sm:$0xff]
            %v833 = vld [vmem:[#allocation13 + $0x28] sm:$0xff]
            %v834 = vld [vmem:[#allocation13 + $0x30] sm:$0xff]
            %v835 = vld [vmem:[#allocation13 + $0x38] sm:$0xff]
            %v836 = vld [vmem:[#allocation13 + $0x40] sm:$0xff]
            %v837 = vld [vmem:[#allocation13 + $0x48] sm:$0xff]
            %v838 = vld [vmem:[#allocation13 + $0x50] sm:$0xff]
            %v839 = vld [vmem:[#allocation13 + $0x58] sm:$0xff]
            %v840 = vld [vmem:[#allocation13 + $0x60] sm:$0xff]
            %v841 = vld [vmem:[#allocation13 + $0x68] sm:$0xff]
            %v842 = vld [vmem:[#allocation13 + $0x70] sm:$0xff]
            %v843 = vld [vmem:[#allocation13 + $0x78] sm:$0xff]
            %844 = vmatprep.subr.mxu0 0.0
            %845 = vmatpush1.msra.mxu0 %v828
            %846 = vmatprep.subr.mxu0 0.0
            %847 = vmatpush1.msra.mxu0 %v829
            %848 = vmatprep.subr.mxu0 0.0
            %849 = vmatpush1.msra.mxu0 %v830
            %850 = vmatprep.subr.mxu0 0.0
            %851 = vmatpush1.msra.mxu0 %v831
            %852 = vmatprep.subr.mxu0 0.0
            %853 = vmatpush1.msra.mxu0 %v832
            %854 = vmatprep.subr.mxu0 0.0
            %855 = vmatpush1.msra.mxu0 %v833
            %856 = vmatprep.subr.mxu0 0.0
            %857 = vmatpush1.msra.mxu0 %v834
            %858 = vmatprep.subr.mxu0 0.0
            %859 = vmatpush1.msra.mxu0 %v835
            %860 = vmatprep.subr.mxu0 0.0
            %861 = vmatpush1.msra.mxu0 %v836
            %862 = vmatprep.subr.mxu0 0.0
            %863 = vmatpush1.msra.mxu0 %v837
            %864 = vmatprep.subr.mxu0 0.0
            %865 = vmatpush1.msra.mxu0 %v838
            %866 = vmatprep.subr.mxu0 0.0
            %867 = vmatpush1.msra.mxu0 %v839
            %868 = vmatprep.subr.mxu0 0.0
            %869 = vmatpush1.msra.mxu0 %v840
            %870 = vmatprep.subr.mxu0 0.0
            %871 = vmatpush1.msra.mxu0 %v841
            %872 = vmatprep.subr.mxu0 0.0
            %873 = vmatpush1.msra.mxu0 %v842
            %874 = vmatprep.subr.mxu0 0.0
            %875 = vmatpush1.msra.mxu0 %v843
            %876 = vmatprep.subr.mxu0 0.0
            %877 = vmatpush1.msra.mxu0 0.0
            %878 = vmatprep.subr.mxu0 0.0
            %879 = vmatpush1.msra.mxu0 0.0
            %880 = vmatprep.subr.mxu0 0.0
            %881 = vmatpush1.msra.mxu0 0.0
            %882 = vmatprep.subr.mxu0 0.0
            %883 = vmatpush1.msra.mxu0 0.0
            %884 = vmatprep.subr.mxu0 0.0
            %885 = vmatpush1.msra.mxu0 0.0
            %886 = vmatprep.subr.mxu0 0.0
            %887 = vmatpush1.msra.mxu0 0.0
            %888 = vmatprep.subr.mxu0 0.0
            %889 = vmatpush1.msra.mxu0 0.0
            %890 = vmatprep.subr.mxu0 0.0
            %891 = vmatpush1.msra.mxu0 0.0
            %892 = vmatprep.subr.mxu0 0.0
            %893 = vmatpush1.msra.mxu0 0.0
            %894 = vmatprep.subr.mxu0 0.0
            %895 = vmatpush1.msra.mxu0 0.0
            %896 = vmatprep.subr.mxu0 0.0
            %897 = vmatpush1.msra.mxu0 0.0
            %898 = vmatprep.subr.mxu0 0.0
            %899 = vmatpush1.msra.mxu0 0.0
            %900 = vmatprep.subr.mxu0 0.0
            %901 = vmatpush1.msra.mxu0 0.0
            %902 = vmatprep.subr.mxu0 0.0
            %903 = vmatpush1.msra.mxu0 0.0
            %904 = vmatprep.subr.mxu0 0.0
            %905 = vmatpush1.msra.mxu0 0.0
            %906 = vmatprep.subr.mxu0 0.0
            %907 = vmatpush1.msra.mxu0 0.0
            %908 = vmatprep.mubr.f32.mxu0 0.0
            %909 = vmatmul.mubr.f32.gmra.mrb[0].mxu0 %v827
            %v910 = vpop.f32.mrb[0].mxu0
            %v911 = vadd.f32 0.0, %v910
            %v912 = vpop.f32.mrb[0].mxu0
            %913 = vdwg.mxu0
            %v914 = vmul.f32 %v911, 0.00048828125
            %v915 = vmul.f32 %v914, %v914
            %v917 = vrot.slane %v915, 7
            %v919 = vsub.f32 %v914, %v917
            %v920 = vmax.f32 %v919, 0.0
            %v921 = vld [vmem:[%s5] sm:$0x1]
            %v922 = vld [vmem:[%s5 + $0x1] sm:$0x1]
            %v923 = vadd.f32 %v920, 1e-05
            %v924 = vrsqrt.pop %v923
            %v926 = vrot.slane %v924, 1
            %v928 = vmul.f32 %v921, %v926
            %929 = vst [vmem:[#allocation3] sm:$0x1] %v928
            %v930 = vmul.f32 %v914, %v928
            %v931 = vsub.f32 %v922, %v930
            %932 = vst [vmem:[#allocation4] sm:$0x1] %v931
          $region76: #{tpu_custom_call.1} parent=71 // pred_fallthru
            _
        $region72: #{tpu_custom_call.1} parent=43 // pred_fallthru
          _
        %p933 = scmp.eq.s32.totalorder %s29, 1
        // Predicated region
        $region77: #{tpu_custom_call.1} parent=43 // pred_check
          %p934 = pneg %p933
        $region78: #{tpu_custom_call.1} parent=43 // pred_check_branch
          %936 = sbr.rel (%p934) target = $region80
        $region79: #{tpu_custom_call.1} parent=43 // pred_region
          %v937 = vld [vmem:[%s299] sm:$0xf]
          %v938 = vld [vmem:[%s299 + $0x4] sm:$0xf]
          %v939 = vld [vmem:[%s299 + $0x8] sm:$0xf]
          %v940 = vld [vmem:[%s299 + $0xc] sm:$0xf]
          %v941 = vld [vmem:[%s299 + $0x10] sm:$0xf]
          %v942 = vld [vmem:[%s299 + $0x14] sm:$0xf]
          %v943 = vld [vmem:[%s299 + $0x18] sm:$0xf]
          %v944 = vld [vmem:[%s299 + $0x1c] sm:$0xf]
          %v945 = vld [vmem:[%s299 + $0x20] sm:$0xf]
          %v946 = vld [vmem:[%s299 + $0x24] sm:$0xf]
          %v947 = vld [vmem:[%s299 + $0x28] sm:$0xf]
          %v948 = vld [vmem:[%s299 + $0x2c] sm:$0xf]
          %v949 = vld [vmem:[%s299 + $0x30] sm:$0xf]
          %v950 = vld [vmem:[%s299 + $0x34] sm:$0xf]
          %v951 = vld [vmem:[%s299 + $0x38] sm:$0xf]
          %v952 = vld [vmem:[%s299 + $0x3c] sm:$0xf]
          %v953 = vld [vmem:[%s299 + $0x40] sm:$0xf]
          %v954 = vld [vmem:[%s299 + $0x44] sm:$0xf]
          %v955 = vld [vmem:[%s299 + $0x48] sm:$0xf]
          %v956 = vld [vmem:[%s299 + $0x4c] sm:$0xf]
          %v957 = vld [vmem:[%s299 + $0x50] sm:$0xf]
          %v958 = vld [vmem:[%s299 + $0x54] sm:$0xf]
          %v959 = vld [vmem:[%s299 + $0x58] sm:$0xf]
          %v960 = vld [vmem:[%s299 + $0x5c] sm:$0xf]
          %v961 = vld [vmem:[%s299 + $0x60] sm:$0xf]
          %v962 = vld [vmem:[%s299 + $0x64] sm:$0xf]
          %v963 = vld [vmem:[%s299 + $0x68] sm:$0xf]
          %v964 = vld [vmem:[%s299 + $0x6c] sm:$0xf]
          %v965 = vld [vmem:[%s299 + $0x70] sm:$0xf]
          %v966 = vld [vmem:[%s299 + $0x74] sm:$0xf]
          %v967 = vld [vmem:[%s299 + $0x78] sm:$0xf]
          %v968 = vld [vmem:[%s299 + $0x7c] sm:$0xf]
          %v969 = vld [vmem:[#allocation8] sm:$0xf]
          %v970 = vld [vmem:[#allocation8 + $0x4] sm:$0xf]
          %v971 = vld [vmem:[#allocation8 + $0x8] sm:$0xf]
          %v972 = vld [vmem:[#allocation8 + $0xc] sm:$0xf]
          %v973 = vld [vmem:[#allocation8 + $0x10] sm:$0xf]
          %v974 = vld [vmem:[#allocation8 + $0x14] sm:$0xf]
          %v975 = vld [vmem:[#allocation8 + $0x18] sm:$0xf]
          %v976 = vld [vmem:[#allocation8 + $0x1c] sm:$0xf]
          %v977 = vld [vmem:[#allocation8 + $0x20] sm:$0xf]
          %v978 = vld [vmem:[#allocation8 + $0x24] sm:$0xf]
          %v979 = vld [vmem:[#allocation8 + $0x28] sm:$0xf]
          %v980 = vld [vmem:[#allocation8 + $0x2c] sm:$0xf]
          %v981 = vld [vmem:[#allocation8 + $0x30] sm:$0xf]
          %v982 = vld [vmem:[#allocation8 + $0x34] sm:$0xf]
          %v983 = vld [vmem:[#allocation8 + $0x38] sm:$0xf]
          %v984 = vld [vmem:[#allocation8 + $0x3c] sm:$0xf]
          %v1017 = vunpack.c.l.b16 %v937
          %v1018 = vunpack.c.l.b16 %v938
          %v1019 = vunpack.c.l.b16 %v939
          %v1020 = vunpack.c.l.b16 %v940
          %v1021 = vunpack.c.l.b16 %v941
          %v1022 = vunpack.c.l.b16 %v942
          %v1023 = vunpack.c.l.b16 %v943
          %v1024 = vunpack.c.l.b16 %v944
          %v1025 = vunpack.c.l.b16 %v945
          %v1026 = vunpack.c.l.b16 %v946
          %v1027 = vunpack.c.l.b16 %v947
          %v1028 = vunpack.c.l.b16 %v948
          %v1029 = vunpack.c.l.b16 %v949
          %v1030 = vunpack.c.l.b16 %v950
          %v1031 = vunpack.c.l.b16 %v951
          %v1032 = vunpack.c.l.b16 %v952
          %v1033 = vunpack.c.l.b16 %v953
          %v1034 = vunpack.c.l.b16 %v954
          %v1035 = vunpack.c.l.b16 %v955
          %v1036 = vunpack.c.l.b16 %v956
          %v1037 = vunpack.c.l.b16 %v957
          %v1038 = vunpack.c.l.b16 %v958
          %v1039 = vunpack.c.l.b16 %v959
          %v1040 = vunpack.c.l.b16 %v960
          %v1041 = vunpack.c.l.b16 %v961
          %v1042 = vunpack.c.l.b16 %v962
          %v1043 = vunpack.c.l.b16 %v963
          %v1044 = vunpack.c.l.b16 %v964
          %v1045 = vunpack.c.l.b16 %v965
          %v1046 = vunpack.c.l.b16 %v966
          %v1047 = vunpack.c.l.b16 %v967
          %v1048 = vunpack.c.l.b16 %v968
          %v1049 = vpack.c.b16 %v1018, %v1017
          %v1050 = vpack.c.b16 %v1020, %v1019
          %v1051 = vpack.c.b16 %v1022, %v1021
          %v1052 = vpack.c.b16 %v1024, %v1023
          %v1053 = vpack.c.b16 %v1026, %v1025
          %v1054 = vpack.c.b16 %v1028, %v1027
          %v1055 = vpack.c.b16 %v1030, %v1029
          %v1056 = vpack.c.b16 %v1032, %v1031
          %v1057 = vpack.c.b16 %v1034, %v1033
          %v1058 = vpack.c.b16 %v1036, %v1035
          %v1059 = vpack.c.b16 %v1038, %v1037
          %v1060 = vpack.c.b16 %v1040, %v1039
          %v1061 = vpack.c.b16 %v1042, %v1041
          %v1062 = vpack.c.b16 %v1044, %v1043
          %v1063 = vpack.c.b16 %v1046, %v1045
          %v1064 = vpack.c.b16 %v1048, %v1047
          %v1097 = vunpack.c.l.b16 %v969
          %v1098 = vunpack.c.l.b16 %v970
          %v1099 = vunpack.c.l.b16 %v971
          %v1100 = vunpack.c.l.b16 %v972
          %v1101 = vunpack.c.l.b16 %v973
          %v1102 = vunpack.c.l.b16 %v974
          %v1103 = vunpack.c.l.b16 %v975
          %v1104 = vunpack.c.l.b16 %v976
          %v1105 = vunpack.c.l.b16 %v977
          %v1106 = vunpack.c.l.b16 %v978
          %v1107 = vunpack.c.l.b16 %v979
          %v1108 = vunpack.c.l.b16 %v980
          %v1109 = vunpack.c.l.b16 %v981
          %v1110 = vunpack.c.l.b16 %v982
          %v1111 = vunpack.c.l.b16 %v983
          %v1112 = vunpack.c.l.b16 %v984
          %v1113 = vpack.c.b16 %v1098, %v1097
          %v1114 = vpack.c.b16 %v1100, %v1099
          %v1115 = vpack.c.b16 %v1102, %v1101
          %v1116 = vpack.c.b16 %v1104, %v1103
          %v1117 = vpack.c.b16 %v1106, %v1105
          %v1118 = vpack.c.b16 %v1108, %v1107
          %v1119 = vpack.c.b16 %v1110, %v1109
          %v1120 = vpack.c.b16 %v1112, %v1111
          %1129 = vmatprep.subr.bf16.mxu0 0
          %1130 = vmatpush1.bf16.msra.mxu0 %v1113
          %1131 = vmatprep.subr.bf16.mxu0 0
          %1132 = vmatpush1.bf16.msra.mxu0 %v1114
          %1133 = vmatprep.subr.bf16.mxu0 0
          %1134 = vmatpush1.bf16.msra.mxu0 %v1115
          %1135 = vmatprep.subr.bf16.mxu0 0
          %1136 = vmatpush1.bf16.msra.mxu0 %v1116
          %1137 = vmatprep.subr.bf16.mxu0 0
          %1138 = vmatpush1.bf16.msra.mxu0 %v1117
          %1139 = vmatprep.subr.bf16.mxu0 0
          %1140 = vmatpush1.bf16.msra.mxu0 %v1118
          %1141 = vmatprep.subr.bf16.mxu0 0
          %1142 = vmatpush1.bf16.msra.mxu0 %v1119
          %1143 = vmatprep.subr.bf16.mxu0 0
          %1144 = vmatpush1.bf16.msra.mxu0 %v1120
          %1145 = vmatprep.subr.bf16.mxu0 0
          %1146 = vmatpush1.bf16.msra.mxu0 0
          %1147 = vmatprep.subr.bf16.mxu0 0
          %1148 = vmatpush1.bf16.msra.mxu0 0
          %1149 = vmatprep.subr.bf16.mxu0 0
          %1150 = vmatpush1.bf16.msra.mxu0 0
          %1151 = vmatprep.subr.bf16.mxu0 0
          %1152 = vmatpush1.bf16.msra.mxu0 0
          %1153 = vmatprep.subr.bf16.mxu0 0
          %1154 = vmatpush1.bf16.msra.mxu0 0
          %1155 = vmatprep.subr.bf16.mxu0 0
          %1156 = vmatpush1.bf16.msra.mxu0 0
          %1157 = vmatprep.subr.bf16.mxu0 0
          %1158 = vmatpush1.bf16.msra.mxu0 0
          %1159 = vmatprep.subr.bf16.mxu0 0
          %1160 = vmatpush1.bf16.msra.mxu0 0
          %1161 = vmatprep.mubr.bf16.mxu0 0
          %1162 = vmatmul.mubr.bf16.gmra.mrb[0].mxu0 %v1049
          %v1163 = vpop.f32.mrb[0].mxu0
          %v1164 = vadd.f32 0.0, %v1163
          %v1165 = vpop.f32.mrb[0].mxu0
          %v1166 = vpop.f32.mrb[0].mxu0
          %v1167 = vadd.f32 0.0, %v1166
          %v1168 = vpop.f32.mrb[0].mxu0
          %1169 = vmatprep.mubr.bf16.mxu0 0
          %1170 = vmatmul.mubr.bf16.gmra.mrb[0].mxu0 %v1050
          %v1171 = vpop.f32.mrb[0].mxu0
          %v1172 = vadd.f32 0.0, %v1171
          %v1173 = vpop.f32.mrb[0].mxu0
          %v1174 = vpop.f32.mrb[0].mxu0
          %v1175 = vadd.f32 0.0, %v1174
          %v1176 = vpop.f32.mrb[0].mxu0
          %1177 = vmatprep.mubr.bf16.mxu0 0
          %1178 = vmatmul.mubr.bf16.gmra.mrb[0].mxu0 %v1051
          %v1179 = vpop.f32.mrb[0].mxu0
          %v1180 = vadd.f32 0.0, %v1179
          %v1181 = vpop.f32.mrb[0].mxu0
          %v1182 = vpop.f32.mrb[0].mxu0
          %v1183 = vadd.f32 0.0, %v1182
          %v1184 = vpop.f32.mrb[0].mxu0
          %1185 = vmatprep.mubr.bf16.mxu0 0
          %1186 = vmatmul.mubr.bf16.gmra.mrb[0].mxu0 %v1052
          %v1187 = vpop.f32.mrb[0].mxu0
          %v1188 = vadd.f32 0.0, %v1187
          %v1189 = vpop.f32.mrb[0].mxu0
          %v1190 = vpop.f32.mrb[0].mxu0
          %v1191 = vadd.f32 0.0, %v1190
          %v1192 = vpop.f32.mrb[0].mxu0
          %1193 = vmatprep.mubr.bf16.mxu0 0
          %1194 = vmatmul.mubr.bf16.gmra.mrb[0].mxu0 %v1053
          %v1195 = vpop.f32.mrb[0].mxu0
          %v1196 = vadd.f32 0.0, %v1195
          %v1197 = vpop.f32.mrb[0].mxu0
          %v1198 = vpop.f32.mrb[0].mxu0
          %v1199 = vadd.f32 0.0, %v1198
          %v1200 = vpop.f32.mrb[0].mxu0
          %1201 = vmatprep.mubr.bf16.mxu0 0
          %1202 = vmatmul.mubr.bf16.gmra.mrb[0].mxu0 %v1054
          %v1203 = vpop.f32.mrb[0].mxu0
          %v1204 = vadd.f32 0.0, %v1203
          %v1205 = vpop.f32.mrb[0].mxu0
          %v1206 = vpop.f32.mrb[0].mxu0
          %v1207 = vadd.f32 0.0, %v1206
          %v1208 = vpop.f32.mrb[0].mxu0
          %1209 = vmatprep.mubr.bf16.mxu0 0
          %1210 = vmatmul.mubr.bf16.gmra.mrb[0].mxu0 %v1055
          %v1211 = vpop.f32.mrb[0].mxu0
          %v1212 = vadd.f32 0.0, %v1211
          %v1213 = vpop.f32.mrb[0].mxu0
          %v1214 = vpop.f32.mrb[0].mxu0
          %v1215 = vadd.f32 0.0, %v1214
          %v1216 = vpop.f32.mrb[0].mxu0
          %1217 = vmatprep.mubr.bf16.mxu0 0
          %1218 = vmatmul.mubr.bf16.gmra.mrb[0].mxu0 %v1056
          %v1219 = vpop.f32.mrb[0].mxu0
          %v1220 = vadd.f32 0.0, %v1219
          %v1221 = vpop.f32.mrb[0].mxu0
          %v1222 = vpop.f32.mrb[0].mxu0
          %v1223 = vadd.f32 0.0, %v1222
          %v1224 = vpop.f32.mrb[0].mxu0
          %1225 = vmatprep.mubr.bf16.mxu0 0
          %1226 = vmatmul.mubr.bf16.gmra.mrb[0].mxu0 %v1057
          %v1227 = vpop.f32.mrb[0].mxu0
          %v1228 = vadd.f32 0.0, %v1227
          %v1229 = vpop.f32.mrb[0].mxu0
          %v1230 = vpop.f32.mrb[0].mxu0
          %v1231 = vadd.f32 0.0, %v1230
          %v1232 = vpop.f32.mrb[0].mxu0
          %1233 = vmatprep.mubr.bf16.mxu0 0
          %1234 = vmatmul.mubr.bf16.gmra.mrb[0].mxu0 %v1058
          %v1235 = vpop.f32.mrb[0].mxu0
          %v1236 = vadd.f32 0.0, %v1235
          %v1237 = vpop.f32.mrb[0].mxu0
          %v1238 = vpop.f32.mrb[0].mxu0
          %v1239 = vadd.f32 0.0, %v1238
          %v1240 = vpop.f32.mrb[0].mxu0
          %1241 = vmatprep.mubr.bf16.mxu0 0
          %1242 = vmatmul.mubr.bf16.gmra.mrb[0].mxu0 %v1059
          %v1243 = vpop.f32.mrb[0].mxu0
          %v1244 = vadd.f32 0.0, %v1243
          %v1245 = vpop.f32.mrb[0].mxu0
          %v1246 = vpop.f32.mrb[0].mxu0
          %v1247 = vadd.f32 0.0, %v1246
          %v1248 = vpop.f32.mrb[0].mxu0
          %1249 = vmatprep.mubr.bf16.mxu0 0
          %1250 = vmatmul.mubr.bf16.gmra.mrb[0].mxu0 %v1060
          %v1251 = vpop.f32.mrb[0].mxu0
          %v1252 = vadd.f32 0.0, %v1251
          %v1253 = vpop.f32.mrb[0].mxu0
          %v1254 = vpop.f32.mrb[0].mxu0
          %v1255 = vadd.f32 0.0, %v1254
          %v1256 = vpop.f32.mrb[0].mxu0
          %1257 = vmatprep.mubr.bf16.mxu0 0
          %1258 = vmatmul.mubr.bf16.gmra.mrb[0].mxu0 %v1061
          %v1259 = vpop.f32.mrb[0].mxu0
          %v1260 = vadd.f32 0.0, %v1259
          %v1261 = vpop.f32.mrb[0].mxu0
          %v1262 = vpop.f32.mrb[0].mxu0
          %v1263 = vadd.f32 0.0, %v1262
          %v1264 = vpop.f32.mrb[0].mxu0
          %1265 = vmatprep.mubr.bf16.mxu0 0
          %1266 = vmatmul.mubr.bf16.gmra.mrb[0].mxu0 %v1062
          %v1267 = vpop.f32.mrb[0].mxu0
          %v1268 = vadd.f32 0.0, %v1267
          %v1269 = vpop.f32.mrb[0].mxu0
          %v1270 = vpop.f32.mrb[0].mxu0
          %v1271 = vadd.f32 0.0, %v1270
          %v1272 = vpop.f32.mrb[0].mxu0
          %1273 = vmatprep.mubr.bf16.mxu0 0
          %1274 = vmatmul.mubr.bf16.gmra.mrb[0].mxu0 %v1063
          %v1275 = vpop.f32.mrb[0].mxu0
          %v1276 = vadd.f32 0.0, %v1275
          %v1277 = vpop.f32.mrb[0].mxu0
          %v1278 = vpop.f32.mrb[0].mxu0
          %v1279 = vadd.f32 0.0, %v1278
          %v1280 = vpop.f32.mrb[0].mxu0
          %1281 = vmatprep.mubr.bf16.mxu0 0
          %1282 = vmatmul.mubr.bf16.gmra.mrb[0].mxu0 %v1064
          %v1283 = vpop.f32.mrb[0].mxu0
          %v1284 = vadd.f32 0.0, %v1283
          %v1285 = vpop.f32.mrb[0].mxu0
          %v1286 = vpop.f32.mrb[0].mxu0
          %v1287 = vadd.f32 0.0, %v1286
          %v1288 = vpop.f32.mrb[0].mxu0
          %1289 = vdwg.mxu0
          %v1290 = vld [vmem:[#allocation3] sm:$0x1]
          %v1291 = vlaneseq
          %v1292 = vshrl.u32 %v1291, 7
          %v1293 = vsub.s32 0, %v1292
          %v1294 = vrot.slane %v1290, %v1293
          %v1295 = vmul.f32 %v1164, %v1294
          %v1296 = vmul.f32 %v1167, %v1294
          %v1297 = vmul.f32 %v1172, %v1294
          %v1298 = vmul.f32 %v1175, %v1294
          %v1299 = vmul.f32 %v1180, %v1294
          %v1300 = vmul.f32 %v1183, %v1294
          %v1301 = vmul.f32 %v1188, %v1294
          %v1302 = vmul.f32 %v1191, %v1294
          %v1303 = vmul.f32 %v1196, %v1294
          %v1304 = vmul.f32 %v1199, %v1294
          %v1305 = vmul.f32 %v1204, %v1294
          %v1306 = vmul.f32 %v1207, %v1294
          %v1307 = vmul.f32 %v1212, %v1294
          %v1308 = vmul.f32 %v1215, %v1294
          %v1309 = vmul.f32 %v1220, %v1294
          %v1310 = vmul.f32 %v1223, %v1294
          %v1311 = vmul.f32 %v1228, %v1294
          %v1312 = vmul.f32 %v1231, %v1294
          %v1313 = vmul.f32 %v1236, %v1294
          %v1314 = vmul.f32 %v1239, %v1294
          %v1315 = vmul.f32 %v1244, %v1294
          %v1316 = vmul.f32 %v1247, %v1294
          %v1317 = vmul.f32 %v1252, %v1294
          %v1318 = vmul.f32 %v1255, %v1294
          %v1319 = vmul.f32 %v1260, %v1294
          %v1320 = vmul.f32 %v1263, %v1294
          %v1321 = vmul.f32 %v1268, %v1294
          %v1322 = vmul.f32 %v1271, %v1294
          %v1323 = vmul.f32 %v1276, %v1294
          %v1324 = vmul.f32 %v1279, %v1294
          %v1325 = vmul.f32 %v1284, %v1294
          %v1326 = vmul.f32 %v1287, %v1294
          %v1327 = vld [vmem:[#allocation4] sm:$0x1]
          %v1328 = vlaneseq
          %v1329 = vshrl.u32 %v1328, 7
          %v1330 = vsub.s32 0, %v1329
          %v1331 = vrot.slane %v1327, %v1330
          %v1332 = vadd.f32 %v1295, %v1331
          %v1333 = vadd.f32 %v1296, %v1331
          %v1334 = vadd.f32 %v1297, %v1331
          %v1335 = vadd.f32 %v1298, %v1331
          %v1336 = vadd.f32 %v1299, %v1331
          %v1337 = vadd.f32 %v1300, %v1331
          %v1338 = vadd.f32 %v1301, %v1331
          %v1339 = vadd.f32 %v1302, %v1331
          %v1340 = vadd.f32 %v1303, %v1331
          %v1341 = vadd.f32 %v1304, %v1331
          %v1342 = vadd.f32 %v1305, %v1331
          %v1343 = vadd.f32 %v1306, %v1331
          %v1344 = vadd.f32 %v1307, %v1331
          %v1345 = vadd.f32 %v1308, %v1331
          %v1346 = vadd.f32 %v1309, %v1331
          %v1347 = vadd.f32 %v1310, %v1331
          %v1348 = vadd.f32 %v1311, %v1331
          %v1349 = vadd.f32 %v1312, %v1331
          %v1350 = vadd.f32 %v1313, %v1331
          %v1351 = vadd.f32 %v1314, %v1331
          %v1352 = vadd.f32 %v1315, %v1331
          %v1353 = vadd.f32 %v1316, %v1331
          %v1354 = vadd.f32 %v1317, %v1331
          %v1355 = vadd.f32 %v1318, %v1331
          %v1356 = vadd.f32 %v1319, %v1331
          %v1357 = vadd.f32 %v1320, %v1331
          %v1358 = vadd.f32 %v1321, %v1331
          %v1359 = vadd.f32 %v1322, %v1331
          %v1360 = vadd.f32 %v1323, %v1331
          %v1361 = vadd.f32 %v1324, %v1331
          %v1362 = vadd.f32 %v1325, %v1331
          %v1363 = vadd.f32 %v1326, %v1331
          %v1364 = vmax.f32 %v1332, 0.0
          %v1365 = vmax.f32 %v1333, 0.0
          %v1366 = vmax.f32 %v1334, 0.0
          %v1367 = vmax.f32 %v1335, 0.0
          %v1368 = vmax.f32 %v1336, 0.0
          %v1369 = vmax.f32 %v1337, 0.0
          %v1370 = vmax.f32 %v1338, 0.0
          %v1371 = vmax.f32 %v1339, 0.0
          %v1372 = vmax.f32 %v1340, 0.0
          %v1373 = vmax.f32 %v1341, 0.0
          %v1374 = vmax.f32 %v1342, 0.0
          %v1375 = vmax.f32 %v1343, 0.0
          %v1376 = vmax.f32 %v1344, 0.0
          %v1377 = vmax.f32 %v1345, 0.0
          %v1378 = vmax.f32 %v1346, 0.0
          %v1379 = vmax.f32 %v1347, 0.0
          %v1380 = vmax.f32 %v1348, 0.0
          %v1381 = vmax.f32 %v1349, 0.0
          %v1382 = vmax.f32 %v1350, 0.0
          %v1383 = vmax.f32 %v1351, 0.0
          %v1384 = vmax.f32 %v1352, 0.0
          %v1385 = vmax.f32 %v1353, 0.0
          %v1386 = vmax.f32 %v1354, 0.0
          %v1387 = vmax.f32 %v1355, 0.0
          %v1388 = vmax.f32 %v1356, 0.0
          %v1389 = vmax.f32 %v1357, 0.0
          %v1390 = vmax.f32 %v1358, 0.0
          %v1391 = vmax.f32 %v1359, 0.0
          %v1392 = vmax.f32 %v1360, 0.0
          %v1393 = vmax.f32 %v1361, 0.0
          %v1394 = vmax.f32 %v1362, 0.0
          %v1395 = vmax.f32 %v1363, 0.0
          %v1396 = vpack.c.bf16 %v1365, %v1364
          %v1397 = vpack.c.bf16 %v1367, %v1366
          %v1398 = vpack.c.bf16 %v1369, %v1368
          %v1399 = vpack.c.bf16 %v1371, %v1370
          %v1400 = vpack.c.bf16 %v1373, %v1372
          %v1401 = vpack.c.bf16 %v1375, %v1374
          %v1402 = vpack.c.bf16 %v1377, %v1376
          %v1403 = vpack.c.bf16 %v1379, %v1378
          %v1404 = vpack.c.bf16 %v1381, %v1380
          %v1405 = vpack.c.bf16 %v1383, %v1382
          %v1406 = vpack.c.bf16 %v1385, %v1384
          %v1407 = vpack.c.bf16 %v1387, %v1386
          %v1408 = vpack.c.bf16 %v1389, %v1388
          %v1409 = vpack.c.bf16 %v1391, %v1390
          %v1410 = vpack.c.bf16 %v1393, %v1392
          %v1411 = vpack.c.bf16 %v1395, %v1394
          %v1412 = vld [vmem:[#allocation10] sm:$0xf]
          %v1413 = vld [vmem:[#allocation10 + $0x4] sm:$0xf]
          %v1414 = vld [vmem:[#allocation10 + $0x8] sm:$0xf]
          %v1415 = vld [vmem:[#allocation10 + $0xc] sm:$0xf]
          %v1416 = vld [vmem:[#allocation10 + $0x10] sm:$0xf]
          %v1417 = vld [vmem:[#allocation10 + $0x14] sm:$0xf]
          %v1418 = vld [vmem:[#allocation10 + $0x18] sm:$0xf]
          %v1419 = vld [vmem:[#allocation10 + $0x1c] sm:$0xf]
          %v1420 = vld [vmem:[#allocation10 + $0x20] sm:$0xf]
          %v1421 = vld [vmem:[#allocation10 + $0x24] sm:$0xf]
          %v1422 = vld [vmem:[#allocation10 + $0x28] sm:$0xf]
          %v1423 = vld [vmem:[#allocation10 + $0x2c] sm:$0xf]
          %v1424 = vld [vmem:[#allocation10 + $0x30] sm:$0xf]
          %v1425 = vld [vmem:[#allocation10 + $0x34] sm:$0xf]
          %v1426 = vld [vmem:[#allocation10 + $0x38] sm:$0xf]
          %v1427 = vld [vmem:[#allocation10 + $0x3c] sm:$0xf]
          %v1444 = vunpack.c.l.b16 %v1412
          %v1445 = vunpack.c.l.b16 %v1413
          %v1446 = vunpack.c.l.b16 %v1414
          %v1447 = vunpack.c.l.b16 %v1415
          %v1448 = vunpack.c.l.b16 %v1416
          %v1449 = vunpack.c.l.b16 %v1417
          %v1450 = vunpack.c.l.b16 %v1418
          %v1451 = vunpack.c.l.b16 %v1419
          %v1452 = vunpack.c.l.b16 %v1420
          %v1453 = vunpack.c.l.b16 %v1421
          %v1454 = vunpack.c.l.b16 %v1422
          %v1455 = vunpack.c.l.b16 %v1423
          %v1456 = vunpack.c.l.b16 %v1424
          %v1457 = vunpack.c.l.b16 %v1425
          %v1458 = vunpack.c.l.b16 %v1426
          %v1459 = vunpack.c.l.b16 %v1427
          %v1460 = vpack.c.b16 %v1445, %v1444
          %v1461 = vpack.c.b16 %v1447, %v1446
          %v1462 = vpack.c.b16 %v1449, %v1448
          %v1463 = vpack.c.b16 %v1451, %v1450
          %v1464 = vpack.c.b16 %v1453, %v1452
          %v1465 = vpack.c.b16 %v1455, %v1454
          %v1466 = vpack.c.b16 %v1457, %v1456
          %v1467 = vpack.c.b16 %v1459, %v1458
          %1476 = vmatprep.subr.bf16.mxu0 0
          %1477 = vmatpush1.bf16.msra.mxu0 %v1460
          %1478 = vmatprep.subr.bf16.mxu0 0
          %1479 = vmatpush1.bf16.msra.mxu0 %v1461
          %1480 = vmatprep.subr.bf16.mxu0 0
          %1481 = vmatpush1.bf16.msra.mxu0 %v1462
          %1482 = vmatprep.subr.bf16.mxu0 0
          %1483 = vmatpush1.bf16.msra.mxu0 %v1463
          %1484 = vmatprep.subr.bf16.mxu0 0
          %1485 = vmatpush1.bf16.msra.mxu0 %v1464
          %1486 = vmatprep.subr.bf16.mxu0 0
          %1487 = vmatpush1.bf16.msra.mxu0 %v1465
          %1488 = vmatprep.subr.bf16.mxu0 0
          %1489 = vmatpush1.bf16.msra.mxu0 %v1466
          %1490 = vmatprep.subr.bf16.mxu0 0
          %1491 = vmatpush1.bf16.msra.mxu0 %v1467
          %1492 = vmatprep.subr.bf16.mxu0 0
          %1493 = vmatpush1.bf16.msra.mxu0 0
          %1494 = vmatprep.subr.bf16.mxu0 0
          %1495 = vmatpush1.bf16.msra.mxu0 0
          %1496 = vmatprep.subr.bf16.mxu0 0
          %1497 = vmatpush1.bf16.msra.mxu0 0
          %1498 = vmatprep.subr.bf16.mxu0 0
          %1499 = vmatpush1.bf16.msra.mxu0 0
          %1500 = vmatprep.subr.bf16.mxu0 0
          %1501 = vmatpush1.bf16.msra.mxu0 0
          %1502 = vmatprep.subr.bf16.mxu0 0
          %1503 = vmatpush1.bf16.msra.mxu0 0
          %1504 = vmatprep.subr.bf16.mxu0 0
          %1505 = vmatpush1.bf16.msra.mxu0 0
          %1506 = vmatprep.subr.bf16.mxu0 0
          %1507 = vmatpush1.bf16.msra.mxu0 0
          %1508 = vmatprep.mubr.bf16.mxu0 0
          %1509 = vmatmul.mubr.bf16.gmra.mrb[0].mxu0 %v1396
          %v1510 = vpop.f32.mrb[0].mxu0
          %v1511 = vadd.f32 0.0, %v1510
          %v1512 = vpop.f32.mrb[0].mxu0
          %v1513 = vpop.f32.mrb[0].mxu0
          %v1514 = vadd.f32 0.0, %v1513
          %v1515 = vpop.f32.mrb[0].mxu0
          %1516 = vmatprep.mubr.bf16.mxu0 0
          %1517 = vmatmul.mubr.bf16.gmra.mrb[0].mxu0 %v1397
          %v1518 = vpop.f32.mrb[0].mxu0
          %v1519 = vadd.f32 0.0, %v1518
          %v1520 = vpop.f32.mrb[0].mxu0
          %v1521 = vpop.f32.mrb[0].mxu0
          %v1522 = vadd.f32 0.0, %v1521
          %v1523 = vpop.f32.mrb[0].mxu0
          %1524 = vmatprep.mubr.bf16.mxu0 0
          %1525 = vmatmul.mubr.bf16.gmra.mrb[0].mxu0 %v1398
          %v1526 = vpop.f32.mrb[0].mxu0
          %v1527 = vadd.f32 0.0, %v1526
          %v1528 = vpop.f32.mrb[0].mxu0
          %v1529 = vpop.f32.mrb[0].mxu0
          %v1530 = vadd.f32 0.0, %v1529
          %v1531 = vpop.f32.mrb[0].mxu0
          %1532 = vmatprep.mubr.bf16.mxu0 0
          %1533 = vmatmul.mubr.bf16.gmra.mrb[0].mxu0 %v1399
          %v1534 = vpop.f32.mrb[0].mxu0
          %v1535 = vadd.f32 0.0, %v1534
          %v1536 = vpop.f32.mrb[0].mxu0
          %v1537 = vpop.f32.mrb[0].mxu0
          %v1538 = vadd.f32 0.0, %v1537
          %v1539 = vpop.f32.mrb[0].mxu0
          %1540 = vmatprep.mubr.bf16.mxu0 0
          %1541 = vmatmul.mubr.bf16.gmra.mrb[0].mxu0 %v1400
          %v1542 = vpop.f32.mrb[0].mxu0
          %v1543 = vadd.f32 0.0, %v1542
          %v1544 = vpop.f32.mrb[0].mxu0
          %v1545 = vpop.f32.mrb[0].mxu0
          %v1546 = vadd.f32 0.0, %v1545
          %v1547 = vpop.f32.mrb[0].mxu0
          %1548 = vmatprep.mubr.bf16.mxu0 0
          %1549 = vmatmul.mubr.bf16.gmra.mrb[0].mxu0 %v1401
          %v1550 = vpop.f32.mrb[0].mxu0
          %v1551 = vadd.f32 0.0, %v1550
          %v1552 = vpop.f32.mrb[0].mxu0
          %v1553 = vpop.f32.mrb[0].mxu0
          %v1554 = vadd.f32 0.0, %v1553
          %v1555 = vpop.f32.mrb[0].mxu0
          %1556 = vmatprep.mubr.bf16.mxu0 0
          %1557 = vmatmul.mubr.bf16.gmra.mrb[0].mxu0 %v1402
          %v1558 = vpop.f32.mrb[0].mxu0
          %v1559 = vadd.f32 0.0, %v1558
          %v1560 = vpop.f32.mrb[0].mxu0
          %v1561 = vpop.f32.mrb[0].mxu0
          %v1562 = vadd.f32 0.0, %v1561
          %v1563 = vpop.f32.mrb[0].mxu0
          %1564 = vmatprep.mubr.bf16.mxu0 0
          %1565 = vmatmul.mubr.bf16.gmra.mrb[0].mxu0 %v1403
          %v1566 = vpop.f32.mrb[0].mxu0
          %v1567 = vadd.f32 0.0, %v1566
          %v1568 = vpop.f32.mrb[0].mxu0
          %v1569 = vpop.f32.mrb[0].mxu0
          %v1570 = vadd.f32 0.0, %v1569
          %v1571 = vpop.f32.mrb[0].mxu0
          %1572 = vmatprep.mubr.bf16.mxu0 0
          %1573 = vmatmul.mubr.bf16.gmra.mrb[0].mxu0 %v1404
          %v1574 = vpop.f32.mrb[0].mxu0
          %v1575 = vadd.f32 0.0, %v1574
          %v1576 = vpop.f32.mrb[0].mxu0
          %v1577 = vpop.f32.mrb[0].mxu0
          %v1578 = vadd.f32 0.0, %v1577
          %v1579 = vpop.f32.mrb[0].mxu0
          %1580 = vmatprep.mubr.bf16.mxu0 0
          %1581 = vmatmul.mubr.bf16.gmra.mrb[0].mxu0 %v1405
          %v1582 = vpop.f32.mrb[0].mxu0
          %v1583 = vadd.f32 0.0, %v1582
          %v1584 = vpop.f32.mrb[0].mxu0
          %v1585 = vpop.f32.mrb[0].mxu0
          %v1586 = vadd.f32 0.0, %v1585
          %v1587 = vpop.f32.mrb[0].mxu0
          %1588 = vmatprep.mubr.bf16.mxu0 0
          %1589 = vmatmul.mubr.bf16.gmra.mrb[0].mxu0 %v1406
          %v1590 = vpop.f32.mrb[0].mxu0
          %v1591 = vadd.f32 0.0, %v1590
          %v1592 = vpop.f32.mrb[0].mxu0
          %v1593 = vpop.f32.mrb[0].mxu0
          %v1594 = vadd.f32 0.0, %v1593
          %v1595 = vpop.f32.mrb[0].mxu0
          %1596 = vmatprep.mubr.bf16.mxu0 0
          %1597 = vmatmul.mubr.bf16.gmra.mrb[0].mxu0 %v1407
          %v1598 = vpop.f32.mrb[0].mxu0
          %v1599 = vadd.f32 0.0, %v1598
          %v1600 = vpop.f32.mrb[0].mxu0
          %v1601 = vpop.f32.mrb[0].mxu0
          %v1602 = vadd.f32 0.0, %v1601
          %v1603 = vpop.f32.mrb[0].mxu0
          %1604 = vmatprep.mubr.bf16.mxu0 0
          %1605 = vmatmul.mubr.bf16.gmra.mrb[0].mxu0 %v1408
          %v1606 = vpop.f32.mrb[0].mxu0
          %v1607 = vadd.f32 0.0, %v1606
          %v1608 = vpop.f32.mrb[0].mxu0
          %v1609 = vpop.f32.mrb[0].mxu0
          %v1610 = vadd.f32 0.0, %v1609
          %v1611 = vpop.f32.mrb[0].mxu0
          %1612 = vmatprep.mubr.bf16.mxu0 0
          %1613 = vmatmul.mubr.bf16.gmra.mrb[0].mxu0 %v1409
          %v1614 = vpop.f32.mrb[0].mxu0
          %v1615 = vadd.f32 0.0, %v1614
          %v1616 = vpop.f32.mrb[0].mxu0
          %v1617 = vpop.f32.mrb[0].mxu0
          %v1618 = vadd.f32 0.0, %v1617
          %v1619 = vpop.f32.mrb[0].mxu0
          %1620 = vmatprep.mubr.bf16.mxu0 0
          %1621 = vmatmul.mubr.bf16.gmra.mrb[0].mxu0 %v1410
          %v1622 = vpop.f32.mrb[0].mxu0
          %v1623 = vadd.f32 0.0, %v1622
          %v1624 = vpop.f32.mrb[0].mxu0
          %v1625 = vpop.f32.mrb[0].mxu0
          %v1626 = vadd.f32 0.0, %v1625
          %v1627 = vpop.f32.mrb[0].mxu0
          %1628 = vmatprep.mubr.bf16.mxu0 0
          %1629 = vmatmul.mubr.bf16.gmra.mrb[0].mxu0 %v1411
          %v1630 = vpop.f32.mrb[0].mxu0
          %v1631 = vadd.f32 0.0, %v1630
          %v1632 = vpop.f32.mrb[0].mxu0
          %v1633 = vpop.f32.mrb[0].mxu0
          %v1634 = vadd.f32 0.0, %v1633
          %v1635 = vpop.f32.mrb[0].mxu0
          %1636 = vdwg.mxu0
          %v1637 = vld [vmem:[#allocation2] sm:$0x1]
          %v1638 = vadd.f32 %v1511, %v1514
          %v1639 = vadd.f32 %v1638, %v1519
          %v1640 = vadd.f32 %v1639, %v1522
          %v1641 = vadd.f32 %v1640, %v1527
          %v1642 = vadd.f32 %v1641, %v1530
          %v1643 = vadd.f32 %v1642, %v1535
          %v1644 = vadd.f32 %v1643, %v1538
          %v1645 = vadd.f32 %v1644, %v1543
          %v1646 = vadd.f32 %v1645, %v1546
          %v1647 = vadd.f32 %v1646, %v1551
          %v1648 = vadd.f32 %v1647, %v1554
          %v1649 = vadd.f32 %v1648, %v1559
          %v1650 = vadd.f32 %v1649, %v1562
          %v1651 = vadd.f32 %v1650, %v1567
          %v1652 = vadd.f32 %v1651, %v1570
          %v1653 = vadd.f32 %v1652, %v1575
          %v1654 = vadd.f32 %v1653, %v1578
          %v1655 = vadd.f32 %v1654, %v1583
          %v1656 = vadd.f32 %v1655, %v1586
          %v1657 = vadd.f32 %v1656, %v1591
          %v1658 = vadd.f32 %v1657, %v1594
          %v1659 = vadd.f32 %v1658, %v1599
          %v1660 = vadd.f32 %v1659, %v1602
          %v1661 = vadd.f32 %v1660, %v1607
          %v1662 = vadd.f32 %v1661, %v1610
          %v1663 = vadd.f32 %v1662, %v1615
          %v1664 = vadd.f32 %v1663, %v1618
          %v1665 = vadd.f32 %v1664, %v1623
          %v1666 = vadd.f32 %v1665, %v1626
          %v1667 = vadd.f32 %v1666, %v1631
          %v1668 = vadd.f32 %v1667, %v1634
          %v1669 = vrot.slane %v1668, 4
          %v1670 = vadd.f32 %v1668, %v1669
          %v1671 = vrot.slane %v1670, 2
          %v1672 = vadd.f32 %v1670, %v1671
          %v1673 = vrot.slane %v1672, 1
          %v1674 = vadd.f32 %v1672, %v1673
          %v1675 = vadd.f32 %v1637, %v1674
          %1676 = vst [vmem:[#allocation2] sm:$0x1] %v1675
          %v1677 = vld [vmem:[#allocation2 + $0x1] sm:$0x1]
          %v1678 = vmul.f32 %v1511, %v1511
          %v1679 = vmul.f32 %v1514, %v1514
          %v1680 = vmul.f32 %v1519, %v1519
          %v1681 = vmul.f32 %v1522, %v1522
          %v1682 = vmul.f32 %v1527, %v1527
          %v1683 = vmul.f32 %v1530, %v1530
          %v1684 = vmul.f32 %v1535, %v1535
          %v1685 = vmul.f32 %v1538, %v1538
          %v1686 = vmul.f32 %v1543, %v1543
          %v1687 = vmul.f32 %v1546, %v1546
          %v1688 = vmul.f32 %v1551, %v1551
          %v1689 = vmul.f32 %v1554, %v1554
          %v1690 = vmul.f32 %v1559, %v1559
          %v1691 = vmul.f32 %v1562, %v1562
          %v1692 = vmul.f32 %v1567, %v1567
          %v1693 = vmul.f32 %v1570, %v1570
          %v1694 = vmul.f32 %v1575, %v1575
          %v1695 = vmul.f32 %v1578, %v1578
          %v1696 = vmul.f32 %v1583, %v1583
          %v1697 = vmul.f32 %v1586, %v1586
          %v1698 = vmul.f32 %v1591, %v1591
          %v1699 = vmul.f32 %v1594, %v1594
          %v1700 = vmul.f32 %v1599, %v1599
          %v1701 = vmul.f32 %v1602, %v1602
          %v1702 = vmul.f32 %v1607, %v1607
          %v1703 = vmul.f32 %v1610, %v1610
          %v1704 = vmul.f32 %v1615, %v1615
          %v1705 = vmul.f32 %v1618, %v1618
          %v1706 = vmul.f32 %v1623, %v1623
          %v1707 = vmul.f32 %v1626, %v1626
          %v1708 = vmul.f32 %v1631, %v1631
          %v1709 = vmul.f32 %v1634, %v1634
          %v1710 = vadd.f32 %v1678, %v1679
          %v1711 = vadd.f32 %v1710, %v1680
          %v1712 = vadd.f32 %v1711, %v1681
          %v1713 = vadd.f32 %v1712, %v1682
          %v1714 = vadd.f32 %v1713, %v1683
          %v1715 = vadd.f32 %v1714, %v1684
          %v1716 = vadd.f32 %v1715, %v1685
          %v1717 = vadd.f32 %v1716, %v1686
          %v1718 = vadd.f32 %v1717, %v1687
          %v1719 = vadd.f32 %v1718, %v1688
          %v1720 = vadd.f32 %v1719, %v1689
          %v1721 = vadd.f32 %v1720, %v1690
          %v1722 = vadd.f32 %v1721, %v1691
          %v1723 = vadd.f32 %v1722, %v1692
          %v1724 = vadd.f32 %v1723, %v1693
          %v1725 = vadd.f32 %v1724, %v1694
          %v1726 = vadd.f32 %v1725, %v1695
          %v1727 = vadd.f32 %v1726, %v1696
          %v1728 = vadd.f32 %v1727, %v1697
          %v1729 = vadd.f32 %v1728, %v1698
          %v1730 = vadd.f32 %v1729, %v1699
          %v1731 = vadd.f32 %v1730, %v1700
          %v1732 = vadd.f32 %v1731, %v1701
          %v1733 = vadd.f32 %v1732, %v1702
          %v1734 = vadd.f32 %v1733, %v1703
          %v1735 = vadd.f32 %v1734, %v1704
          %v1736 = vadd.f32 %v1735, %v1705
          %v1737 = vadd.f32 %v1736, %v1706
          %v1738 = vadd.f32 %v1737, %v1707
          %v1739 = vadd.f32 %v1738, %v1708
          %v1740 = vadd.f32 %v1739, %v1709
          %v1741 = vrot.slane %v1740, 4
          %v1742 = vadd.f32 %v1740, %v1741
          %v1743 = vrot.slane %v1742, 2
          %v1744 = vadd.f32 %v1742, %v1743
          %v1745 = vrot.slane %v1744, 1
          %v1746 = vadd.f32 %v1744, %v1745
          %v1747 = vadd.f32 %v1677, %v1746
          %1748 = vst [vmem:[#allocation2 + $0x1] sm:$0x1] %v1747
          %p1749 = scmp.eq.s32.totalorder %s30, 1
          // Predicated region
          $region81: #{tpu_custom_call.1} parent=79 // pred_check
            %p1750 = pneg %p1749
          $region82: #{tpu_custom_call.1} parent=79 // pred_check_branch
            %1752 = sbr.rel (%p1750) target = $region84
          $region83: #{tpu_custom_call.1} parent=79 // pred_region
            %v1753 = vld [vmem:[#allocation2] sm:$0xff]
            %v1754 = vld [vmem:[#allocation13] sm:$0xff]
            %v1755 = vld [vmem:[#allocation13 + $0x8] sm:$0xff]
            %v1756 = vld [vmem:[#allocation13 + $0x10] sm:$0xff]
            %v1757 = vld [vmem:[#allocation13 + $0x18] sm:$0xff]
            %v1758 = vld [vmem:[#allocation13 + $0x20] sm:$0xff]
            %v1759 = vld [vmem:[#allocation13 + $0x28] sm:$0xff]
            %v1760 = vld [vmem:[#allocation13 + $0x30] sm:$0xff]
            %v1761 = vld [vmem:[#allocation13 + $0x38] sm:$0xff]
            %v1762 = vld [vmem:[#allocation13 + $0x40] sm:$0xff]
            %v1763 = vld [vmem:[#allocation13 + $0x48] sm:$0xff]
            %v1764 = vld [vmem:[#allocation13 + $0x50] sm:$0xff]
            %v1765 = vld [vmem:[#allocation13 + $0x58] sm:$0xff]
            %v1766 = vld [vmem:[#allocation13 + $0x60] sm:$0xff]
            %v1767 = vld [vmem:[#allocation13 + $0x68] sm:$0xff]
            %v1768 = vld [vmem:[#allocation13 + $0x70] sm:$0xff]
            %v1769 = vld [vmem:[#allocation13 + $0x78] sm:$0xff]
            %1770 = vmatprep.subr.mxu0 0.0
            %1771 = vmatpush1.msra.mxu0 %v1754
            %1772 = vmatprep.subr.mxu0 0.0
            %1773 = vmatpush1.msra.mxu0 %v1755
            %1774 = vmatprep.subr.mxu0 0.0
            %1775 = vmatpush1.msra.mxu0 %v1756
            %1776 = vmatprep.subr.mxu0 0.0
            %1777 = vmatpush1.msra.mxu0 %v1757
            %1778 = vmatprep.subr.mxu0 0.0
            %1779 = vmatpush1.msra.mxu0 %v1758
            %1780 = vmatprep.subr.mxu0 0.0
            %1781 = vmatpush1.msra.mxu0 %v1759
            %1782 = vmatprep.subr.mxu0 0.0
            %1783 = vmatpush1.msra.mxu0 %v1760
            %1784 = vmatprep.subr.mxu0 0.0
            %1785 = vmatpush1.msra.mxu0 %v1761
            %1786 = vmatprep.subr.mxu0 0.0
            %1787 = vmatpush1.msra.mxu0 %v1762
            %1788 = vmatprep.subr.mxu0 0.0
            %1789 = vmatpush1.msra.mxu0 %v1763
            %1790 = vmatprep.subr.mxu0 0.0
            %1791 = vmatpush1.msra.mxu0 %v1764
            %1792 = vmatprep.subr.mxu0 0.0
            %1793 = vmatpush1.msra.mxu0 %v1765
            %1794 = vmatprep.subr.mxu0 0.0
            %1795 = vmatpush1.msra.mxu0 %v1766
            %1796 = vmatprep.subr.mxu0 0.0
            %1797 = vmatpush1.msra.mxu0 %v1767
            %1798 = vmatprep.subr.mxu0 0.0
            %1799 = vmatpush1.msra.mxu0 %v1768
            %1800 = vmatprep.subr.mxu0 0.0
            %1801 = vmatpush1.msra.mxu0 %v1769
            %1802 = vmatprep.subr.mxu0 0.0
            %1803 = vmatpush1.msra.mxu0 0.0
            %1804 = vmatprep.subr.mxu0 0.0
            %1805 = vmatpush1.msra.mxu0 0.0
            %1806 = vmatprep.subr.mxu0 0.0
            %1807 = vmatpush1.msra.mxu0 0.0
            %1808 = vmatprep.subr.mxu0 0.0
            %1809 = vmatpush1.msra.mxu0 0.0
            %1810 = vmatprep.subr.mxu0 0.0
            %1811 = vmatpush1.msra.mxu0 0.0
            %1812 = vmatprep.subr.mxu0 0.0
            %1813 = vmatpush1.msra.mxu0 0.0
            %1814 = vmatprep.subr.mxu0 0.0
            %1815 = vmatpush1.msra.mxu0 0.0
            %1816 = vmatprep.subr.mxu0 0.0
            %1817 = vmatpush1.msra.mxu0 0.0
            %1818 = vmatprep.subr.mxu0 0.0
            %1819 = vmatpush1.msra.mxu0 0.0
            %1820 = vmatprep.subr.mxu0 0.0
            %1821 = vmatpush1.msra.mxu0 0.0
            %1822 = vmatprep.subr.mxu0 0.0
            %1823 = vmatpush1.msra.mxu0 0.0
            %1824 = vmatprep.subr.mxu0 0.0
            %1825 = vmatpush1.msra.mxu0 0.0
            %1826 = vmatprep.subr.mxu0 0.0
            %1827 = vmatpush1.msra.mxu0 0.0
            %1828 = vmatprep.subr.mxu0 0.0
            %1829 = vmatpush1.msra.mxu0 0.0
            %1830 = vmatprep.subr.mxu0 0.0
            %1831 = vmatpush1.msra.mxu0 0.0
            %1832 = vmatprep.subr.mxu0 0.0
            %1833 = vmatpush1.msra.mxu0 0.0
            %1834 = vmatprep.mubr.f32.mxu0 0.0
            %1835 = vmatmul.mubr.f32.gmra.mrb[0].mxu0 %v1753
            %v1836 = vpop.f32.mrb[0].mxu0
            %v1837 = vadd.f32 0.0, %v1836
            %v1838 = vpop.f32.mrb[0].mxu0
            %1839 = vdwg.mxu0
            %v1840 = vmul.f32 %v1837, 0.00048828125
            %v1841 = vmul.f32 %v1840, %v1840
            %v1843 = vrot.slane %v1841, 7
            %v1845 = vsub.f32 %v1840, %v1843
            %v1846 = vmax.f32 %v1845, 0.0
            %v1847 = vld [vmem:[%s5 + $0x2] sm:$0x1]
            %v1848 = vld [vmem:[%s5 + $0x3] sm:$0x1]
            %v1849 = vadd.f32 %v1846, 1e-05
            %v1850 = vrsqrt.pop %v1849
            %v1852 = vrot.slane %v1850, 1
            %v1854 = vmul.f32 %v1847, %v1852
            %1855 = vst [vmem:[#allocation3 + $0x1] sm:$0x1] %v1854
            %v1856 = vmul.f32 %v1840, %v1854
            %v1857 = vsub.f32 %v1848, %v1856
            %1858 = vst [vmem:[#allocation4 + $0x1] sm:$0x1] %v1857
          $region84: #{tpu_custom_call.1} parent=79 // pred_fallthru
            _
        $region80: #{tpu_custom_call.1} parent=43 // pred_fallthru
          _
        %p1859 = scmp.eq.s32.totalorder %s29, 2
        // Predicated region
        $region85: #{tpu_custom_call.1} parent=43 // pred_check
          %p1860 = pneg %p1859
        $region86: #{tpu_custom_call.1} parent=43 // pred_check_branch
          %1862 = sbr.rel (%p1860) target = $region88
        $region87: #{tpu_custom_call.1} parent=43 // pred_region
          %v1863 = vld [vmem:[%s299] sm:$0xf]
          %v1864 = vld [vmem:[%s299 + $0x4] sm:$0xf]
          %v1865 = vld [vmem:[%s299 + $0x8] sm:$0xf]
          %v1866 = vld [vmem:[%s299 + $0xc] sm:$0xf]
          %v1867 = vld [vmem:[%s299 + $0x10] sm:$0xf]
          %v1868 = vld [vmem:[%s299 + $0x14] sm:$0xf]
          %v1869 = vld [vmem:[%s299 + $0x18] sm:$0xf]
          %v1870 = vld [vmem:[%s299 + $0x1c] sm:$0xf]
          %v1871 = vld [vmem:[%s299 + $0x20] sm:$0xf]
          %v1872 = vld [vmem:[%s299 + $0x24] sm:$0xf]
          %v1873 = vld [vmem:[%s299 + $0x28] sm:$0xf]
          %v1874 = vld [vmem:[%s299 + $0x2c] sm:$0xf]
          %v1875 = vld [vmem:[%s299 + $0x30] sm:$0xf]
          %v1876 = vld [vmem:[%s299 + $0x34] sm:$0xf]
          %v1877 = vld [vmem:[%s299 + $0x38] sm:$0xf]
          %v1878 = vld [vmem:[%s299 + $0x3c] sm:$0xf]
          %v1879 = vld [vmem:[%s299 + $0x40] sm:$0xf]
          %v1880 = vld [vmem:[%s299 + $0x44] sm:$0xf]
          %v1881 = vld [vmem:[%s299 + $0x48] sm:$0xf]
          %v1882 = vld [vmem:[%s299 + $0x4c] sm:$0xf]
          %v1883 = vld [vmem:[%s299 + $0x50] sm:$0xf]
          %v1884 = vld [vmem:[%s299 + $0x54] sm:$0xf]
          %v1885 = vld [vmem:[%s299 + $0x58] sm:$0xf]
          %v1886 = vld [vmem:[%s299 + $0x5c] sm:$0xf]
          %v1887 = vld [vmem:[%s299 + $0x60] sm:$0xf]
          %v1888 = vld [vmem:[%s299 + $0x64] sm:$0xf]
          %v1889 = vld [vmem:[%s299 + $0x68] sm:$0xf]
          %v1890 = vld [vmem:[%s299 + $0x6c] sm:$0xf]
          %v1891 = vld [vmem:[%s299 + $0x70] sm:$0xf]
          %v1892 = vld [vmem:[%s299 + $0x74] sm:$0xf]
          %v1893 = vld [vmem:[%s299 + $0x78] sm:$0xf]
          %v1894 = vld [vmem:[%s299 + $0x7c] sm:$0xf]
          %v1895 = vld [vmem:[#allocation8] sm:$0xf]
          %v1896 = vld [vmem:[#allocation8 + $0x4] sm:$0xf]
          %v1897 = vld [vmem:[#allocation8 + $0x8] sm:$0xf]
          %v1898 = vld [vmem:[#allocation8 + $0xc] sm:$0xf]
          %v1899 = vld [vmem:[#allocation8 + $0x10] sm:$0xf]
          %v1900 = vld [vmem:[#allocation8 + $0x14] sm:$0xf]
          %v1901 = vld [vmem:[#allocation8 + $0x18] sm:$0xf]
          %v1902 = vld [vmem:[#allocation8 + $0x1c] sm:$0xf]
          %v1903 = vld [vmem:[#allocation8 + $0x20] sm:$0xf]
          %v1904 = vld [vmem:[#allocation8 + $0x24] sm:$0xf]
          %v1905 = vld [vmem:[#allocation8 + $0x28] sm:$0xf]
          %v1906 = vld [vmem:[#allocation8 + $0x2c] sm:$0xf]
          %v1907 = vld [vmem:[#allocation8 + $0x30] sm:$0xf]
          %v1908 = vld [vmem:[#allocation8 + $0x34] sm:$0xf]
          %v1909 = vld [vmem:[#allocation8 + $0x38] sm:$0xf]
          %v1910 = vld [vmem:[#allocation8 + $0x3c] sm:$0xf]
          %v1943 = vunpack.c.l.b16 %v1863
          %v1944 = vunpack.c.l.b16 %v1864
          %v1945 = vunpack.c.l.b16 %v1865
          %v1946 = vunpack.c.l.b16 %v1866
          %v1947 = vunpack.c.l.b16 %v1867
          %v1948 = vunpack.c.l.b16 %v1868
          %v1949 = vunpack.c.l.b16 %v1869
          %v1950 = vunpack.c.l.b16 %v1870
          %v1951 = vunpack.c.l.b16 %v1871
          %v1952 = vunpack.c.l.b16 %v1872
          %v1953 = vunpack.c.l.b16 %v1873
          %v1954 = vunpack.c.l.b16 %v1874
          %v1955 = vunpack.c.l.b16 %v1875
          %v1956 = vunpack.c.l.b16 %v1876
          %v1957 = vunpack.c.l.b16 %v1877
          %v1958 = vunpack.c.l.b16 %v1878
          %v1959 = vunpack.c.l.b16 %v1879
          %v1960 = vunpack.c.l.b16 %v1880
          %v1961 = vunpack.c.l.b16 %v1881
          %v1962 = vunpack.c.l.b16 %v1882
          %v1963 = vunpack.c.l.b16 %v1883
          %v1964 = vunpack.c.l.b16 %v1884
          %v1965 = vunpack.c.l.b16 %v1885
          %v1966 = vunpack.c.l.b16 %v1886
          %v1967 = vunpack.c.l.b16 %v1887
          %v1968 = vunpack.c.l.b16 %v1888
          %v1969 = vunpack.c.l.b16 %v1889
          %v1970 = vunpack.c.l.b16 %v1890
          %v1971 = vunpack.c.l.b16 %v1891
          %v1972 = vunpack.c.l.b16 %v1892
          %v1973 = vunpack.c.l.b16 %v1893
          %v1974 = vunpack.c.l.b16 %v1894
          %v1975 = vpack.c.b16 %v1944, %v1943
          %v1976 = vpack.c.b16 %v1946, %v1945
          %v1977 = vpack.c.b16 %v1948, %v1947
          %v1978 = vpack.c.b16 %v1950, %v1949
          %v1979 = vpack.c.b16 %v1952, %v1951
          %v1980 = vpack.c.b16 %v1954, %v1953
          %v1981 = vpack.c.b16 %v1956, %v1955
          %v1982 = vpack.c.b16 %v1958, %v1957
          %v1983 = vpack.c.b16 %v1960, %v1959
          %v1984 = vpack.c.b16 %v1962, %v1961
          %v1985 = vpack.c.b16 %v1964, %v1963
          %v1986 = vpack.c.b16 %v1966, %v1965
          %v1987 = vpack.c.b16 %v1968, %v1967
          %v1988 = vpack.c.b16 %v1970, %v1969
          %v1989 = vpack.c.b16 %v1972, %v1971
          %v1990 = vpack.c.b16 %v1974, %v1973
          %v2023 = vunpack.c.l.b16 %v1895
          %v2024 = vunpack.c.l.b16 %v1896
          %v2025 = vunpack.c.l.b16 %v1897
          %v2026 = vunpack.c.l.b16 %v1898
          %v2027 = vunpack.c.l.b16 %v1899
          %v2028 = vunpack.c.l.b16 %v1900
          %v2029 = vunpack.c.l.b16 %v1901
          %v2030 = vunpack.c.l.b16 %v1902
          %v2031 = vunpack.c.l.b16 %v1903
          %v2032 = vunpack.c.l.b16 %v1904
          %v2033 = vunpack.c.l.b16 %v1905
          %v2034 = vunpack.c.l.b16 %v1906
          %v2035 = vunpack.c.l.b16 %v1907
          %v2036 = vunpack.c.l.b16 %v1908
          %v2037 = vunpack.c.l.b16 %v1909
          %v2038 = vunpack.c.l.b16 %v1910
          %v2039 = vpack.c.b16 %v2024, %v2023
          %v2040 = vpack.c.b16 %v2026, %v2025
          %v2041 = vpack.c.b16 %v2028, %v2027
          %v2042 = vpack.c.b16 %v2030, %v2029
          %v2043 = vpack.c.b16 %v2032, %v2031
          %v2044 = vpack.c.b16 %v2034, %v2033
          %v2045 = vpack.c.b16 %v2036, %v2035
          %v2046 = vpack.c.b16 %v2038, %v2037
          %2055 = vmatprep.subr.bf16.mxu0 0
          %2056 = vmatpush1.bf16.msra.mxu0 %v2039
          %2057 = vmatprep.subr.bf16.mxu0 0
          %2058 = vmatpush1.bf16.msra.mxu0 %v2040
          %2059 = vmatprep.subr.bf16.mxu0 0
          %2060 = vmatpush1.bf16.msra.mxu0 %v2041
          %2061 = vmatprep.subr.bf16.mxu0 0
          %2062 = vmatpush1.bf16.msra.mxu0 %v2042
          %2063 = vmatprep.subr.bf16.mxu0 0
          %2064 = vmatpush1.bf16.msra.mxu0 %v2043
          %2065 = vmatprep.subr.bf16.mxu0 0
          %2066 = vmatpush1.bf16.msra.mxu0 %v2044
          %2067 = vmatprep.subr.bf16.mxu0 0
          %2068 = vmatpush1.bf16.msra.mxu0 %v2045
          %2069 = vmatprep.subr.bf16.mxu0 0
          %2070 = vmatpush1.bf16.msra.mxu0 %v2046
          %2071 = vmatprep.subr.bf16.mxu0 0
          %2072 = vmatpush1.bf16.msra.mxu0 0
          %2073 = vmatprep.subr.bf16.mxu0 0
          %2074 = vmatpush1.bf16.msra.mxu0 0
          %2075 = vmatprep.subr.bf16.mxu0 0
          %2076 = vmatpush1.bf16.msra.mxu0 0
          %2077 = vmatprep.subr.bf16.mxu0 0
          %2078 = vmatpush1.bf16.msra.mxu0 0
          %2079 = vmatprep.subr.bf16.mxu0 0
          %2080 = vmatpush1.bf16.msra.mxu0 0
          %2081 = vmatprep.subr.bf16.mxu0 0
          %2082 = vmatpush1.bf16.msra.mxu0 0
          %2083 = vmatprep.subr.bf16.mxu0 0
          %2084 = vmatpush1.bf16.msra.mxu0 0
          %2085 = vmatprep.subr.bf16.mxu0 0
          %2086 = vmatpush1.bf16.msra.mxu0 0
          %2087 = vmatprep.mubr.bf16.mxu0 0
          %2088 = vmatmul.mubr.bf16.gmra.mrb[0].mxu0 %v1975
          %v2089 = vpop.f32.mrb[0].mxu0
          %v2090 = vadd.f32 0.0, %v2089
          %v2091 = vpop.f32.mrb[0].mxu0
          %v2092 = vpop.f32.mrb[0].mxu0
          %v2093 = vadd.f32 0.0, %v2092
          %v2094 = vpop.f32.mrb[0].mxu0
          %2095 = vmatprep.mubr.bf16.mxu0 0
          %2096 = vmatmul.mubr.bf16.gmra.mrb[0].mxu0 %v1976
          %v2097 = vpop.f32.mrb[0].mxu0
          %v2098 = vadd.f32 0.0, %v2097
          %v2099 = vpop.f32.mrb[0].mxu0
          %v2100 = vpop.f32.mrb[0].mxu0
          %v2101 = vadd.f32 0.0, %v2100
          %v2102 = vpop.f32.mrb[0].mxu0
          %2103 = vmatprep.mubr.bf16.mxu0 0
          %2104 = vmatmul.mubr.bf16.gmra.mrb[0].mxu0 %v1977
          %v2105 = vpop.f32.mrb[0].mxu0
          %v2106 = vadd.f32 0.0, %v2105
          %v2107 = vpop.f32.mrb[0].mxu0
          %v2108 = vpop.f32.mrb[0].mxu0
          %v2109 = vadd.f32 0.0, %v2108
          %v2110 = vpop.f32.mrb[0].mxu0
          %2111 = vmatprep.mubr.bf16.mxu0 0
          %2112 = vmatmul.mubr.bf16.gmra.mrb[0].mxu0 %v1978
          %v2113 = vpop.f32.mrb[0].mxu0
          %v2114 = vadd.f32 0.0, %v2113
          %v2115 = vpop.f32.mrb[0].mxu0
          %v2116 = vpop.f32.mrb[0].mxu0
          %v2117 = vadd.f32 0.0, %v2116
          %v2118 = vpop.f32.mrb[0].mxu0
          %2119 = vmatprep.mubr.bf16.mxu0 0
          %2120 = vmatmul.mubr.bf16.gmra.mrb[0].mxu0 %v1979
          %v2121 = vpop.f32.mrb[0].mxu0
          %v2122 = vadd.f32 0.0, %v2121
          %v2123 = vpop.f32.mrb[0].mxu0
          %v2124 = vpop.f32.mrb[0].mxu0
          %v2125 = vadd.f32 0.0, %v2124
          %v2126 = vpop.f32.mrb[0].mxu0
          %2127 = vmatprep.mubr.bf16.mxu0 0
          %2128 = vmatmul.mubr.bf16.gmra.mrb[0].mxu0 %v1980
          %v2129 = vpop.f32.mrb[0].mxu0
          %v2130 = vadd.f32 0.0, %v2129
          %v2131 = vpop.f32.mrb[0].mxu0
          %v2132 = vpop.f32.mrb[0].mxu0
          %v2133 = vadd.f32 0.0, %v2132
          %v2134 = vpop.f32.mrb[0].mxu0
          %2135 = vmatprep.mubr.bf16.mxu0 0
          %2136 = vmatmul.mubr.bf16.gmra.mrb[0].mxu0 %v1981
          %v2137 = vpop.f32.mrb[0].mxu0
          %v2138 = vadd.f32 0.0, %v2137
          %v2139 = vpop.f32.mrb[0].mxu0
          %v2140 = vpop.f32.mrb[0].mxu0
          %v2141 = vadd.f32 0.0, %v2140
          %v2142 = vpop.f32.mrb[0].mxu0
          %2143 = vmatprep.mubr.bf16.mxu0 0
          %2144 = vmatmul.mubr.bf16.gmra.mrb[0].mxu0 %v1982
          %v2145 = vpop.f32.mrb[0].mxu0
          %v2146 = vadd.f32 0.0, %v2145
          %v2147 = vpop.f32.mrb[0].mxu0
          %v2148 = vpop.f32.mrb[0].mxu0
          %v2149 = vadd.f32 0.0, %v2148
          %v2150 = vpop.f32.mrb[0].mxu0
          %2151 = vmatprep.mubr.bf16.mxu0 0
          %2152 = vmatmul.mubr.bf16.gmra.mrb[0].mxu0 %v1983
          %v2153 = vpop.f32.mrb[0].mxu0
          %v2154 = vadd.f32 0.0, %v2153
          %v2155 = vpop.f32.mrb[0].mxu0
          %v2156 = vpop.f32.mrb[0].mxu0
          %v2157 = vadd.f32 0.0, %v2156
          %v2158 = vpop.f32.mrb[0].mxu0
          %2159 = vmatprep.mubr.bf16.mxu0 0
          %2160 = vmatmul.mubr.bf16.gmra.mrb[0].mxu0 %v1984
          %v2161 = vpop.f32.mrb[0].mxu0
          %v2162 = vadd.f32 0.0, %v2161
          %v2163 = vpop.f32.mrb[0].mxu0
          %v2164 = vpop.f32.mrb[0].mxu0
          %v2165 = vadd.f32 0.0, %v2164
          %v2166 = vpop.f32.mrb[0].mxu0
          %2167 = vmatprep.mubr.bf16.mxu0 0
          %2168 = vmatmul.mubr.bf16.gmra.mrb[0].mxu0 %v1985
          %v2169 = vpop.f32.mrb[0].mxu0
          %v2170 = vadd.f32 0.0, %v2169
          %v2171 = vpop.f32.mrb[0].mxu0
          %v2172 = vpop.f32.mrb[0].mxu0
          %v2173 = vadd.f32 0.0, %v2172
          %v2174 = vpop.f32.mrb[0].mxu0
          %2175 = vmatprep.mubr.bf16.mxu0 0
          %2176 = vmatmul.mubr.bf16.gmra.mrb[0].mxu0 %v1986
          %v2177 = vpop.f32.mrb[0].mxu0
          %v2178 = vadd.f32 0.0, %v2177
          %v2179 = vpop.f32.mrb[0].mxu0
          %v2180 = vpop.f32.mrb[0].mxu0
          %v2181 = vadd.f32 0.0, %v2180
          %v2182 = vpop.f32.mrb[0].mxu0
          %2183 = vmatprep.mubr.bf16.mxu0 0
          %2184 = vmatmul.mubr.bf16.gmra.mrb[0].mxu0 %v1987
          %v2185 = vpop.f32.mrb[0].mxu0
          %v2186 = vadd.f32 0.0, %v2185
          %v2187 = vpop.f32.mrb[0].mxu0
          %v2188 = vpop.f32.mrb[0].mxu0
          %v2189 = vadd.f32 0.0, %v2188
          %v2190 = vpop.f32.mrb[0].mxu0
          %2191 = vmatprep.mubr.bf16.mxu0 0
          %2192 = vmatmul.mubr.bf16.gmra.mrb[0].mxu0 %v1988
          %v2193 = vpop.f32.mrb[0].mxu0
          %v2194 = vadd.f32 0.0, %v2193
          %v2195 = vpop.f32.mrb[0].mxu0
          %v2196 = vpop.f32.mrb[0].mxu0
          %v2197 = vadd.f32 0.0, %v2196
          %v2198 = vpop.f32.mrb[0].mxu0
          %2199 = vmatprep.mubr.bf16.mxu0 0
          %2200 = vmatmul.mubr.bf16.gmra.mrb[0].mxu0 %v1989
          %v2201 = vpop.f32.mrb[0].mxu0
          %v2202 = vadd.f32 0.0, %v2201
          %v2203 = vpop.f32.mrb[0].mxu0
          %v2204 = vpop.f32.mrb[0].mxu0
          %v2205 = vadd.f32 0.0, %v2204
          %v2206 = vpop.f32.mrb[0].mxu0
          %2207 = vmatprep.mubr.bf16.mxu0 0
          %2208 = vmatmul.mubr.bf16.gmra.mrb[0].mxu0 %v1990
          %v2209 = vpop.f32.mrb[0].mxu0
          %v2210 = vadd.f32 0.0, %v2209
          %v2211 = vpop.f32.mrb[0].mxu0
          %v2212 = vpop.f32.mrb[0].mxu0
          %v2213 = vadd.f32 0.0, %v2212
          %v2214 = vpop.f32.mrb[0].mxu0
          %2215 = vdwg.mxu0
          %v2216 = vld [vmem:[#allocation3] sm:$0x1]
          %v2217 = vlaneseq
          %v2218 = vshrl.u32 %v2217, 7
          %v2219 = vsub.s32 0, %v2218
          %v2220 = vrot.slane %v2216, %v2219
          %v2221 = vmul.f32 %v2090, %v2220
          %v2222 = vmul.f32 %v2093, %v2220
          %v2223 = vmul.f32 %v2098, %v2220
          %v2224 = vmul.f32 %v2101, %v2220
          %v2225 = vmul.f32 %v2106, %v2220
          %v2226 = vmul.f32 %v2109, %v2220
          %v2227 = vmul.f32 %v2114, %v2220
          %v2228 = vmul.f32 %v2117, %v2220
          %v2229 = vmul.f32 %v2122, %v2220
          %v2230 = vmul.f32 %v2125, %v2220
          %v2231 = vmul.f32 %v2130, %v2220
          %v2232 = vmul.f32 %v2133, %v2220
          %v2233 = vmul.f32 %v2138, %v2220
          %v2234 = vmul.f32 %v2141, %v2220
          %v2235 = vmul.f32 %v2146, %v2220
          %v2236 = vmul.f32 %v2149, %v2220
          %v2237 = vmul.f32 %v2154, %v2220
          %v2238 = vmul.f32 %v2157, %v2220
          %v2239 = vmul.f32 %v2162, %v2220
          %v2240 = vmul.f32 %v2165, %v2220
          %v2241 = vmul.f32 %v2170, %v2220
          %v2242 = vmul.f32 %v2173, %v2220
          %v2243 = vmul.f32 %v2178, %v2220
          %v2244 = vmul.f32 %v2181, %v2220
          %v2245 = vmul.f32 %v2186, %v2220
          %v2246 = vmul.f32 %v2189, %v2220
          %v2247 = vmul.f32 %v2194, %v2220
          %v2248 = vmul.f32 %v2197, %v2220
          %v2249 = vmul.f32 %v2202, %v2220
          %v2250 = vmul.f32 %v2205, %v2220
          %v2251 = vmul.f32 %v2210, %v2220
          %v2252 = vmul.f32 %v2213, %v2220
          %v2253 = vld [vmem:[#allocation4] sm:$0x1]
          %v2254 = vlaneseq
          %v2255 = vshrl.u32 %v2254, 7
          %v2256 = vsub.s32 0, %v2255
          %v2257 = vrot.slane %v2253, %v2256
          %v2258 = vadd.f32 %v2221, %v2257
          %v2259 = vadd.f32 %v2222, %v2257
          %v2260 = vadd.f32 %v2223, %v2257
          %v2261 = vadd.f32 %v2224, %v2257
          %v2262 = vadd.f32 %v2225, %v2257
          %v2263 = vadd.f32 %v2226, %v2257
          %v2264 = vadd.f32 %v2227, %v2257
          %v2265 = vadd.f32 %v2228, %v2257
          %v2266 = vadd.f32 %v2229, %v2257
          %v2267 = vadd.f32 %v2230, %v2257
          %v2268 = vadd.f32 %v2231, %v2257
          %v2269 = vadd.f32 %v2232, %v2257
          %v2270 = vadd.f32 %v2233, %v2257
          %v2271 = vadd.f32 %v2234, %v2257
          %v2272 = vadd.f32 %v2235, %v2257
          %v2273 = vadd.f32 %v2236, %v2257
          %v2274 = vadd.f32 %v2237, %v2257
          %v2275 = vadd.f32 %v2238, %v2257
          %v2276 = vadd.f32 %v2239, %v2257
          %v2277 = vadd.f32 %v2240, %v2257
          %v2278 = vadd.f32 %v2241, %v2257
          %v2279 = vadd.f32 %v2242, %v2257
          %v2280 = vadd.f32 %v2243, %v2257
          %v2281 = vadd.f32 %v2244, %v2257
          %v2282 = vadd.f32 %v2245, %v2257
          %v2283 = vadd.f32 %v2246, %v2257
          %v2284 = vadd.f32 %v2247, %v2257
          %v2285 = vadd.f32 %v2248, %v2257
          %v2286 = vadd.f32 %v2249, %v2257
          %v2287 = vadd.f32 %v2250, %v2257
          %v2288 = vadd.f32 %v2251, %v2257
          %v2289 = vadd.f32 %v2252, %v2257
          %v2290 = vmax.f32 %v2258, 0.0
          %v2291 = vmax.f32 %v2259, 0.0
          %v2292 = vmax.f32 %v2260, 0.0
          %v2293 = vmax.f32 %v2261, 0.0
          %v2294 = vmax.f32 %v2262, 0.0
          %v2295 = vmax.f32 %v2263, 0.0
          %v2296 = vmax.f32 %v2264, 0.0
          %v2297 = vmax.f32 %v2265, 0.0
          %v2298 = vmax.f32 %v2266, 0.0
          %v2299 = vmax.f32 %v2267, 0.0
          %v2300 = vmax.f32 %v2268, 0.0
          %v2301 = vmax.f32 %v2269, 0.0
          %v2302 = vmax.f32 %v2270, 0.0
          %v2303 = vmax.f32 %v2271, 0.0
          %v2304 = vmax.f32 %v2272, 0.0
          %v2305 = vmax.f32 %v2273, 0.0
          %v2306 = vmax.f32 %v2274, 0.0
          %v2307 = vmax.f32 %v2275, 0.0
          %v2308 = vmax.f32 %v2276, 0.0
          %v2309 = vmax.f32 %v2277, 0.0
          %v2310 = vmax.f32 %v2278, 0.0
          %v2311 = vmax.f32 %v2279, 0.0
          %v2312 = vmax.f32 %v2280, 0.0
          %v2313 = vmax.f32 %v2281, 0.0
          %v2314 = vmax.f32 %v2282, 0.0
          %v2315 = vmax.f32 %v2283, 0.0
          %v2316 = vmax.f32 %v2284, 0.0
          %v2317 = vmax.f32 %v2285, 0.0
          %v2318 = vmax.f32 %v2286, 0.0
          %v2319 = vmax.f32 %v2287, 0.0
          %v2320 = vmax.f32 %v2288, 0.0
          %v2321 = vmax.f32 %v2289, 0.0
          %v2322 = vpack.c.bf16 %v2291, %v2290
          %v2323 = vpack.c.bf16 %v2293, %v2292
          %v2324 = vpack.c.bf16 %v2295, %v2294
          %v2325 = vpack.c.bf16 %v2297, %v2296
          %v2326 = vpack.c.bf16 %v2299, %v2298
          %v2327 = vpack.c.bf16 %v2301, %v2300
          %v2328 = vpack.c.bf16 %v2303, %v2302
          %v2329 = vpack.c.bf16 %v2305, %v2304
          %v2330 = vpack.c.bf16 %v2307, %v2306
          %v2331 = vpack.c.bf16 %v2309, %v2308
          %v2332 = vpack.c.bf16 %v2311, %v2310
          %v2333 = vpack.c.bf16 %v2313, %v2312
          %v2334 = vpack.c.bf16 %v2315, %v2314
          %v2335 = vpack.c.bf16 %v2317, %v2316
          %v2336 = vpack.c.bf16 %v2319, %v2318
          %v2337 = vpack.c.bf16 %v2321, %v2320
          %v2338 = vld [vmem:[#allocation10] sm:$0xf]
          %v2339 = vld [vmem:[#allocation10 + $0x4] sm:$0xf]
          %v2340 = vld [vmem:[#allocation10 + $0x8] sm:$0xf]
          %v2341 = vld [vmem:[#allocation10 + $0xc] sm:$0xf]
          %v2342 = vld [vmem:[#allocation10 + $0x10] sm:$0xf]
          %v2343 = vld [vmem:[#allocation10 + $0x14] sm:$0xf]
          %v2344 = vld [vmem:[#allocation10 + $0x18] sm:$0xf]
          %v2345 = vld [vmem:[#allocation10 + $0x1c] sm:$0xf]
          %v2346 = vld [vmem:[#allocation10 + $0x20] sm:$0xf]
          %v2347 = vld [vmem:[#allocation10 + $0x24] sm:$0xf]
          %v2348 = vld [vmem:[#allocation10 + $0x28] sm:$0xf]
          %v2349 = vld [vmem:[#allocation10 + $0x2c] sm:$0xf]
          %v2350 = vld [vmem:[#allocation10 + $0x30] sm:$0xf]
          %v2351 = vld [vmem:[#allocation10 + $0x34] sm:$0xf]
          %v2352 = vld [vmem:[#allocation10 + $0x38] sm:$0xf]
          %v2353 = vld [vmem:[#allocation10 + $0x3c] sm:$0xf]
          %v2370 = vunpack.c.l.b16 %v2338
          %v2371 = vunpack.c.l.b16 %v2339
          %v2372 = vunpack.c.l.b16 %v2340
          %v2373 = vunpack.c.l.b16 %v2341
          %v2374 = vunpack.c.l.b16 %v2342
          %v2375 = vunpack.c.l.b16 %v2343
          %v2376 = vunpack.c.l.b16 %v2344
          %v2377 = vunpack.c.l.b16 %v2345
          %v2378 = vunpack.c.l.b16 %v2346
          %v2379 = vunpack.c.l.b16 %v2347
          %v2380 = vunpack.c.l.b16 %v2348
          %v2381 = vunpack.c.l.b16 %v2349
          %v2382 = vunpack.c.l.b16 %v2350
          %v2383 = vunpack.c.l.b16 %v2351
          %v2384 = vunpack.c.l.b16 %v2352
          %v2385 = vunpack.c.l.b16 %v2353
          %v2386 = vpack.c.b16 %v2371, %v2370
          %v2387 = vpack.c.b16 %v2373, %v2372
          %v2388 = vpack.c.b16 %v2375, %v2374
          %v2389 = vpack.c.b16 %v2377, %v2376
          %v2390 = vpack.c.b16 %v2379, %v2378
          %v2391 = vpack.c.b16 %v2381, %v2380
          %v2392 = vpack.c.b16 %v2383, %v2382
          %v2393 = vpack.c.b16 %v2385, %v2384
          %2402 = vmatprep.subr.bf16.mxu0 0
          %2403 = vmatpush1.bf16.msra.mxu0 %v2386
          %2404 = vmatprep.subr.bf16.mxu0 0
          %2405 = vmatpush1.bf16.msra.mxu0 %v2387
          %2406 = vmatprep.subr.bf16.mxu0 0
          %2407 = vmatpush1.bf16.msra.mxu0 %v2388
          %2408 = vmatprep.subr.bf16.mxu0 0
          %2409 = vmatpush1.bf16.msra.mxu0 %v2389
          %2410 = vmatprep.subr.bf16.mxu0 0
          %2411 = vmatpush1.bf16.msra.mxu0 %v2390
          %2412 = vmatprep.subr.bf16.mxu0 0
          %2413 = vmatpush1.bf16.msra.mxu0 %v2391
          %2414 = vmatprep.subr.bf16.mxu0 0
          %2415 = vmatpush1.bf16.msra.mxu0 %v2392
          %2416 = vmatprep.subr.bf16.mxu0 0
          %2417 = vmatpush1.bf16.msra.mxu0 %v2393
          %2418 = vmatprep.subr.bf16.mxu0 0
          %2419 = vmatpush1.bf16.msra.mxu0 0
          %2420 = vmatprep.subr.bf16.mxu0 0
          %2421 = vmatpush1.bf16.msra.mxu0 0
          %2422 = vmatprep.subr.bf16.mxu0 0
          %2423 = vmatpush1.bf16.msra.mxu0 0
          %2424 = vmatprep.subr.bf16.mxu0 0
          %2425 = vmatpush1.bf16.msra.mxu0 0
          %2426 = vmatprep.subr.bf16.mxu0 0
          %2427 = vmatpush1.bf16.msra.mxu0 0
          %2428 = vmatprep.subr.bf16.mxu0 0
          %2429 = vmatpush1.bf16.msra.mxu0 0
          %2430 = vmatprep.subr.bf16.mxu0 0
          %2431 = vmatpush1.bf16.msra.mxu0 0
          %2432 = vmatprep.subr.bf16.mxu0 0
          %2433 = vmatpush1.bf16.msra.mxu0 0
          %2434 = vmatprep.mubr.bf16.mxu0 0
          %2435 = vmatmul.mubr.bf16.gmra.mrb[0].mxu0 %v2322
          %v2436 = vpop.f32.mrb[0].mxu0
          %v2437 = vadd.f32 0.0, %v2436
          %v2438 = vpop.f32.mrb[0].mxu0
          %v2439 = vpop.f32.mrb[0].mxu0
          %v2440 = vadd.f32 0.0, %v2439
          %v2441 = vpop.f32.mrb[0].mxu0
          %2442 = vmatprep.mubr.bf16.mxu0 0
          %2443 = vmatmul.mubr.bf16.gmra.mrb[0].mxu0 %v2323
          %v2444 = vpop.f32.mrb[0].mxu0
          %v2445 = vadd.f32 0.0, %v2444
          %v2446 = vpop.f32.mrb[0].mxu0
          %v2447 = vpop.f32.mrb[0].mxu0
          %v2448 = vadd.f32 0.0, %v2447
          %v2449 = vpop.f32.mrb[0].mxu0
          %2450 = vmatprep.mubr.bf16.mxu0 0
          %2451 = vmatmul.mubr.bf16.gmra.mrb[0].mxu0 %v2324
          %v2452 = vpop.f32.mrb[0].mxu0
          %v2453 = vadd.f32 0.0, %v2452
          %v2454 = vpop.f32.mrb[0].mxu0
          %v2455 = vpop.f32.mrb[0].mxu0
          %v2456 = vadd.f32 0.0, %v2455
          %v2457 = vpop.f32.mrb[0].mxu0
          %2458 = vmatprep.mubr.bf16.mxu0 0
          %2459 = vmatmul.mubr.bf16.gmra.mrb[0].mxu0 %v2325
          %v2460 = vpop.f32.mrb[0].mxu0
          %v2461 = vadd.f32 0.0, %v2460
          %v2462 = vpop.f32.mrb[0].mxu0
          %v2463 = vpop.f32.mrb[0].mxu0
          %v2464 = vadd.f32 0.0, %v2463
          %v2465 = vpop.f32.mrb[0].mxu0
          %2466 = vmatprep.mubr.bf16.mxu0 0
          %2467 = vmatmul.mubr.bf16.gmra.mrb[0].mxu0 %v2326
          %v2468 = vpop.f32.mrb[0].mxu0
          %v2469 = vadd.f32 0.0, %v2468
          %v2470 = vpop.f32.mrb[0].mxu0
          %v2471 = vpop.f32.mrb[0].mxu0
          %v2472 = vadd.f32 0.0, %v2471
          %v2473 = vpop.f32.mrb[0].mxu0
          %2474 = vmatprep.mubr.bf16.mxu0 0
          %2475 = vmatmul.mubr.bf16.gmra.mrb[0].mxu0 %v2327
          %v2476 = vpop.f32.mrb[0].mxu0
          %v2477 = vadd.f32 0.0, %v2476
          %v2478 = vpop.f32.mrb[0].mxu0
          %v2479 = vpop.f32.mrb[0].mxu0
          %v2480 = vadd.f32 0.0, %v2479
          %v2481 = vpop.f32.mrb[0].mxu0
          %2482 = vmatprep.mubr.bf16.mxu0 0
          %2483 = vmatmul.mubr.bf16.gmra.mrb[0].mxu0 %v2328
          %v2484 = vpop.f32.mrb[0].mxu0
          %v2485 = vadd.f32 0.0, %v2484
          %v2486 = vpop.f32.mrb[0].mxu0
          %v2487 = vpop.f32.mrb[0].mxu0
          %v2488 = vadd.f32 0.0, %v2487
          %v2489 = vpop.f32.mrb[0].mxu0
          %2490 = vmatprep.mubr.bf16.mxu0 0
          %2491 = vmatmul.mubr.bf16.gmra.mrb[0].mxu0 %v2329
          %v2492 = vpop.f32.mrb[0].mxu0
          %v2493 = vadd.f32 0.0, %v2492
          %v2494 = vpop.f32.mrb[0].mxu0
          %v2495 = vpop.f32.mrb[0].mxu0
          %v2496 = vadd.f32 0.0, %v2495
          %v2497 = vpop.f32.mrb[0].mxu0
          %2498 = vmatprep.mubr.bf16.mxu0 0
          %2499 = vmatmul.mubr.bf16.gmra.mrb[0].mxu0 %v2330
          %v2500 = vpop.f32.mrb[0].mxu0
          %v2501 = vadd.f32 0.0, %v2500
          %v2502 = vpop.f32.mrb[0].mxu0
          %v2503 = vpop.f32.mrb[0].mxu0
          %v2504 = vadd.f32 0.0, %v2503
          %v2505 = vpop.f32.mrb[0].mxu0
          %2506 = vmatprep.mubr.bf16.mxu0 0
          %2507 = vmatmul.mubr.bf16.gmra.mrb[0].mxu0 %v2331
          %v2508 = vpop.f32.mrb[0].mxu0
          %v2509 = vadd.f32 0.0, %v2508
          %v2510 = vpop.f32.mrb[0].mxu0
          %v2511 = vpop.f32.mrb[0].mxu0
          %v2512 = vadd.f32 0.0, %v2511
          %v2513 = vpop.f32.mrb[0].mxu0
          %2514 = vmatprep.mubr.bf16.mxu0 0
          %2515 = vmatmul.mubr.bf16.gmra.mrb[0].mxu0 %v2332
          %v2516 = vpop.f32.mrb[0].mxu0
          %v2517 = vadd.f32 0.0, %v2516
          %v2518 = vpop.f32.mrb[0].mxu0
          %v2519 = vpop.f32.mrb[0].mxu0
          %v2520 = vadd.f32 0.0, %v2519
          %v2521 = vpop.f32.mrb[0].mxu0
          %2522 = vmatprep.mubr.bf16.mxu0 0
          %2523 = vmatmul.mubr.bf16.gmra.mrb[0].mxu0 %v2333
          %v2524 = vpop.f32.mrb[0].mxu0
          %v2525 = vadd.f32 0.0, %v2524
          %v2526 = vpop.f32.mrb[0].mxu0
          %v2527 = vpop.f32.mrb[0].mxu0
          %v2528 = vadd.f32 0.0, %v2527
          %v2529 = vpop.f32.mrb[0].mxu0
          %2530 = vmatprep.mubr.bf16.mxu0 0
          %2531 = vmatmul.mubr.bf16.gmra.mrb[0].mxu0 %v2334
          %v2532 = vpop.f32.mrb[0].mxu0
          %v2533 = vadd.f32 0.0, %v2532
          %v2534 = vpop.f32.mrb[0].mxu0
          %v2535 = vpop.f32.mrb[0].mxu0
          %v2536 = vadd.f32 0.0, %v2535
          %v2537 = vpop.f32.mrb[0].mxu0
          %2538 = vmatprep.mubr.bf16.mxu0 0
          %2539 = vmatmul.mubr.bf16.gmra.mrb[0].mxu0 %v2335
          %v2540 = vpop.f32.mrb[0].mxu0
          %v2541 = vadd.f32 0.0, %v2540
          %v2542 = vpop.f32.mrb[0].mxu0
          %v2543 = vpop.f32.mrb[0].mxu0
          %v2544 = vadd.f32 0.0, %v2543
          %v2545 = vpop.f32.mrb[0].mxu0
          %2546 = vmatprep.mubr.bf16.mxu0 0
          %2547 = vmatmul.mubr.bf16.gmra.mrb[0].mxu0 %v2336
          %v2548 = vpop.f32.mrb[0].mxu0
          %v2549 = vadd.f32 0.0, %v2548
          %v2550 = vpop.f32.mrb[0].mxu0
          %v2551 = vpop.f32.mrb[0].mxu0
          %v2552 = vadd.f32 0.0, %v2551
          %v2553 = vpop.f32.mrb[0].mxu0
          %2554 = vmatprep.mubr.bf16.mxu0 0
          %2555 = vmatmul.mubr.bf16.gmra.mrb[0].mxu0 %v2337
          %v2556 = vpop.f32.mrb[0].mxu0
          %v2557 = vadd.f32 0.0, %v2556
          %v2558 = vpop.f32.mrb[0].mxu0
          %v2559 = vpop.f32.mrb[0].mxu0
          %v2560 = vadd.f32 0.0, %v2559
          %v2561 = vpop.f32.mrb[0].mxu0
          %2562 = vdwg.mxu0
          %v2563 = vld [vmem:[#allocation3 + $0x1] sm:$0x1]
          %v2564 = vlaneseq
          %v2565 = vshrl.u32 %v2564, 7
          %v2566 = vsub.s32 0, %v2565
          %v2567 = vrot.slane %v2563, %v2566
          %v2568 = vmul.f32 %v2437, %v2567
          %v2569 = vmul.f32 %v2440, %v2567
          %v2570 = vmul.f32 %v2445, %v2567
          %v2571 = vmul.f32 %v2448, %v2567
          %v2572 = vmul.f32 %v2453, %v2567
          %v2573 = vmul.f32 %v2456, %v2567
          %v2574 = vmul.f32 %v2461, %v2567
          %v2575 = vmul.f32 %v2464, %v2567
          %v2576 = vmul.f32 %v2469, %v2567
          %v2577 = vmul.f32 %v2472, %v2567
          %v2578 = vmul.f32 %v2477, %v2567
          %v2579 = vmul.f32 %v2480, %v2567
          %v2580 = vmul.f32 %v2485, %v2567
          %v2581 = vmul.f32 %v2488, %v2567
          %v2582 = vmul.f32 %v2493, %v2567
          %v2583 = vmul.f32 %v2496, %v2567
          %v2584 = vmul.f32 %v2501, %v2567
          %v2585 = vmul.f32 %v2504, %v2567
          %v2586 = vmul.f32 %v2509, %v2567
          %v2587 = vmul.f32 %v2512, %v2567
          %v2588 = vmul.f32 %v2517, %v2567
          %v2589 = vmul.f32 %v2520, %v2567
          %v2590 = vmul.f32 %v2525, %v2567
          %v2591 = vmul.f32 %v2528, %v2567
          %v2592 = vmul.f32 %v2533, %v2567
          %v2593 = vmul.f32 %v2536, %v2567
          %v2594 = vmul.f32 %v2541, %v2567
          %v2595 = vmul.f32 %v2544, %v2567
          %v2596 = vmul.f32 %v2549, %v2567
          %v2597 = vmul.f32 %v2552, %v2567
          %v2598 = vmul.f32 %v2557, %v2567
          %v2599 = vmul.f32 %v2560, %v2567
          %v2600 = vld [vmem:[#allocation4 + $0x1] sm:$0x1]
          %v2601 = vlaneseq
          %v2602 = vshrl.u32 %v2601, 7
          %v2603 = vsub.s32 0, %v2602
          %v2604 = vrot.slane %v2600, %v2603
          %v2605 = vadd.f32 %v2568, %v2604
          %v2606 = vadd.f32 %v2569, %v2604
          %v2607 = vadd.f32 %v2570, %v2604
          %v2608 = vadd.f32 %v2571, %v2604
          %v2609 = vadd.f32 %v2572, %v2604
          %v2610 = vadd.f32 %v2573, %v2604
          %v2611 = vadd.f32 %v2574, %v2604
          %v2612 = vadd.f32 %v2575, %v2604
          %v2613 = vadd.f32 %v2576, %v2604
          %v2614 = vadd.f32 %v2577, %v2604
          %v2615 = vadd.f32 %v2578, %v2604
          %v2616 = vadd.f32 %v2579, %v2604
          %v2617 = vadd.f32 %v2580, %v2604
          %v2618 = vadd.f32 %v2581, %v2604
          %v2619 = vadd.f32 %v2582, %v2604
          %v2620 = vadd.f32 %v2583, %v2604
          %v2621 = vadd.f32 %v2584, %v2604
          %v2622 = vadd.f32 %v2585, %v2604
          %v2623 = vadd.f32 %v2586, %v2604
          %v2624 = vadd.f32 %v2587, %v2604
          %v2625 = vadd.f32 %v2588, %v2604
          %v2626 = vadd.f32 %v2589, %v2604
          %v2627 = vadd.f32 %v2590, %v2604
          %v2628 = vadd.f32 %v2591, %v2604
          %v2629 = vadd.f32 %v2592, %v2604
          %v2630 = vadd.f32 %v2593, %v2604
          %v2631 = vadd.f32 %v2594, %v2604
          %v2632 = vadd.f32 %v2595, %v2604
          %v2633 = vadd.f32 %v2596, %v2604
          %v2634 = vadd.f32 %v2597, %v2604
          %v2635 = vadd.f32 %v2598, %v2604
          %v2636 = vadd.f32 %v2599, %v2604
          %v2637 = vmax.f32 %v2605, 0.0
          %v2638 = vmax.f32 %v2606, 0.0
          %v2639 = vmax.f32 %v2607, 0.0
          %v2640 = vmax.f32 %v2608, 0.0
          %v2641 = vmax.f32 %v2609, 0.0
          %v2642 = vmax.f32 %v2610, 0.0
          %v2643 = vmax.f32 %v2611, 0.0
          %v2644 = vmax.f32 %v2612, 0.0
          %v2645 = vmax.f32 %v2613, 0.0
          %v2646 = vmax.f32 %v2614, 0.0
          %v2647 = vmax.f32 %v2615, 0.0
          %v2648 = vmax.f32 %v2616, 0.0
          %v2649 = vmax.f32 %v2617, 0.0
          %v2650 = vmax.f32 %v2618, 0.0
          %v2651 = vmax.f32 %v2619, 0.0
          %v2652 = vmax.f32 %v2620, 0.0
          %v2653 = vmax.f32 %v2621, 0.0
          %v2654 = vmax.f32 %v2622, 0.0
          %v2655 = vmax.f32 %v2623, 0.0
          %v2656 = vmax.f32 %v2624, 0.0
          %v2657 = vmax.f32 %v2625, 0.0
          %v2658 = vmax.f32 %v2626, 0.0
          %v2659 = vmax.f32 %v2627, 0.0
          %v2660 = vmax.f32 %v2628, 0.0
          %v2661 = vmax.f32 %v2629, 0.0
          %v2662 = vmax.f32 %v2630, 0.0
          %v2663 = vmax.f32 %v2631, 0.0
          %v2664 = vmax.f32 %v2632, 0.0
          %v2665 = vmax.f32 %v2633, 0.0
          %v2666 = vmax.f32 %v2634, 0.0
          %v2667 = vmax.f32 %v2635, 0.0
          %v2668 = vmax.f32 %v2636, 0.0
          %v2669 = vld [vmem:[#allocation2] sm:$0x1]
          %v2670 = vadd.f32 %v2637, %v2638
          %v2671 = vadd.f32 %v2670, %v2639
          %v2672 = vadd.f32 %v2671, %v2640
          %v2673 = vadd.f32 %v2672, %v2641
          %v2674 = vadd.f32 %v2673, %v2642
          %v2675 = vadd.f32 %v2674, %v2643
          %v2676 = vadd.f32 %v2675, %v2644
          %v2677 = vadd.f32 %v2676, %v2645
          %v2678 = vadd.f32 %v2677, %v2646
          %v2679 = vadd.f32 %v2678, %v2647
          %v2680 = vadd.f32 %v2679, %v2648
          %v2681 = vadd.f32 %v2680, %v2649
          %v2682 = vadd.f32 %v2681, %v2650
          %v2683 = vadd.f32 %v2682, %v2651
          %v2684 = vadd.f32 %v2683, %v2652
          %v2685 = vadd.f32 %v2684, %v2653
          %v2686 = vadd.f32 %v2685, %v2654
          %v2687 = vadd.f32 %v2686, %v2655
          %v2688 = vadd.f32 %v2687, %v2656
          %v2689 = vadd.f32 %v2688, %v2657
          %v2690 = vadd.f32 %v2689, %v2658
          %v2691 = vadd.f32 %v2690, %v2659
          %v2692 = vadd.f32 %v2691, %v2660
          %v2693 = vadd.f32 %v2692, %v2661
          %v2694 = vadd.f32 %v2693, %v2662
          %v2695 = vadd.f32 %v2694, %v2663
          %v2696 = vadd.f32 %v2695, %v2664
          %v2697 = vadd.f32 %v2696, %v2665
          %v2698 = vadd.f32 %v2697, %v2666
          %v2699 = vadd.f32 %v2698, %v2667
          %v2700 = vadd.f32 %v2699, %v2668
          %v2701 = vrot.slane %v2700, 4
          %v2702 = vadd.f32 %v2700, %v2701
          %v2703 = vrot.slane %v2702, 2
          %v2704 = vadd.f32 %v2702, %v2703
          %v2705 = vrot.slane %v2704, 1
          %v2706 = vadd.f32 %v2704, %v2705
          %v2707 = vadd.f32 %v2669, %v2706
          %2708 = vst [vmem:[#allocation2] sm:$0x1] %v2707
          %v2709 = vld [vmem:[#allocation2 + $0x1] sm:$0x1]
          %v2710 = vmul.f32 %v2637, %v2637
          %v2711 = vmul.f32 %v2638, %v2638
          %v2712 = vmul.f32 %v2639, %v2639
          %v2713 = vmul.f32 %v2640, %v2640
          %v2714 = vmul.f32 %v2641, %v2641
          %v2715 = vmul.f32 %v2642, %v2642
          %v2716 = vmul.f32 %v2643, %v2643
          %v2717 = vmul.f32 %v2644, %v2644
          %v2718 = vmul.f32 %v2645, %v2645
          %v2719 = vmul.f32 %v2646, %v2646
          %v2720 = vmul.f32 %v2647, %v2647
          %v2721 = vmul.f32 %v2648, %v2648
          %v2722 = vmul.f32 %v2649, %v2649
          %v2723 = vmul.f32 %v2650, %v2650
          %v2724 = vmul.f32 %v2651, %v2651
          %v2725 = vmul.f32 %v2652, %v2652
          %v2726 = vmul.f32 %v2653, %v2653
          %v2727 = vmul.f32 %v2654, %v2654
          %v2728 = vmul.f32 %v2655, %v2655
          %v2729 = vmul.f32 %v2656, %v2656
          %v2730 = vmul.f32 %v2657, %v2657
          %v2731 = vmul.f32 %v2658, %v2658
          %v2732 = vmul.f32 %v2659, %v2659
          %v2733 = vmul.f32 %v2660, %v2660
          %v2734 = vmul.f32 %v2661, %v2661
          %v2735 = vmul.f32 %v2662, %v2662
          %v2736 = vmul.f32 %v2663, %v2663
          %v2737 = vmul.f32 %v2664, %v2664
          %v2738 = vmul.f32 %v2665, %v2665
          %v2739 = vmul.f32 %v2666, %v2666
          %v2740 = vmul.f32 %v2667, %v2667
          %v2741 = vmul.f32 %v2668, %v2668
          %v2742 = vadd.f32 %v2710, %v2711
          %v2743 = vadd.f32 %v2742, %v2712
          %v2744 = vadd.f32 %v2743, %v2713
          %v2745 = vadd.f32 %v2744, %v2714
          %v2746 = vadd.f32 %v2745, %v2715
          %v2747 = vadd.f32 %v2746, %v2716
          %v2748 = vadd.f32 %v2747, %v2717
          %v2749 = vadd.f32 %v2748, %v2718
          %v2750 = vadd.f32 %v2749, %v2719
          %v2751 = vadd.f32 %v2750, %v2720
          %v2752 = vadd.f32 %v2751, %v2721
          %v2753 = vadd.f32 %v2752, %v2722
          %v2754 = vadd.f32 %v2753, %v2723
          %v2755 = vadd.f32 %v2754, %v2724
          %v2756 = vadd.f32 %v2755, %v2725
          %v2757 = vadd.f32 %v2756, %v2726
          %v2758 = vadd.f32 %v2757, %v2727
          %v2759 = vadd.f32 %v2758, %v2728
          %v2760 = vadd.f32 %v2759, %v2729
          %v2761 = vadd.f32 %v2760, %v2730
          %v2762 = vadd.f32 %v2761, %v2731
          %v2763 = vadd.f32 %v2762, %v2732
          %v2764 = vadd.f32 %v2763, %v2733
          %v2765 = vadd.f32 %v2764, %v2734
          %v2766 = vadd.f32 %v2765, %v2735
          %v2767 = vadd.f32 %v2766, %v2736
          %v2768 = vadd.f32 %v2767, %v2737
          %v2769 = vadd.f32 %v2768, %v2738
          %v2770 = vadd.f32 %v2769, %v2739
          %v2771 = vadd.f32 %v2770, %v2740
          %v2772 = vadd.f32 %v2771, %v2741
          %v2773 = vrot.slane %v2772, 4
          %v2774 = vadd.f32 %v2772, %v2773
          %v2775 = vrot.slane %v2774, 2
          %v2776 = vadd.f32 %v2774, %v2775
          %v2777 = vrot.slane %v2776, 1
          %v2778 = vadd.f32 %v2776, %v2777
          %v2779 = vadd.f32 %v2709, %v2778
          %2780 = vst [vmem:[#allocation2 + $0x1] sm:$0x1] %v2779
          %p2781 = scmp.eq.s32.totalorder %s30, 1
          // Predicated region
          $region89: #{tpu_custom_call.1} parent=87 // pred_check
            %p2782 = pneg %p2781
          $region90: #{tpu_custom_call.1} parent=87 // pred_check_branch
            %2784 = sbr.rel (%p2782) target = $region92
          $region91: #{tpu_custom_call.1} parent=87 // pred_region
            %v2785 = vld [vmem:[#allocation2] sm:$0xff]
            %v2786 = vld [vmem:[#allocation13] sm:$0xff]
            %v2787 = vld [vmem:[#allocation13 + $0x8] sm:$0xff]
            %v2788 = vld [vmem:[#allocation13 + $0x10] sm:$0xff]
            %v2789 = vld [vmem:[#allocation13 + $0x18] sm:$0xff]
            %v2790 = vld [vmem:[#allocation13 + $0x20] sm:$0xff]
            %v2791 = vld [vmem:[#allocation13 + $0x28] sm:$0xff]
            %v2792 = vld [vmem:[#allocation13 + $0x30] sm:$0xff]
            %v2793 = vld [vmem:[#allocation13 + $0x38] sm:$0xff]
            %v2794 = vld [vmem:[#allocation13 + $0x40] sm:$0xff]
            %v2795 = vld [vmem:[#allocation13 + $0x48] sm:$0xff]
            %v2796 = vld [vmem:[#allocation13 + $0x50] sm:$0xff]
            %v2797 = vld [vmem:[#allocation13 + $0x58] sm:$0xff]
            %v2798 = vld [vmem:[#allocation13 + $0x60] sm:$0xff]
            %v2799 = vld [vmem:[#allocation13 + $0x68] sm:$0xff]
            %v2800 = vld [vmem:[#allocation13 + $0x70] sm:$0xff]
            %v2801 = vld [vmem:[#allocation13 + $0x78] sm:$0xff]
            %2802 = vmatprep.subr.mxu0 0.0
            %2803 = vmatpush1.msra.mxu0 %v2786
            %2804 = vmatprep.subr.mxu0 0.0
            %2805 = vmatpush1.msra.mxu0 %v2787
            %2806 = vmatprep.subr.mxu0 0.0
            %2807 = vmatpush1.msra.mxu0 %v2788
            %2808 = vmatprep.subr.mxu0 0.0
            %2809 = vmatpush1.msra.mxu0 %v2789
            %2810 = vmatprep.subr.mxu0 0.0
            %2811 = vmatpush1.msra.mxu0 %v2790
            %2812 = vmatprep.subr.mxu0 0.0
            %2813 = vmatpush1.msra.mxu0 %v2791
            %2814 = vmatprep.subr.mxu0 0.0
            %2815 = vmatpush1.msra.mxu0 %v2792
            %2816 = vmatprep.subr.mxu0 0.0
            %2817 = vmatpush1.msra.mxu0 %v2793
            %2818 = vmatprep.subr.mxu0 0.0
            %2819 = vmatpush1.msra.mxu0 %v2794
            %2820 = vmatprep.subr.mxu0 0.0
            %2821 = vmatpush1.msra.mxu0 %v2795
            %2822 = vmatprep.subr.mxu0 0.0
            %2823 = vmatpush1.msra.mxu0 %v2796
            %2824 = vmatprep.subr.mxu0 0.0
            %2825 = vmatpush1.msra.mxu0 %v2797
            %2826 = vmatprep.subr.mxu0 0.0
            %2827 = vmatpush1.msra.mxu0 %v2798
            %2828 = vmatprep.subr.mxu0 0.0
            %2829 = vmatpush1.msra.mxu0 %v2799
            %2830 = vmatprep.subr.mxu0 0.0
            %2831 = vmatpush1.msra.mxu0 %v2800
            %2832 = vmatprep.subr.mxu0 0.0
            %2833 = vmatpush1.msra.mxu0 %v2801
            %2834 = vmatprep.subr.mxu0 0.0
            %2835 = vmatpush1.msra.mxu0 0.0
            %2836 = vmatprep.subr.mxu0 0.0
            %2837 = vmatpush1.msra.mxu0 0.0
            %2838 = vmatprep.subr.mxu0 0.0
            %2839 = vmatpush1.msra.mxu0 0.0
            %2840 = vmatprep.subr.mxu0 0.0
            %2841 = vmatpush1.msra.mxu0 0.0
            %2842 = vmatprep.subr.mxu0 0.0
            %2843 = vmatpush1.msra.mxu0 0.0
            %2844 = vmatprep.subr.mxu0 0.0
            %2845 = vmatpush1.msra.mxu0 0.0
            %2846 = vmatprep.subr.mxu0 0.0
            %2847 = vmatpush1.msra.mxu0 0.0
            %2848 = vmatprep.subr.mxu0 0.0
            %2849 = vmatpush1.msra.mxu0 0.0
            %2850 = vmatprep.subr.mxu0 0.0
            %2851 = vmatpush1.msra.mxu0 0.0
            %2852 = vmatprep.subr.mxu0 0.0
            %2853 = vmatpush1.msra.mxu0 0.0
            %2854 = vmatprep.subr.mxu0 0.0
            %2855 = vmatpush1.msra.mxu0 0.0
            %2856 = vmatprep.subr.mxu0 0.0
            %2857 = vmatpush1.msra.mxu0 0.0
            %2858 = vmatprep.subr.mxu0 0.0
            %2859 = vmatpush1.msra.mxu0 0.0
            %2860 = vmatprep.subr.mxu0 0.0
            %2861 = vmatpush1.msra.mxu0 0.0
            %2862 = vmatprep.subr.mxu0 0.0
            %2863 = vmatpush1.msra.mxu0 0.0
            %2864 = vmatprep.subr.mxu0 0.0
            %2865 = vmatpush1.msra.mxu0 0.0
            %2866 = vmatprep.mubr.f32.mxu0 0.0
            %2867 = vmatmul.mubr.f32.gmra.mrb[0].mxu0 %v2785
            %v2868 = vpop.f32.mrb[0].mxu0
            %v2869 = vadd.f32 0.0, %v2868
            %v2870 = vpop.f32.mrb[0].mxu0
            %2871 = vdwg.mxu0
            %v2872 = vmul.f32 %v2869, 0.00048828125
            %v2873 = vmul.f32 %v2872, %v2872
            %v2875 = vrot.slane %v2873, 7
            %v2877 = vsub.f32 %v2872, %v2875
            %v2878 = vmax.f32 %v2877, 0.0
            %v2879 = vld [vmem:[%s5 + $0x4] sm:$0x1]
            %v2880 = vld [vmem:[%s5 + $0x5] sm:$0x1]
            %v2881 = vadd.f32 %v2878, 1e-05
            %v2882 = vrsqrt.pop %v2881
            %v2884 = vrot.slane %v2882, 1
            %v2886 = vmul.f32 %v2879, %v2884
            %2887 = vst [vmem:[#allocation3 + $0x2] sm:$0x1] %v2886
            %v2888 = vmul.f32 %v2872, %v2886
            %v2889 = vsub.f32 %v2880, %v2888
            %2890 = vst [vmem:[#allocation4 + $0x2] sm:$0x1] %v2889
          $region92: #{tpu_custom_call.1} parent=87 // pred_fallthru
            _
        $region88: #{tpu_custom_call.1} parent=43 // pred_fallthru
          _
        %p2891 = scmp.eq.s32.totalorder %s29, 3
        // Predicated region
        $region93: #{tpu_custom_call.1} parent=43 // pred_check
          %p2892 = pneg %p2891
        $region94: #{tpu_custom_call.1} parent=43 // pred_check_branch
          %2894 = sbr.rel (%p2892) target = $region96
        $region95: #{tpu_custom_call.1} parent=43 // pred_region
          %v2895 = vld [vmem:[%s299] sm:$0xf]
          %v2896 = vld [vmem:[%s299 + $0x4] sm:$0xf]
          %v2897 = vld [vmem:[%s299 + $0x8] sm:$0xf]
          %v2898 = vld [vmem:[%s299 + $0xc] sm:$0xf]
          %v2899 = vld [vmem:[%s299 + $0x10] sm:$0xf]
          %v2900 = vld [vmem:[%s299 + $0x14] sm:$0xf]
          %v2901 = vld [vmem:[%s299 + $0x18] sm:$0xf]
          %v2902 = vld [vmem:[%s299 + $0x1c] sm:$0xf]
          %v2903 = vld [vmem:[%s299 + $0x20] sm:$0xf]
          %v2904 = vld [vmem:[%s299 + $0x24] sm:$0xf]
          %v2905 = vld [vmem:[%s299 + $0x28] sm:$0xf]
          %v2906 = vld [vmem:[%s299 + $0x2c] sm:$0xf]
          %v2907 = vld [vmem:[%s299 + $0x30] sm:$0xf]
          %v2908 = vld [vmem:[%s299 + $0x34] sm:$0xf]
          %v2909 = vld [vmem:[%s299 + $0x38] sm:$0xf]
          %v2910 = vld [vmem:[%s299 + $0x3c] sm:$0xf]
          %v2911 = vld [vmem:[%s299 + $0x40] sm:$0xf]
          %v2912 = vld [vmem:[%s299 + $0x44] sm:$0xf]
          %v2913 = vld [vmem:[%s299 + $0x48] sm:$0xf]
          %v2914 = vld [vmem:[%s299 + $0x4c] sm:$0xf]
          %v2915 = vld [vmem:[%s299 + $0x50] sm:$0xf]
          %v2916 = vld [vmem:[%s299 + $0x54] sm:$0xf]
          %v2917 = vld [vmem:[%s299 + $0x58] sm:$0xf]
          %v2918 = vld [vmem:[%s299 + $0x5c] sm:$0xf]
          %v2919 = vld [vmem:[%s299 + $0x60] sm:$0xf]
          %v2920 = vld [vmem:[%s299 + $0x64] sm:$0xf]
          %v2921 = vld [vmem:[%s299 + $0x68] sm:$0xf]
          %v2922 = vld [vmem:[%s299 + $0x6c] sm:$0xf]
          %v2923 = vld [vmem:[%s299 + $0x70] sm:$0xf]
          %v2924 = vld [vmem:[%s299 + $0x74] sm:$0xf]
          %v2925 = vld [vmem:[%s299 + $0x78] sm:$0xf]
          %v2926 = vld [vmem:[%s299 + $0x7c] sm:$0xf]
          %v2927 = vld [vmem:[#allocation8] sm:$0xf]
          %v2928 = vld [vmem:[#allocation8 + $0x4] sm:$0xf]
          %v2929 = vld [vmem:[#allocation8 + $0x8] sm:$0xf]
          %v2930 = vld [vmem:[#allocation8 + $0xc] sm:$0xf]
          %v2931 = vld [vmem:[#allocation8 + $0x10] sm:$0xf]
          %v2932 = vld [vmem:[#allocation8 + $0x14] sm:$0xf]
          %v2933 = vld [vmem:[#allocation8 + $0x18] sm:$0xf]
          %v2934 = vld [vmem:[#allocation8 + $0x1c] sm:$0xf]
          %v2935 = vld [vmem:[#allocation8 + $0x20] sm:$0xf]
          %v2936 = vld [vmem:[#allocation8 + $0x24] sm:$0xf]
          %v2937 = vld [vmem:[#allocation8 + $0x28] sm:$0xf]
          %v2938 = vld [vmem:[#allocation8 + $0x2c] sm:$0xf]
          %v2939 = vld [vmem:[#allocation8 + $0x30] sm:$0xf]
          %v2940 = vld [vmem:[#allocation8 + $0x34] sm:$0xf]
          %v2941 = vld [vmem:[#allocation8 + $0x38] sm:$0xf]
          %v2942 = vld [vmem:[#allocation8 + $0x3c] sm:$0xf]
          %v2975 = vunpack.c.l.b16 %v2895
          %v2976 = vunpack.c.l.b16 %v2896
          %v2977 = vunpack.c.l.b16 %v2897
          %v2978 = vunpack.c.l.b16 %v2898
          %v2979 = vunpack.c.l.b16 %v2899
          %v2980 = vunpack.c.l.b16 %v2900
          %v2981 = vunpack.c.l.b16 %v2901
          %v2982 = vunpack.c.l.b16 %v2902
          %v2983 = vunpack.c.l.b16 %v2903
          %v2984 = vunpack.c.l.b16 %v2904
          %v2985 = vunpack.c.l.b16 %v2905
          %v2986 = vunpack.c.l.b16 %v2906
          %v2987 = vunpack.c.l.b16 %v2907
          %v2988 = vunpack.c.l.b16 %v2908
          %v2989 = vunpack.c.l.b16 %v2909
          %v2990 = vunpack.c.l.b16 %v2910
          %v2991 = vunpack.c.l.b16 %v2911
          %v2992 = vunpack.c.l.b16 %v2912
          %v2993 = vunpack.c.l.b16 %v2913
          %v2994 = vunpack.c.l.b16 %v2914
          %v2995 = vunpack.c.l.b16 %v2915
          %v2996 = vunpack.c.l.b16 %v2916
          %v2997 = vunpack.c.l.b16 %v2917
          %v2998 = vunpack.c.l.b16 %v2918
          %v2999 = vunpack.c.l.b16 %v2919
          %v3000 = vunpack.c.l.b16 %v2920
          %v3001 = vunpack.c.l.b16 %v2921
          %v3002 = vunpack.c.l.b16 %v2922
          %v3003 = vunpack.c.l.b16 %v2923
          %v3004 = vunpack.c.l.b16 %v2924
          %v3005 = vunpack.c.l.b16 %v2925
          %v3006 = vunpack.c.l.b16 %v2926
          %v3007 = vpack.c.b16 %v2976, %v2975
          %v3008 = vpack.c.b16 %v2978, %v2977
          %v3009 = vpack.c.b16 %v2980, %v2979
          %v3010 = vpack.c.b16 %v2982, %v2981
          %v3011 = vpack.c.b16 %v2984, %v2983
          %v3012 = vpack.c.b16 %v2986, %v2985
          %v3013 = vpack.c.b16 %v2988, %v2987
          %v3014 = vpack.c.b16 %v2990, %v2989
          %v3015 = vpack.c.b16 %v2992, %v2991
          %v3016 = vpack.c.b16 %v2994, %v2993
          %v3017 = vpack.c.b16 %v2996, %v2995
          %v3018 = vpack.c.b16 %v2998, %v2997
          %v3019 = vpack.c.b16 %v3000, %v2999
          %v3020 = vpack.c.b16 %v3002, %v3001
          %v3021 = vpack.c.b16 %v3004, %v3003
          %v3022 = vpack.c.b16 %v3006, %v3005
          %v3055 = vunpack.c.l.b16 %v2927
          %v3056 = vunpack.c.l.b16 %v2928
          %v3057 = vunpack.c.l.b16 %v2929
          %v3058 = vunpack.c.l.b16 %v2930
          %v3059 = vunpack.c.l.b16 %v2931
          %v3060 = vunpack.c.l.b16 %v2932
          %v3061 = vunpack.c.l.b16 %v2933
          %v3062 = vunpack.c.l.b16 %v2934
          %v3063 = vunpack.c.l.b16 %v2935
          %v3064 = vunpack.c.l.b16 %v2936
          %v3065 = vunpack.c.l.b16 %v2937
          %v3066 = vunpack.c.l.b16 %v2938
          %v3067 = vunpack.c.l.b16 %v2939
          %v3068 = vunpack.c.l.b16 %v2940
          %v3069 = vunpack.c.l.b16 %v2941
          %v3070 = vunpack.c.l.b16 %v2942
          %v3071 = vpack.c.b16 %v3056, %v3055
          %v3072 = vpack.c.b16 %v3058, %v3057
          %v3073 = vpack.c.b16 %v3060, %v3059
          %v3074 = vpack.c.b16 %v3062, %v3061
          %v3075 = vpack.c.b16 %v3064, %v3063
          %v3076 = vpack.c.b16 %v3066, %v3065
          %v3077 = vpack.c.b16 %v3068, %v3067
          %v3078 = vpack.c.b16 %v3070, %v3069
          %3087 = vmatprep.subr.bf16.mxu0 0
          %3088 = vmatpush1.bf16.msra.mxu0 %v3071
          %3089 = vmatprep.subr.bf16.mxu0 0
          %3090 = vmatpush1.bf16.msra.mxu0 %v3072
          %3091 = vmatprep.subr.bf16.mxu0 0
          %3092 = vmatpush1.bf16.msra.mxu0 %v3073
          %3093 = vmatprep.subr.bf16.mxu0 0
          %3094 = vmatpush1.bf16.msra.mxu0 %v3074
          %3095 = vmatprep.subr.bf16.mxu0 0
          %3096 = vmatpush1.bf16.msra.mxu0 %v3075
          %3097 = vmatprep.subr.bf16.mxu0 0
          %3098 = vmatpush1.bf16.msra.mxu0 %v3076
          %3099 = vmatprep.subr.bf16.mxu0 0
          %3100 = vmatpush1.bf16.msra.mxu0 %v3077
          %3101 = vmatprep.subr.bf16.mxu0 0
          %3102 = vmatpush1.bf16.msra.mxu0 %v3078
          %3103 = vmatprep.subr.bf16.mxu0 0
          %3104 = vmatpush1.bf16.msra.mxu0 0
          %3105 = vmatprep.subr.bf16.mxu0 0
          %3106 = vmatpush1.bf16.msra.mxu0 0
          %3107 = vmatprep.subr.bf16.mxu0 0
          %3108 = vmatpush1.bf16.msra.mxu0 0
          %3109 = vmatprep.subr.bf16.mxu0 0
          %3110 = vmatpush1.bf16.msra.mxu0 0
          %3111 = vmatprep.subr.bf16.mxu0 0
          %3112 = vmatpush1.bf16.msra.mxu0 0
          %3113 = vmatprep.subr.bf16.mxu0 0
          %3114 = vmatpush1.bf16.msra.mxu0 0
          %3115 = vmatprep.subr.bf16.mxu0 0
          %3116 = vmatpush1.bf16.msra.mxu0 0
          %3117 = vmatprep.subr.bf16.mxu0 0
          %3118 = vmatpush1.bf16.msra.mxu0 0
          %3119 = vmatprep.mubr.bf16.mxu0 0
          %3120 = vmatmul.mubr.bf16.gmra.mrb[0].mxu0 %v3007
          %v3121 = vpop.f32.mrb[0].mxu0
          %v3122 = vadd.f32 0.0, %v3121
          %v3123 = vpop.f32.mrb[0].mxu0
          %v3124 = vpop.f32.mrb[0].mxu0
          %v3125 = vadd.f32 0.0, %v3124
          %v3126 = vpop.f32.mrb[0].mxu0
          %3127 = vmatprep.mubr.bf16.mxu0 0
          %3128 = vmatmul.mubr.bf16.gmra.mrb[0].mxu0 %v3008
          %v3129 = vpop.f32.mrb[0].mxu0
          %v3130 = vadd.f32 0.0, %v3129
          %v3131 = vpop.f32.mrb[0].mxu0
          %v3132 = vpop.f32.mrb[0].mxu0
          %v3133 = vadd.f32 0.0, %v3132
          %v3134 = vpop.f32.mrb[0].mxu0
          %3135 = vmatprep.mubr.bf16.mxu0 0
          %3136 = vmatmul.mubr.bf16.gmra.mrb[0].mxu0 %v3009
          %v3137 = vpop.f32.mrb[0].mxu0
          %v3138 = vadd.f32 0.0, %v3137
          %v3139 = vpop.f32.mrb[0].mxu0
          %v3140 = vpop.f32.mrb[0].mxu0
          %v3141 = vadd.f32 0.0, %v3140
          %v3142 = vpop.f32.mrb[0].mxu0
          %3143 = vmatprep.mubr.bf16.mxu0 0
          %3144 = vmatmul.mubr.bf16.gmra.mrb[0].mxu0 %v3010
          %v3145 = vpop.f32.mrb[0].mxu0
          %v3146 = vadd.f32 0.0, %v3145
          %v3147 = vpop.f32.mrb[0].mxu0
          %v3148 = vpop.f32.mrb[0].mxu0
          %v3149 = vadd.f32 0.0, %v3148
          %v3150 = vpop.f32.mrb[0].mxu0
          %3151 = vmatprep.mubr.bf16.mxu0 0
          %3152 = vmatmul.mubr.bf16.gmra.mrb[0].mxu0 %v3011
          %v3153 = vpop.f32.mrb[0].mxu0
          %v3154 = vadd.f32 0.0, %v3153
          %v3155 = vpop.f32.mrb[0].mxu0
          %v3156 = vpop.f32.mrb[0].mxu0
          %v3157 = vadd.f32 0.0, %v3156
          %v3158 = vpop.f32.mrb[0].mxu0
          %3159 = vmatprep.mubr.bf16.mxu0 0
          %3160 = vmatmul.mubr.bf16.gmra.mrb[0].mxu0 %v3012
          %v3161 = vpop.f32.mrb[0].mxu0
          %v3162 = vadd.f32 0.0, %v3161
          %v3163 = vpop.f32.mrb[0].mxu0
          %v3164 = vpop.f32.mrb[0].mxu0
          %v3165 = vadd.f32 0.0, %v3164
          %v3166 = vpop.f32.mrb[0].mxu0
          %3167 = vmatprep.mubr.bf16.mxu0 0
          %3168 = vmatmul.mubr.bf16.gmra.mrb[0].mxu0 %v3013
          %v3169 = vpop.f32.mrb[0].mxu0
          %v3170 = vadd.f32 0.0, %v3169
          %v3171 = vpop.f32.mrb[0].mxu0
          %v3172 = vpop.f32.mrb[0].mxu0
          %v3173 = vadd.f32 0.0, %v3172
          %v3174 = vpop.f32.mrb[0].mxu0
          %3175 = vmatprep.mubr.bf16.mxu0 0
          %3176 = vmatmul.mubr.bf16.gmra.mrb[0].mxu0 %v3014
          %v3177 = vpop.f32.mrb[0].mxu0
          %v3178 = vadd.f32 0.0, %v3177
          %v3179 = vpop.f32.mrb[0].mxu0
          %v3180 = vpop.f32.mrb[0].mxu0
          %v3181 = vadd.f32 0.0, %v3180
          %v3182 = vpop.f32.mrb[0].mxu0
          %3183 = vmatprep.mubr.bf16.mxu0 0
          %3184 = vmatmul.mubr.bf16.gmra.mrb[0].mxu0 %v3015
          %v3185 = vpop.f32.mrb[0].mxu0
          %v3186 = vadd.f32 0.0, %v3185
          %v3187 = vpop.f32.mrb[0].mxu0
          %v3188 = vpop.f32.mrb[0].mxu0
          %v3189 = vadd.f32 0.0, %v3188
          %v3190 = vpop.f32.mrb[0].mxu0
          %3191 = vmatprep.mubr.bf16.mxu0 0
          %3192 = vmatmul.mubr.bf16.gmra.mrb[0].mxu0 %v3016
          %v3193 = vpop.f32.mrb[0].mxu0
          %v3194 = vadd.f32 0.0, %v3193
          %v3195 = vpop.f32.mrb[0].mxu0
          %v3196 = vpop.f32.mrb[0].mxu0
          %v3197 = vadd.f32 0.0, %v3196
          %v3198 = vpop.f32.mrb[0].mxu0
          %3199 = vmatprep.mubr.bf16.mxu0 0
          %3200 = vmatmul.mubr.bf16.gmra.mrb[0].mxu0 %v3017
          %v3201 = vpop.f32.mrb[0].mxu0
          %v3202 = vadd.f32 0.0, %v3201
          %v3203 = vpop.f32.mrb[0].mxu0
          %v3204 = vpop.f32.mrb[0].mxu0
          %v3205 = vadd.f32 0.0, %v3204
          %v3206 = vpop.f32.mrb[0].mxu0
          %3207 = vmatprep.mubr.bf16.mxu0 0
          %3208 = vmatmul.mubr.bf16.gmra.mrb[0].mxu0 %v3018
          %v3209 = vpop.f32.mrb[0].mxu0
          %v3210 = vadd.f32 0.0, %v3209
          %v3211 = vpop.f32.mrb[0].mxu0
          %v3212 = vpop.f32.mrb[0].mxu0
          %v3213 = vadd.f32 0.0, %v3212
          %v3214 = vpop.f32.mrb[0].mxu0
          %3215 = vmatprep.mubr.bf16.mxu0 0
          %3216 = vmatmul.mubr.bf16.gmra.mrb[0].mxu0 %v3019
          %v3217 = vpop.f32.mrb[0].mxu0
          %v3218 = vadd.f32 0.0, %v3217
          %v3219 = vpop.f32.mrb[0].mxu0
          %v3220 = vpop.f32.mrb[0].mxu0
          %v3221 = vadd.f32 0.0, %v3220
          %v3222 = vpop.f32.mrb[0].mxu0
          %3223 = vmatprep.mubr.bf16.mxu0 0
          %3224 = vmatmul.mubr.bf16.gmra.mrb[0].mxu0 %v3020
          %v3225 = vpop.f32.mrb[0].mxu0
          %v3226 = vadd.f32 0.0, %v3225
          %v3227 = vpop.f32.mrb[0].mxu0
          %v3228 = vpop.f32.mrb[0].mxu0
          %v3229 = vadd.f32 0.0, %v3228
          %v3230 = vpop.f32.mrb[0].mxu0
          %3231 = vmatprep.mubr.bf16.mxu0 0
          %3232 = vmatmul.mubr.bf16.gmra.mrb[0].mxu0 %v3021
          %v3233 = vpop.f32.mrb[0].mxu0
          %v3234 = vadd.f32 0.0, %v3233
          %v3235 = vpop.f32.mrb[0].mxu0
          %v3236 = vpop.f32.mrb[0].mxu0
          %v3237 = vadd.f32 0.0, %v3236
          %v3238 = vpop.f32.mrb[0].mxu0
          %3239 = vmatprep.mubr.bf16.mxu0 0
          %3240 = vmatmul.mubr.bf16.gmra.mrb[0].mxu0 %v3022
          %v3241 = vpop.f32.mrb[0].mxu0
          %v3242 = vadd.f32 0.0, %v3241
          %v3243 = vpop.f32.mrb[0].mxu0
          %v3244 = vpop.f32.mrb[0].mxu0
          %v3245 = vadd.f32 0.0, %v3244
          %v3246 = vpop.f32.mrb[0].mxu0
          %3247 = vdwg.mxu0
          %v3248 = vld [vmem:[#allocation3] sm:$0x1]
          %v3249 = vlaneseq
          %v3250 = vshrl.u32 %v3249, 7
          %v3251 = vsub.s32 0, %v3250
          %v3252 = vrot.slane %v3248, %v3251
          %v3253 = vmul.f32 %v3122, %v3252
          %v3254 = vmul.f32 %v3125, %v3252
          %v3255 = vmul.f32 %v3130, %v3252
          %v3256 = vmul.f32 %v3133, %v3252
          %v3257 = vmul.f32 %v3138, %v3252
          %v3258 = vmul.f32 %v3141, %v3252
          %v3259 = vmul.f32 %v3146, %v3252
          %v3260 = vmul.f32 %v3149, %v3252
          %v3261 = vmul.f32 %v3154, %v3252
          %v3262 = vmul.f32 %v3157, %v3252
          %v3263 = vmul.f32 %v3162, %v3252
          %v3264 = vmul.f32 %v3165, %v3252
          %v3265 = vmul.f32 %v3170, %v3252
          %v3266 = vmul.f32 %v3173, %v3252
          %v3267 = vmul.f32 %v3178, %v3252
          %v3268 = vmul.f32 %v3181, %v3252
          %v3269 = vmul.f32 %v3186, %v3252
          %v3270 = vmul.f32 %v3189, %v3252
          %v3271 = vmul.f32 %v3194, %v3252
          %v3272 = vmul.f32 %v3197, %v3252
          %v3273 = vmul.f32 %v3202, %v3252
          %v3274 = vmul.f32 %v3205, %v3252
          %v3275 = vmul.f32 %v3210, %v3252
          %v3276 = vmul.f32 %v3213, %v3252
          %v3277 = vmul.f32 %v3218, %v3252
          %v3278 = vmul.f32 %v3221, %v3252
          %v3279 = vmul.f32 %v3226, %v3252
          %v3280 = vmul.f32 %v3229, %v3252
          %v3281 = vmul.f32 %v3234, %v3252
          %v3282 = vmul.f32 %v3237, %v3252
          %v3283 = vmul.f32 %v3242, %v3252
          %v3284 = vmul.f32 %v3245, %v3252
          %v3285 = vld [vmem:[#allocation4] sm:$0x1]
          %v3286 = vlaneseq
          %v3287 = vshrl.u32 %v3286, 7
          %v3288 = vsub.s32 0, %v3287
          %v3289 = vrot.slane %v3285, %v3288
          %v3290 = vadd.f32 %v3253, %v3289
          %v3291 = vadd.f32 %v3254, %v3289
          %v3292 = vadd.f32 %v3255, %v3289
          %v3293 = vadd.f32 %v3256, %v3289
          %v3294 = vadd.f32 %v3257, %v3289
          %v3295 = vadd.f32 %v3258, %v3289
          %v3296 = vadd.f32 %v3259, %v3289
          %v3297 = vadd.f32 %v3260, %v3289
          %v3298 = vadd.f32 %v3261, %v3289
          %v3299 = vadd.f32 %v3262, %v3289
          %v3300 = vadd.f32 %v3263, %v3289
          %v3301 = vadd.f32 %v3264, %v3289
          %v3302 = vadd.f32 %v3265, %v3289
          %v3303 = vadd.f32 %v3266, %v3289
          %v3304 = vadd.f32 %v3267, %v3289
          %v3305 = vadd.f32 %v3268, %v3289
          %v3306 = vadd.f32 %v3269, %v3289
          %v3307 = vadd.f32 %v3270, %v3289
          %v3308 = vadd.f32 %v3271, %v3289
          %v3309 = vadd.f32 %v3272, %v3289
          %v3310 = vadd.f32 %v3273, %v3289
          %v3311 = vadd.f32 %v3274, %v3289
          %v3312 = vadd.f32 %v3275, %v3289
          %v3313 = vadd.f32 %v3276, %v3289
          %v3314 = vadd.f32 %v3277, %v3289
          %v3315 = vadd.f32 %v3278, %v3289
          %v3316 = vadd.f32 %v3279, %v3289
          %v3317 = vadd.f32 %v3280, %v3289
          %v3318 = vadd.f32 %v3281, %v3289
          %v3319 = vadd.f32 %v3282, %v3289
          %v3320 = vadd.f32 %v3283, %v3289
          %v3321 = vadd.f32 %v3284, %v3289
          %v3322 = vmax.f32 %v3290, 0.0
          %v3323 = vmax.f32 %v3291, 0.0
          %v3324 = vmax.f32 %v3292, 0.0
          %v3325 = vmax.f32 %v3293, 0.0
          %v3326 = vmax.f32 %v3294, 0.0
          %v3327 = vmax.f32 %v3295, 0.0
          %v3328 = vmax.f32 %v3296, 0.0
          %v3329 = vmax.f32 %v3297, 0.0
          %v3330 = vmax.f32 %v3298, 0.0
          %v3331 = vmax.f32 %v3299, 0.0
          %v3332 = vmax.f32 %v3300, 0.0
          %v3333 = vmax.f32 %v3301, 0.0
          %v3334 = vmax.f32 %v3302, 0.0
          %v3335 = vmax.f32 %v3303, 0.0
          %v3336 = vmax.f32 %v3304, 0.0
          %v3337 = vmax.f32 %v3305, 0.0
          %v3338 = vmax.f32 %v3306, 0.0
          %v3339 = vmax.f32 %v3307, 0.0
          %v3340 = vmax.f32 %v3308, 0.0
          %v3341 = vmax.f32 %v3309, 0.0
          %v3342 = vmax.f32 %v3310, 0.0
          %v3343 = vmax.f32 %v3311, 0.0
          %v3344 = vmax.f32 %v3312, 0.0
          %v3345 = vmax.f32 %v3313, 0.0
          %v3346 = vmax.f32 %v3314, 0.0
          %v3347 = vmax.f32 %v3315, 0.0
          %v3348 = vmax.f32 %v3316, 0.0
          %v3349 = vmax.f32 %v3317, 0.0
          %v3350 = vmax.f32 %v3318, 0.0
          %v3351 = vmax.f32 %v3319, 0.0
          %v3352 = vmax.f32 %v3320, 0.0
          %v3353 = vmax.f32 %v3321, 0.0
          %v3354 = vpack.c.bf16 %v3323, %v3322
          %v3355 = vpack.c.bf16 %v3325, %v3324
          %v3356 = vpack.c.bf16 %v3327, %v3326
          %v3357 = vpack.c.bf16 %v3329, %v3328
          %v3358 = vpack.c.bf16 %v3331, %v3330
          %v3359 = vpack.c.bf16 %v3333, %v3332
          %v3360 = vpack.c.bf16 %v3335, %v3334
          %v3361 = vpack.c.bf16 %v3337, %v3336
          %v3362 = vpack.c.bf16 %v3339, %v3338
          %v3363 = vpack.c.bf16 %v3341, %v3340
          %v3364 = vpack.c.bf16 %v3343, %v3342
          %v3365 = vpack.c.bf16 %v3345, %v3344
          %v3366 = vpack.c.bf16 %v3347, %v3346
          %v3367 = vpack.c.bf16 %v3349, %v3348
          %v3368 = vpack.c.bf16 %v3351, %v3350
          %v3369 = vpack.c.bf16 %v3353, %v3352
          %v3370 = vld [vmem:[#allocation10] sm:$0xf]
          %v3371 = vld [vmem:[#allocation10 + $0x4] sm:$0xf]
          %v3372 = vld [vmem:[#allocation10 + $0x8] sm:$0xf]
          %v3373 = vld [vmem:[#allocation10 + $0xc] sm:$0xf]
          %v3374 = vld [vmem:[#allocation10 + $0x10] sm:$0xf]
          %v3375 = vld [vmem:[#allocation10 + $0x14] sm:$0xf]
          %v3376 = vld [vmem:[#allocation10 + $0x18] sm:$0xf]
          %v3377 = vld [vmem:[#allocation10 + $0x1c] sm:$0xf]
          %v3378 = vld [vmem:[#allocation10 + $0x20] sm:$0xf]
          %v3379 = vld [vmem:[#allocation10 + $0x24] sm:$0xf]
          %v3380 = vld [vmem:[#allocation10 + $0x28] sm:$0xf]
          %v3381 = vld [vmem:[#allocation10 + $0x2c] sm:$0xf]
          %v3382 = vld [vmem:[#allocation10 + $0x30] sm:$0xf]
          %v3383 = vld [vmem:[#allocation10 + $0x34] sm:$0xf]
          %v3384 = vld [vmem:[#allocation10 + $0x38] sm:$0xf]
          %v3385 = vld [vmem:[#allocation10 + $0x3c] sm:$0xf]
          %v3402 = vunpack.c.l.b16 %v3370
          %v3403 = vunpack.c.l.b16 %v3371
          %v3404 = vunpack.c.l.b16 %v3372
          %v3405 = vunpack.c.l.b16 %v3373
          %v3406 = vunpack.c.l.b16 %v3374
          %v3407 = vunpack.c.l.b16 %v3375
          %v3408 = vunpack.c.l.b16 %v3376
          %v3409 = vunpack.c.l.b16 %v3377
          %v3410 = vunpack.c.l.b16 %v3378
          %v3411 = vunpack.c.l.b16 %v3379
          %v3412 = vunpack.c.l.b16 %v3380
          %v3413 = vunpack.c.l.b16 %v3381
          %v3414 = vunpack.c.l.b16 %v3382
          %v3415 = vunpack.c.l.b16 %v3383
          %v3416 = vunpack.c.l.b16 %v3384
          %v3417 = vunpack.c.l.b16 %v3385
          %v3418 = vpack.c.b16 %v3403, %v3402
          %v3419 = vpack.c.b16 %v3405, %v3404
          %v3420 = vpack.c.b16 %v3407, %v3406
          %v3421 = vpack.c.b16 %v3409, %v3408
          %v3422 = vpack.c.b16 %v3411, %v3410
          %v3423 = vpack.c.b16 %v3413, %v3412
          %v3424 = vpack.c.b16 %v3415, %v3414
          %v3425 = vpack.c.b16 %v3417, %v3416
          %3434 = vmatprep.subr.bf16.mxu0 0
          %3435 = vmatpush1.bf16.msra.mxu0 %v3418
          %3436 = vmatprep.subr.bf16.mxu0 0
          %3437 = vmatpush1.bf16.msra.mxu0 %v3419
          %3438 = vmatprep.subr.bf16.mxu0 0
          %3439 = vmatpush1.bf16.msra.mxu0 %v3420
          %3440 = vmatprep.subr.bf16.mxu0 0
          %3441 = vmatpush1.bf16.msra.mxu0 %v3421
          %3442 = vmatprep.subr.bf16.mxu0 0
          %3443 = vmatpush1.bf16.msra.mxu0 %v3422
          %3444 = vmatprep.subr.bf16.mxu0 0
          %3445 = vmatpush1.bf16.msra.mxu0 %v3423
          %3446 = vmatprep.subr.bf16.mxu0 0
          %3447 = vmatpush1.bf16.msra.mxu0 %v3424
          %3448 = vmatprep.subr.bf16.mxu0 0
          %3449 = vmatpush1.bf16.msra.mxu0 %v3425
          %3450 = vmatprep.subr.bf16.mxu0 0
          %3451 = vmatpush1.bf16.msra.mxu0 0
          %3452 = vmatprep.subr.bf16.mxu0 0
          %3453 = vmatpush1.bf16.msra.mxu0 0
          %3454 = vmatprep.subr.bf16.mxu0 0
          %3455 = vmatpush1.bf16.msra.mxu0 0
          %3456 = vmatprep.subr.bf16.mxu0 0
          %3457 = vmatpush1.bf16.msra.mxu0 0
          %3458 = vmatprep.subr.bf16.mxu0 0
          %3459 = vmatpush1.bf16.msra.mxu0 0
          %3460 = vmatprep.subr.bf16.mxu0 0
          %3461 = vmatpush1.bf16.msra.mxu0 0
          %3462 = vmatprep.subr.bf16.mxu0 0
          %3463 = vmatpush1.bf16.msra.mxu0 0
          %3464 = vmatprep.subr.bf16.mxu0 0
          %3465 = vmatpush1.bf16.msra.mxu0 0
          %3466 = vmatprep.mubr.bf16.mxu0 0
          %3467 = vmatmul.mubr.bf16.gmra.mrb[0].mxu0 %v3354
          %v3468 = vpop.f32.mrb[0].mxu0
          %v3469 = vadd.f32 0.0, %v3468
          %v3470 = vpop.f32.mrb[0].mxu0
          %v3471 = vpop.f32.mrb[0].mxu0
          %v3472 = vadd.f32 0.0, %v3471
          %v3473 = vpop.f32.mrb[0].mxu0
          %3474 = vmatprep.mubr.bf16.mxu0 0
          %3475 = vmatmul.mubr.bf16.gmra.mrb[0].mxu0 %v3355
          %v3476 = vpop.f32.mrb[0].mxu0
          %v3477 = vadd.f32 0.0, %v3476
          %v3478 = vpop.f32.mrb[0].mxu0
          %v3479 = vpop.f32.mrb[0].mxu0
          %v3480 = vadd.f32 0.0, %v3479
          %v3481 = vpop.f32.mrb[0].mxu0
          %3482 = vmatprep.mubr.bf16.mxu0 0
          %3483 = vmatmul.mubr.bf16.gmra.mrb[0].mxu0 %v3356
          %v3484 = vpop.f32.mrb[0].mxu0
          %v3485 = vadd.f32 0.0, %v3484
          %v3486 = vpop.f32.mrb[0].mxu0
          %v3487 = vpop.f32.mrb[0].mxu0
          %v3488 = vadd.f32 0.0, %v3487
          %v3489 = vpop.f32.mrb[0].mxu0
          %3490 = vmatprep.mubr.bf16.mxu0 0
          %3491 = vmatmul.mubr.bf16.gmra.mrb[0].mxu0 %v3357
          %v3492 = vpop.f32.mrb[0].mxu0
          %v3493 = vadd.f32 0.0, %v3492
          %v3494 = vpop.f32.mrb[0].mxu0
          %v3495 = vpop.f32.mrb[0].mxu0
          %v3496 = vadd.f32 0.0, %v3495
          %v3497 = vpop.f32.mrb[0].mxu0
          %3498 = vmatprep.mubr.bf16.mxu0 0
          %3499 = vmatmul.mubr.bf16.gmra.mrb[0].mxu0 %v3358
          %v3500 = vpop.f32.mrb[0].mxu0
          %v3501 = vadd.f32 0.0, %v3500
          %v3502 = vpop.f32.mrb[0].mxu0
          %v3503 = vpop.f32.mrb[0].mxu0
          %v3504 = vadd.f32 0.0, %v3503
          %v3505 = vpop.f32.mrb[0].mxu0
          %3506 = vmatprep.mubr.bf16.mxu0 0
          %3507 = vmatmul.mubr.bf16.gmra.mrb[0].mxu0 %v3359
          %v3508 = vpop.f32.mrb[0].mxu0
          %v3509 = vadd.f32 0.0, %v3508
          %v3510 = vpop.f32.mrb[0].mxu0
          %v3511 = vpop.f32.mrb[0].mxu0
          %v3512 = vadd.f32 0.0, %v3511
          %v3513 = vpop.f32.mrb[0].mxu0
          %3514 = vmatprep.mubr.bf16.mxu0 0
          %3515 = vmatmul.mubr.bf16.gmra.mrb[0].mxu0 %v3360
          %v3516 = vpop.f32.mrb[0].mxu0
          %v3517 = vadd.f32 0.0, %v3516
          %v3518 = vpop.f32.mrb[0].mxu0
          %v3519 = vpop.f32.mrb[0].mxu0
          %v3520 = vadd.f32 0.0, %v3519
          %v3521 = vpop.f32.mrb[0].mxu0
          %3522 = vmatprep.mubr.bf16.mxu0 0
          %3523 = vmatmul.mubr.bf16.gmra.mrb[0].mxu0 %v3361
          %v3524 = vpop.f32.mrb[0].mxu0
          %v3525 = vadd.f32 0.0, %v3524
          %v3526 = vpop.f32.mrb[0].mxu0
          %v3527 = vpop.f32.mrb[0].mxu0
          %v3528 = vadd.f32 0.0, %v3527
          %v3529 = vpop.f32.mrb[0].mxu0
          %3530 = vmatprep.mubr.bf16.mxu0 0
          %3531 = vmatmul.mubr.bf16.gmra.mrb[0].mxu0 %v3362
          %v3532 = vpop.f32.mrb[0].mxu0
          %v3533 = vadd.f32 0.0, %v3532
          %v3534 = vpop.f32.mrb[0].mxu0
          %v3535 = vpop.f32.mrb[0].mxu0
          %v3536 = vadd.f32 0.0, %v3535
          %v3537 = vpop.f32.mrb[0].mxu0
          %3538 = vmatprep.mubr.bf16.mxu0 0
          %3539 = vmatmul.mubr.bf16.gmra.mrb[0].mxu0 %v3363
          %v3540 = vpop.f32.mrb[0].mxu0
          %v3541 = vadd.f32 0.0, %v3540
          %v3542 = vpop.f32.mrb[0].mxu0
          %v3543 = vpop.f32.mrb[0].mxu0
          %v3544 = vadd.f32 0.0, %v3543
          %v3545 = vpop.f32.mrb[0].mxu0
          %3546 = vmatprep.mubr.bf16.mxu0 0
          %3547 = vmatmul.mubr.bf16.gmra.mrb[0].mxu0 %v3364
          %v3548 = vpop.f32.mrb[0].mxu0
          %v3549 = vadd.f32 0.0, %v3548
          %v3550 = vpop.f32.mrb[0].mxu0
          %v3551 = vpop.f32.mrb[0].mxu0
          %v3552 = vadd.f32 0.0, %v3551
          %v3553 = vpop.f32.mrb[0].mxu0
          %3554 = vmatprep.mubr.bf16.mxu0 0
          %3555 = vmatmul.mubr.bf16.gmra.mrb[0].mxu0 %v3365
          %v3556 = vpop.f32.mrb[0].mxu0
          %v3557 = vadd.f32 0.0, %v3556
          %v3558 = vpop.f32.mrb[0].mxu0
          %v3559 = vpop.f32.mrb[0].mxu0
          %v3560 = vadd.f32 0.0, %v3559
          %v3561 = vpop.f32.mrb[0].mxu0
          %3562 = vmatprep.mubr.bf16.mxu0 0
          %3563 = vmatmul.mubr.bf16.gmra.mrb[0].mxu0 %v3366
          %v3564 = vpop.f32.mrb[0].mxu0
          %v3565 = vadd.f32 0.0, %v3564
          %v3566 = vpop.f32.mrb[0].mxu0
          %v3567 = vpop.f32.mrb[0].mxu0
          %v3568 = vadd.f32 0.0, %v3567
          %v3569 = vpop.f32.mrb[0].mxu0
          %3570 = vmatprep.mubr.bf16.mxu0 0
          %3571 = vmatmul.mubr.bf16.gmra.mrb[0].mxu0 %v3367
          %v3572 = vpop.f32.mrb[0].mxu0
          %v3573 = vadd.f32 0.0, %v3572
          %v3574 = vpop.f32.mrb[0].mxu0
          %v3575 = vpop.f32.mrb[0].mxu0
          %v3576 = vadd.f32 0.0, %v3575
          %v3577 = vpop.f32.mrb[0].mxu0
          %3578 = vmatprep.mubr.bf16.mxu0 0
          %3579 = vmatmul.mubr.bf16.gmra.mrb[0].mxu0 %v3368
          %v3580 = vpop.f32.mrb[0].mxu0
          %v3581 = vadd.f32 0.0, %v3580
          %v3582 = vpop.f32.mrb[0].mxu0
          %v3583 = vpop.f32.mrb[0].mxu0
          %v3584 = vadd.f32 0.0, %v3583
          %v3585 = vpop.f32.mrb[0].mxu0
          %3586 = vmatprep.mubr.bf16.mxu0 0
          %3587 = vmatmul.mubr.bf16.gmra.mrb[0].mxu0 %v3369
          %v3588 = vpop.f32.mrb[0].mxu0
          %v3589 = vadd.f32 0.0, %v3588
          %v3590 = vpop.f32.mrb[0].mxu0
          %v3591 = vpop.f32.mrb[0].mxu0
          %v3592 = vadd.f32 0.0, %v3591
          %v3593 = vpop.f32.mrb[0].mxu0
          %3594 = vdwg.mxu0
          %v3595 = vld [vmem:[#allocation3 + $0x1] sm:$0x1]
          %v3596 = vlaneseq
          %v3597 = vshrl.u32 %v3596, 7
          %v3598 = vsub.s32 0, %v3597
          %v3599 = vrot.slane %v3595, %v3598
          %v3600 = vmul.f32 %v3469, %v3599
          %v3601 = vmul.f32 %v3472, %v3599
          %v3602 = vmul.f32 %v3477, %v3599
          %v3603 = vmul.f32 %v3480, %v3599
          %v3604 = vmul.f32 %v3485, %v3599
          %v3605 = vmul.f32 %v3488, %v3599
          %v3606 = vmul.f32 %v3493, %v3599
          %v3607 = vmul.f32 %v3496, %v3599
          %v3608 = vmul.f32 %v3501, %v3599
          %v3609 = vmul.f32 %v3504, %v3599
          %v3610 = vmul.f32 %v3509, %v3599
          %v3611 = vmul.f32 %v3512, %v3599
          %v3612 = vmul.f32 %v3517, %v3599
          %v3613 = vmul.f32 %v3520, %v3599
          %v3614 = vmul.f32 %v3525, %v3599
          %v3615 = vmul.f32 %v3528, %v3599
          %v3616 = vmul.f32 %v3533, %v3599
          %v3617 = vmul.f32 %v3536, %v3599
          %v3618 = vmul.f32 %v3541, %v3599
          %v3619 = vmul.f32 %v3544, %v3599
          %v3620 = vmul.f32 %v3549, %v3599
          %v3621 = vmul.f32 %v3552, %v3599
          %v3622 = vmul.f32 %v3557, %v3599
          %v3623 = vmul.f32 %v3560, %v3599
          %v3624 = vmul.f32 %v3565, %v3599
          %v3625 = vmul.f32 %v3568, %v3599
          %v3626 = vmul.f32 %v3573, %v3599
          %v3627 = vmul.f32 %v3576, %v3599
          %v3628 = vmul.f32 %v3581, %v3599
          %v3629 = vmul.f32 %v3584, %v3599
          %v3630 = vmul.f32 %v3589, %v3599
          %v3631 = vmul.f32 %v3592, %v3599
          %v3632 = vld [vmem:[#allocation4 + $0x1] sm:$0x1]
          %v3633 = vlaneseq
          %v3634 = vshrl.u32 %v3633, 7
          %v3635 = vsub.s32 0, %v3634
          %v3636 = vrot.slane %v3632, %v3635
          %v3637 = vadd.f32 %v3600, %v3636
          %v3638 = vadd.f32 %v3601, %v3636
          %v3639 = vadd.f32 %v3602, %v3636
          %v3640 = vadd.f32 %v3603, %v3636
          %v3641 = vadd.f32 %v3604, %v3636
          %v3642 = vadd.f32 %v3605, %v3636
          %v3643 = vadd.f32 %v3606, %v3636
          %v3644 = vadd.f32 %v3607, %v3636
          %v3645 = vadd.f32 %v3608, %v3636
          %v3646 = vadd.f32 %v3609, %v3636
          %v3647 = vadd.f32 %v3610, %v3636
          %v3648 = vadd.f32 %v3611, %v3636
          %v3649 = vadd.f32 %v3612, %v3636
          %v3650 = vadd.f32 %v3613, %v3636
          %v3651 = vadd.f32 %v3614, %v3636
          %v3652 = vadd.f32 %v3615, %v3636
          %v3653 = vadd.f32 %v3616, %v3636
          %v3654 = vadd.f32 %v3617, %v3636
          %v3655 = vadd.f32 %v3618, %v3636
          %v3656 = vadd.f32 %v3619, %v3636
          %v3657 = vadd.f32 %v3620, %v3636
          %v3658 = vadd.f32 %v3621, %v3636
          %v3659 = vadd.f32 %v3622, %v3636
          %v3660 = vadd.f32 %v3623, %v3636
          %v3661 = vadd.f32 %v3624, %v3636
          %v3662 = vadd.f32 %v3625, %v3636
          %v3663 = vadd.f32 %v3626, %v3636
          %v3664 = vadd.f32 %v3627, %v3636
          %v3665 = vadd.f32 %v3628, %v3636
          %v3666 = vadd.f32 %v3629, %v3636
          %v3667 = vadd.f32 %v3630, %v3636
          %v3668 = vadd.f32 %v3631, %v3636
          %v3669 = vmax.f32 %v3637, 0.0
          %v3670 = vmax.f32 %v3638, 0.0
          %v3671 = vmax.f32 %v3639, 0.0
          %v3672 = vmax.f32 %v3640, 0.0
          %v3673 = vmax.f32 %v3641, 0.0
          %v3674 = vmax.f32 %v3642, 0.0
          %v3675 = vmax.f32 %v3643, 0.0
          %v3676 = vmax.f32 %v3644, 0.0
          %v3677 = vmax.f32 %v3645, 0.0
          %v3678 = vmax.f32 %v3646, 0.0
          %v3679 = vmax.f32 %v3647, 0.0
          %v3680 = vmax.f32 %v3648, 0.0
          %v3681 = vmax.f32 %v3649, 0.0
          %v3682 = vmax.f32 %v3650, 0.0
          %v3683 = vmax.f32 %v3651, 0.0
          %v3684 = vmax.f32 %v3652, 0.0
          %v3685 = vmax.f32 %v3653, 0.0
          %v3686 = vmax.f32 %v3654, 0.0
          %v3687 = vmax.f32 %v3655, 0.0
          %v3688 = vmax.f32 %v3656, 0.0
          %v3689 = vmax.f32 %v3657, 0.0
          %v3690 = vmax.f32 %v3658, 0.0
          %v3691 = vmax.f32 %v3659, 0.0
          %v3692 = vmax.f32 %v3660, 0.0
          %v3693 = vmax.f32 %v3661, 0.0
          %v3694 = vmax.f32 %v3662, 0.0
          %v3695 = vmax.f32 %v3663, 0.0
          %v3696 = vmax.f32 %v3664, 0.0
          %v3697 = vmax.f32 %v3665, 0.0
          %v3698 = vmax.f32 %v3666, 0.0
          %v3699 = vmax.f32 %v3667, 0.0
          %v3700 = vmax.f32 %v3668, 0.0
          %v3701 = vld [vmem:[#allocation3 + $0x2] sm:$0x1]
          %v3702 = vlaneseq
          %v3703 = vshrl.u32 %v3702, 7
          %v3704 = vsub.s32 0, %v3703
          %v3705 = vrot.slane %v3701, %v3704
          %v3706 = vmul.f32 %v3669, %v3705
          %v3707 = vmul.f32 %v3670, %v3705
          %v3708 = vmul.f32 %v3671, %v3705
          %v3709 = vmul.f32 %v3672, %v3705
          %v3710 = vmul.f32 %v3673, %v3705
          %v3711 = vmul.f32 %v3674, %v3705
          %v3712 = vmul.f32 %v3675, %v3705
          %v3713 = vmul.f32 %v3676, %v3705
          %v3714 = vmul.f32 %v3677, %v3705
          %v3715 = vmul.f32 %v3678, %v3705
          %v3716 = vmul.f32 %v3679, %v3705
          %v3717 = vmul.f32 %v3680, %v3705
          %v3718 = vmul.f32 %v3681, %v3705
          %v3719 = vmul.f32 %v3682, %v3705
          %v3720 = vmul.f32 %v3683, %v3705
          %v3721 = vmul.f32 %v3684, %v3705
          %v3722 = vmul.f32 %v3685, %v3705
          %v3723 = vmul.f32 %v3686, %v3705
          %v3724 = vmul.f32 %v3687, %v3705
          %v3725 = vmul.f32 %v3688, %v3705
          %v3726 = vmul.f32 %v3689, %v3705
          %v3727 = vmul.f32 %v3690, %v3705
          %v3728 = vmul.f32 %v3691, %v3705
          %v3729 = vmul.f32 %v3692, %v3705
          %v3730 = vmul.f32 %v3693, %v3705
          %v3731 = vmul.f32 %v3694, %v3705
          %v3732 = vmul.f32 %v3695, %v3705
          %v3733 = vmul.f32 %v3696, %v3705
          %v3734 = vmul.f32 %v3697, %v3705
          %v3735 = vmul.f32 %v3698, %v3705
          %v3736 = vmul.f32 %v3699, %v3705
          %v3737 = vmul.f32 %v3700, %v3705
          %v3738 = vld [vmem:[#allocation4 + $0x2] sm:$0x1]
          %v3739 = vlaneseq
          %v3740 = vshrl.u32 %v3739, 7
          %v3741 = vsub.s32 0, %v3740
          %v3742 = vrot.slane %v3738, %v3741
          %v3743 = vadd.f32 %v3706, %v3742
          %v3744 = vadd.f32 %v3707, %v3742
          %v3745 = vadd.f32 %v3708, %v3742
          %v3746 = vadd.f32 %v3709, %v3742
          %v3747 = vadd.f32 %v3710, %v3742
          %v3748 = vadd.f32 %v3711, %v3742
          %v3749 = vadd.f32 %v3712, %v3742
          %v3750 = vadd.f32 %v3713, %v3742
          %v3751 = vadd.f32 %v3714, %v3742
          %v3752 = vadd.f32 %v3715, %v3742
          %v3753 = vadd.f32 %v3716, %v3742
          %v3754 = vadd.f32 %v3717, %v3742
          %v3755 = vadd.f32 %v3718, %v3742
          %v3756 = vadd.f32 %v3719, %v3742
          %v3757 = vadd.f32 %v3720, %v3742
          %v3758 = vadd.f32 %v3721, %v3742
          %v3759 = vadd.f32 %v3722, %v3742
          %v3760 = vadd.f32 %v3723, %v3742
          %v3761 = vadd.f32 %v3724, %v3742
          %v3762 = vadd.f32 %v3725, %v3742
          %v3763 = vadd.f32 %v3726, %v3742
          %v3764 = vadd.f32 %v3727, %v3742
          %v3765 = vadd.f32 %v3728, %v3742
          %v3766 = vadd.f32 %v3729, %v3742
          %v3767 = vadd.f32 %v3730, %v3742
          %v3768 = vadd.f32 %v3731, %v3742
          %v3769 = vadd.f32 %v3732, %v3742
          %v3770 = vadd.f32 %v3733, %v3742
          %v3771 = vadd.f32 %v3734, %v3742
          %v3772 = vadd.f32 %v3735, %v3742
          %v3773 = vadd.f32 %v3736, %v3742
          %v3774 = vadd.f32 %v3737, %v3742
          %v3775 = vmax.f32 %v3743, 0.0
          %v3776 = vmax.f32 %v3744, 0.0
          %v3777 = vmax.f32 %v3745, 0.0
          %v3778 = vmax.f32 %v3746, 0.0
          %v3779 = vmax.f32 %v3747, 0.0
          %v3780 = vmax.f32 %v3748, 0.0
          %v3781 = vmax.f32 %v3749, 0.0
          %v3782 = vmax.f32 %v3750, 0.0
          %v3783 = vmax.f32 %v3751, 0.0
          %v3784 = vmax.f32 %v3752, 0.0
          %v3785 = vmax.f32 %v3753, 0.0
          %v3786 = vmax.f32 %v3754, 0.0
          %v3787 = vmax.f32 %v3755, 0.0
          %v3788 = vmax.f32 %v3756, 0.0
          %v3789 = vmax.f32 %v3757, 0.0
          %v3790 = vmax.f32 %v3758, 0.0
          %v3791 = vmax.f32 %v3759, 0.0
          %v3792 = vmax.f32 %v3760, 0.0
          %v3793 = vmax.f32 %v3761, 0.0
          %v3794 = vmax.f32 %v3762, 0.0
          %v3795 = vmax.f32 %v3763, 0.0
          %v3796 = vmax.f32 %v3764, 0.0
          %v3797 = vmax.f32 %v3765, 0.0
          %v3798 = vmax.f32 %v3766, 0.0
          %v3799 = vmax.f32 %v3767, 0.0
          %v3800 = vmax.f32 %v3768, 0.0
          %v3801 = vmax.f32 %v3769, 0.0
          %v3802 = vmax.f32 %v3770, 0.0
          %v3803 = vmax.f32 %v3771, 0.0
          %v3804 = vmax.f32 %v3772, 0.0
          %v3805 = vmax.f32 %v3773, 0.0
          %v3806 = vmax.f32 %v3774, 0.0
          %v3807 = vpack.c.bf16 %v3776, %v3775
          %v3808 = vpack.c.bf16 %v3778, %v3777
          %v3809 = vpack.c.bf16 %v3780, %v3779
          %v3810 = vpack.c.bf16 %v3782, %v3781
          %v3811 = vpack.c.bf16 %v3784, %v3783
          %v3812 = vpack.c.bf16 %v3786, %v3785
          %v3813 = vpack.c.bf16 %v3788, %v3787
          %v3814 = vpack.c.bf16 %v3790, %v3789
          %v3815 = vpack.c.bf16 %v3792, %v3791
          %v3816 = vpack.c.bf16 %v3794, %v3793
          %v3817 = vpack.c.bf16 %v3796, %v3795
          %v3818 = vpack.c.bf16 %v3798, %v3797
          %v3819 = vpack.c.bf16 %v3800, %v3799
          %v3820 = vpack.c.bf16 %v3802, %v3801
          %v3821 = vpack.c.bf16 %v3804, %v3803
          %v3822 = vpack.c.bf16 %v3806, %v3805
          %v3823 = vld [vmem:[#allocation11] sm:$0xf]
          %v3824 = vld [vmem:[#allocation11 + $0x4] sm:$0xf]
          %v3825 = vld [vmem:[#allocation11 + $0x8] sm:$0xf]
          %v3826 = vld [vmem:[#allocation11 + $0xc] sm:$0xf]
          %v3827 = vld [vmem:[#allocation11 + $0x10] sm:$0xf]
          %v3828 = vld [vmem:[#allocation11 + $0x14] sm:$0xf]
          %v3829 = vld [vmem:[#allocation11 + $0x18] sm:$0xf]
          %v3830 = vld [vmem:[#allocation11 + $0x1c] sm:$0xf]
          %v3831 = vld [vmem:[#allocation11 + $0x20] sm:$0xf]
          %v3832 = vld [vmem:[#allocation11 + $0x24] sm:$0xf]
          %v3833 = vld [vmem:[#allocation11 + $0x28] sm:$0xf]
          %v3834 = vld [vmem:[#allocation11 + $0x2c] sm:$0xf]
          %v3835 = vld [vmem:[#allocation11 + $0x30] sm:$0xf]
          %v3836 = vld [vmem:[#allocation11 + $0x34] sm:$0xf]
          %v3837 = vld [vmem:[#allocation11 + $0x38] sm:$0xf]
          %v3838 = vld [vmem:[#allocation11 + $0x3c] sm:$0xf]
          %v3855 = vunpack.c.l.b16 %v3823
          %v3856 = vunpack.c.l.b16 %v3824
          %v3857 = vunpack.c.l.b16 %v3825
          %v3858 = vunpack.c.l.b16 %v3826
          %v3859 = vunpack.c.l.b16 %v3827
          %v3860 = vunpack.c.l.b16 %v3828
          %v3861 = vunpack.c.l.b16 %v3829
          %v3862 = vunpack.c.l.b16 %v3830
          %v3863 = vunpack.c.l.b16 %v3831
          %v3864 = vunpack.c.l.b16 %v3832
          %v3865 = vunpack.c.l.b16 %v3833
          %v3866 = vunpack.c.l.b16 %v3834
          %v3867 = vunpack.c.l.b16 %v3835
          %v3868 = vunpack.c.l.b16 %v3836
          %v3869 = vunpack.c.l.b16 %v3837
          %v3870 = vunpack.c.l.b16 %v3838
          %v3871 = vpack.c.b16 %v3856, %v3855
          %v3872 = vpack.c.b16 %v3858, %v3857
          %v3873 = vpack.c.b16 %v3860, %v3859
          %v3874 = vpack.c.b16 %v3862, %v3861
          %v3875 = vpack.c.b16 %v3864, %v3863
          %v3876 = vpack.c.b16 %v3866, %v3865
          %v3877 = vpack.c.b16 %v3868, %v3867
          %v3878 = vpack.c.b16 %v3870, %v3869
          %3887 = vmatprep.subr.bf16.mxu0 0
          %3888 = vmatpush1.bf16.msra.mxu0 %v3871
          %3889 = vmatprep.subr.bf16.mxu0 0
          %3890 = vmatpush1.bf16.msra.mxu0 %v3872
          %3891 = vmatprep.subr.bf16.mxu0 0
          %3892 = vmatpush1.bf16.msra.mxu0 %v3873
          %3893 = vmatprep.subr.bf16.mxu0 0
          %3894 = vmatpush1.bf16.msra.mxu0 %v3874
          %3895 = vmatprep.subr.bf16.mxu0 0
          %3896 = vmatpush1.bf16.msra.mxu0 %v3875
          %3897 = vmatprep.subr.bf16.mxu0 0
          %3898 = vmatpush1.bf16.msra.mxu0 %v3876
          %3899 = vmatprep.subr.bf16.mxu0 0
          %3900 = vmatpush1.bf16.msra.mxu0 %v3877
          %3901 = vmatprep.subr.bf16.mxu0 0
          %3902 = vmatpush1.bf16.msra.mxu0 %v3878
          %3903 = vmatprep.subr.bf16.mxu0 0
          %3904 = vmatpush1.bf16.msra.mxu0 0
          %3905 = vmatprep.subr.bf16.mxu0 0
          %3906 = vmatpush1.bf16.msra.mxu0 0
          %3907 = vmatprep.subr.bf16.mxu0 0
          %3908 = vmatpush1.bf16.msra.mxu0 0
          %3909 = vmatprep.subr.bf16.mxu0 0
          %3910 = vmatpush1.bf16.msra.mxu0 0
          %3911 = vmatprep.subr.bf16.mxu0 0
          %3912 = vmatpush1.bf16.msra.mxu0 0
          %3913 = vmatprep.subr.bf16.mxu0 0
          %3914 = vmatpush1.bf16.msra.mxu0 0
          %3915 = vmatprep.subr.bf16.mxu0 0
          %3916 = vmatpush1.bf16.msra.mxu0 0
          %3917 = vmatprep.subr.bf16.mxu0 0
          %3918 = vmatpush1.bf16.msra.mxu0 0
          %3919 = vmatprep.mubr.bf16.mxu0 0
          %3920 = vmatmul.mubr.bf16.gmra.mrb[0].mxu0 %v3807
          %v3921 = vpop.f32.mrb[0].mxu0
          %v3922 = vadd.f32 0.0, %v3921
          %v3923 = vpop.f32.mrb[0].mxu0
          %v3924 = vpop.f32.mrb[0].mxu0
          %v3925 = vadd.f32 0.0, %v3924
          %v3926 = vpop.f32.mrb[0].mxu0
          %3927 = vmatprep.mubr.bf16.mxu0 0
          %3928 = vmatmul.mubr.bf16.gmra.mrb[0].mxu0 %v3808
          %v3929 = vpop.f32.mrb[0].mxu0
          %v3930 = vadd.f32 0.0, %v3929
          %v3931 = vpop.f32.mrb[0].mxu0
          %v3932 = vpop.f32.mrb[0].mxu0
          %v3933 = vadd.f32 0.0, %v3932
          %v3934 = vpop.f32.mrb[0].mxu0
          %3935 = vmatprep.mubr.bf16.mxu0 0
          %3936 = vmatmul.mubr.bf16.gmra.mrb[0].mxu0 %v3809
          %v3937 = vpop.f32.mrb[0].mxu0
          %v3938 = vadd.f32 0.0, %v3937
          %v3939 = vpop.f32.mrb[0].mxu0
          %v3940 = vpop.f32.mrb[0].mxu0
          %v3941 = vadd.f32 0.0, %v3940
          %v3942 = vpop.f32.mrb[0].mxu0
          %3943 = vmatprep.mubr.bf16.mxu0 0
          %3944 = vmatmul.mubr.bf16.gmra.mrb[0].mxu0 %v3810
          %v3945 = vpop.f32.mrb[0].mxu0
          %v3946 = vadd.f32 0.0, %v3945
          %v3947 = vpop.f32.mrb[0].mxu0
          %v3948 = vpop.f32.mrb[0].mxu0
          %v3949 = vadd.f32 0.0, %v3948
          %v3950 = vpop.f32.mrb[0].mxu0
          %3951 = vmatprep.mubr.bf16.mxu0 0
          %3952 = vmatmul.mubr.bf16.gmra.mrb[0].mxu0 %v3811
          %v3953 = vpop.f32.mrb[0].mxu0
          %v3954 = vadd.f32 0.0, %v3953
          %v3955 = vpop.f32.mrb[0].mxu0
          %v3956 = vpop.f32.mrb[0].mxu0
          %v3957 = vadd.f32 0.0, %v3956
          %v3958 = vpop.f32.mrb[0].mxu0
          %3959 = vmatprep.mubr.bf16.mxu0 0
          %3960 = vmatmul.mubr.bf16.gmra.mrb[0].mxu0 %v3812
          %v3961 = vpop.f32.mrb[0].mxu0
          %v3962 = vadd.f32 0.0, %v3961
          %v3963 = vpop.f32.mrb[0].mxu0
          %v3964 = vpop.f32.mrb[0].mxu0
          %v3965 = vadd.f32 0.0, %v3964
          %v3966 = vpop.f32.mrb[0].mxu0
          %3967 = vmatprep.mubr.bf16.mxu0 0
          %3968 = vmatmul.mubr.bf16.gmra.mrb[0].mxu0 %v3813
          %v3969 = vpop.f32.mrb[0].mxu0
          %v3970 = vadd.f32 0.0, %v3969
          %v3971 = vpop.f32.mrb[0].mxu0
          %v3972 = vpop.f32.mrb[0].mxu0
          %v3973 = vadd.f32 0.0, %v3972
          %v3974 = vpop.f32.mrb[0].mxu0
          %3975 = vmatprep.mubr.bf16.mxu0 0
          %3976 = vmatmul.mubr.bf16.gmra.mrb[0].mxu0 %v3814
          %v3977 = vpop.f32.mrb[0].mxu0
          %v3978 = vadd.f32 0.0, %v3977
          %v3979 = vpop.f32.mrb[0].mxu0
          %v3980 = vpop.f32.mrb[0].mxu0
          %v3981 = vadd.f32 0.0, %v3980
          %v3982 = vpop.f32.mrb[0].mxu0
          %3983 = vmatprep.mubr.bf16.mxu0 0
          %3984 = vmatmul.mubr.bf16.gmra.mrb[0].mxu0 %v3815
          %v3985 = vpop.f32.mrb[0].mxu0
          %v3986 = vadd.f32 0.0, %v3985
          %v3987 = vpop.f32.mrb[0].mxu0
          %v3988 = vpop.f32.mrb[0].mxu0
          %v3989 = vadd.f32 0.0, %v3988
          %v3990 = vpop.f32.mrb[0].mxu0
          %3991 = vmatprep.mubr.bf16.mxu0 0
          %3992 = vmatmul.mubr.bf16.gmra.mrb[0].mxu0 %v3816
          %v3993 = vpop.f32.mrb[0].mxu0
          %v3994 = vadd.f32 0.0, %v3993
          %v3995 = vpop.f32.mrb[0].mxu0
          %v3996 = vpop.f32.mrb[0].mxu0
          %v3997 = vadd.f32 0.0, %v3996
          %v3998 = vpop.f32.mrb[0].mxu0
          %3999 = vmatprep.mubr.bf16.mxu0 0
          %4000 = vmatmul.mubr.bf16.gmra.mrb[0].mxu0 %v3817
          %v4001 = vpop.f32.mrb[0].mxu0
          %v4002 = vadd.f32 0.0, %v4001
          %v4003 = vpop.f32.mrb[0].mxu0
          %v4004 = vpop.f32.mrb[0].mxu0
          %v4005 = vadd.f32 0.0, %v4004
          %v4006 = vpop.f32.mrb[0].mxu0
          %4007 = vmatprep.mubr.bf16.mxu0 0
          %4008 = vmatmul.mubr.bf16.gmra.mrb[0].mxu0 %v3818
          %v4009 = vpop.f32.mrb[0].mxu0
          %v4010 = vadd.f32 0.0, %v4009
          %v4011 = vpop.f32.mrb[0].mxu0
          %v4012 = vpop.f32.mrb[0].mxu0
          %v4013 = vadd.f32 0.0, %v4012
          %v4014 = vpop.f32.mrb[0].mxu0
          %4015 = vmatprep.mubr.bf16.mxu0 0
          %4016 = vmatmul.mubr.bf16.gmra.mrb[0].mxu0 %v3819
          %v4017 = vpop.f32.mrb[0].mxu0
          %v4018 = vadd.f32 0.0, %v4017
          %v4019 = vpop.f32.mrb[0].mxu0
          %v4020 = vpop.f32.mrb[0].mxu0
          %v4021 = vadd.f32 0.0, %v4020
          %v4022 = vpop.f32.mrb[0].mxu0
          %4023 = vmatprep.mubr.bf16.mxu0 0
          %4024 = vmatmul.mubr.bf16.gmra.mrb[0].mxu0 %v3820
          %v4025 = vpop.f32.mrb[0].mxu0
          %v4026 = vadd.f32 0.0, %v4025
          %v4027 = vpop.f32.mrb[0].mxu0
          %v4028 = vpop.f32.mrb[0].mxu0
          %v4029 = vadd.f32 0.0, %v4028
          %v4030 = vpop.f32.mrb[0].mxu0
          %4031 = vmatprep.mubr.bf16.mxu0 0
          %4032 = vmatmul.mubr.bf16.gmra.mrb[0].mxu0 %v3821
          %v4033 = vpop.f32.mrb[0].mxu0
          %v4034 = vadd.f32 0.0, %v4033
          %v4035 = vpop.f32.mrb[0].mxu0
          %v4036 = vpop.f32.mrb[0].mxu0
          %v4037 = vadd.f32 0.0, %v4036
          %v4038 = vpop.f32.mrb[0].mxu0
          %4039 = vmatprep.mubr.bf16.mxu0 0
          %4040 = vmatmul.mubr.bf16.gmra.mrb[0].mxu0 %v3822
          %v4041 = vpop.f32.mrb[0].mxu0
          %v4042 = vadd.f32 0.0, %v4041
          %v4043 = vpop.f32.mrb[0].mxu0
          %v4044 = vpop.f32.mrb[0].mxu0
          %v4045 = vadd.f32 0.0, %v4044
          %v4046 = vpop.f32.mrb[0].mxu0
          %4047 = vdwg.mxu0
          %v4048 = vld [vmem:[#allocation2] sm:$0x1]
          %v4049 = vadd.f32 %v3922, %v3925
          %v4050 = vadd.f32 %v4049, %v3930
          %v4051 = vadd.f32 %v4050, %v3933
          %v4052 = vadd.f32 %v4051, %v3938
          %v4053 = vadd.f32 %v4052, %v3941
          %v4054 = vadd.f32 %v4053, %v3946
          %v4055 = vadd.f32 %v4054, %v3949
          %v4056 = vadd.f32 %v4055, %v3954
          %v4057 = vadd.f32 %v4056, %v3957
          %v4058 = vadd.f32 %v4057, %v3962
          %v4059 = vadd.f32 %v4058, %v3965
          %v4060 = vadd.f32 %v4059, %v3970
          %v4061 = vadd.f32 %v4060, %v3973
          %v4062 = vadd.f32 %v4061, %v3978
          %v4063 = vadd.f32 %v4062, %v3981
          %v4064 = vadd.f32 %v4063, %v3986
          %v4065 = vadd.f32 %v4064, %v3989
          %v4066 = vadd.f32 %v4065, %v3994
          %v4067 = vadd.f32 %v4066, %v3997
          %v4068 = vadd.f32 %v4067, %v4002
          %v4069 = vadd.f32 %v4068, %v4005
          %v4070 = vadd.f32 %v4069, %v4010
          %v4071 = vadd.f32 %v4070, %v4013
          %v4072 = vadd.f32 %v4071, %v4018
          %v4073 = vadd.f32 %v4072, %v4021
          %v4074 = vadd.f32 %v4073, %v4026
          %v4075 = vadd.f32 %v4074, %v4029
          %v4076 = vadd.f32 %v4075, %v4034
          %v4077 = vadd.f32 %v4076, %v4037
          %v4078 = vadd.f32 %v4077, %v4042
          %v4079 = vadd.f32 %v4078, %v4045
          %v4080 = vrot.slane %v4079, 4
          %v4081 = vadd.f32 %v4079, %v4080
          %v4082 = vrot.slane %v4081, 2
          %v4083 = vadd.f32 %v4081, %v4082
          %v4084 = vrot.slane %v4083, 1
          %v4085 = vadd.f32 %v4083, %v4084
          %v4086 = vadd.f32 %v4048, %v4085
          %4087 = vst [vmem:[#allocation2] sm:$0x1] %v4086
          %v4088 = vld [vmem:[#allocation2 + $0x1] sm:$0x1]
          %v4089 = vmul.f32 %v3922, %v3922
          %v4090 = vmul.f32 %v3925, %v3925
          %v4091 = vmul.f32 %v3930, %v3930
          %v4092 = vmul.f32 %v3933, %v3933
          %v4093 = vmul.f32 %v3938, %v3938
          %v4094 = vmul.f32 %v3941, %v3941
          %v4095 = vmul.f32 %v3946, %v3946
          %v4096 = vmul.f32 %v3949, %v3949
          %v4097 = vmul.f32 %v3954, %v3954
          %v4098 = vmul.f32 %v3957, %v3957
          %v4099 = vmul.f32 %v3962, %v3962
          %v4100 = vmul.f32 %v3965, %v3965
          %v4101 = vmul.f32 %v3970, %v3970
          %v4102 = vmul.f32 %v3973, %v3973
          %v4103 = vmul.f32 %v3978, %v3978
          %v4104 = vmul.f32 %v3981, %v3981
          %v4105 = vmul.f32 %v3986, %v3986
          %v4106 = vmul.f32 %v3989, %v3989
          %v4107 = vmul.f32 %v3994, %v3994
          %v4108 = vmul.f32 %v3997, %v3997
          %v4109 = vmul.f32 %v4002, %v4002
          %v4110 = vmul.f32 %v4005, %v4005
          %v4111 = vmul.f32 %v4010, %v4010
          %v4112 = vmul.f32 %v4013, %v4013
          %v4113 = vmul.f32 %v4018, %v4018
          %v4114 = vmul.f32 %v4021, %v4021
          %v4115 = vmul.f32 %v4026, %v4026
          %v4116 = vmul.f32 %v4029, %v4029
          %v4117 = vmul.f32 %v4034, %v4034
          %v4118 = vmul.f32 %v4037, %v4037
          %v4119 = vmul.f32 %v4042, %v4042
          %v4120 = vmul.f32 %v4045, %v4045
          %v4121 = vadd.f32 %v4089, %v4090
          %v4122 = vadd.f32 %v4121, %v4091
          %v4123 = vadd.f32 %v4122, %v4092
          %v4124 = vadd.f32 %v4123, %v4093
          %v4125 = vadd.f32 %v4124, %v4094
          %v4126 = vadd.f32 %v4125, %v4095
          %v4127 = vadd.f32 %v4126, %v4096
          %v4128 = vadd.f32 %v4127, %v4097
          %v4129 = vadd.f32 %v4128, %v4098
          %v4130 = vadd.f32 %v4129, %v4099
          %v4131 = vadd.f32 %v4130, %v4100
          %v4132 = vadd.f32 %v4131, %v4101
          %v4133 = vadd.f32 %v4132, %v4102
          %v4134 = vadd.f32 %v4133, %v4103
          %v4135 = vadd.f32 %v4134, %v4104
          %v4136 = vadd.f32 %v4135, %v4105
          %v4137 = vadd.f32 %v4136, %v4106
          %v4138 = vadd.f32 %v4137, %v4107
          %v4139 = vadd.f32 %v4138, %v4108
          %v4140 = vadd.f32 %v4139, %v4109
          %v4141 = vadd.f32 %v4140, %v4110
          %v4142 = vadd.f32 %v4141, %v4111
          %v4143 = vadd.f32 %v4142, %v4112
          %v4144 = vadd.f32 %v4143, %v4113
          %v4145 = vadd.f32 %v4144, %v4114
          %v4146 = vadd.f32 %v4145, %v4115
          %v4147 = vadd.f32 %v4146, %v4116
          %v4148 = vadd.f32 %v4147, %v4117
          %v4149 = vadd.f32 %v4148, %v4118
          %v4150 = vadd.f32 %v4149, %v4119
          %v4151 = vadd.f32 %v4150, %v4120
          %v4152 = vrot.slane %v4151, 4
          %v4153 = vadd.f32 %v4151, %v4152
          %v4154 = vrot.slane %v4153, 2
          %v4155 = vadd.f32 %v4153, %v4154
          %v4156 = vrot.slane %v4155, 1
          %v4157 = vadd.f32 %v4155, %v4156
          %v4158 = vadd.f32 %v4088, %v4157
          %4159 = vst [vmem:[#allocation2 + $0x1] sm:$0x1] %v4158
          %p4160 = scmp.eq.s32.totalorder %s30, 1
          // Predicated region
          $region97: #{tpu_custom_call.1} parent=95 // pred_check
            %p4161 = pneg %p4160
          $region98: #{tpu_custom_call.1} parent=95 // pred_check_branch
            %4163 = sbr.rel (%p4161) target = $region100
          $region99: #{tpu_custom_call.1} parent=95 // pred_region
            %v4164 = vld [vmem:[#allocation2] sm:$0xff]
            %v4165 = vld [vmem:[#allocation13] sm:$0xff]
            %v4166 = vld [vmem:[#allocation13 + $0x8] sm:$0xff]
            %v4167 = vld [vmem:[#allocation13 + $0x10] sm:$0xff]
            %v4168 = vld [vmem:[#allocation13 + $0x18] sm:$0xff]
            %v4169 = vld [vmem:[#allocation13 + $0x20] sm:$0xff]
            %v4170 = vld [vmem:[#allocation13 + $0x28] sm:$0xff]
            %v4171 = vld [vmem:[#allocation13 + $0x30] sm:$0xff]
            %v4172 = vld [vmem:[#allocation13 + $0x38] sm:$0xff]
            %v4173 = vld [vmem:[#allocation13 + $0x40] sm:$0xff]
            %v4174 = vld [vmem:[#allocation13 + $0x48] sm:$0xff]
            %v4175 = vld [vmem:[#allocation13 + $0x50] sm:$0xff]
            %v4176 = vld [vmem:[#allocation13 + $0x58] sm:$0xff]
            %v4177 = vld [vmem:[#allocation13 + $0x60] sm:$0xff]
            %v4178 = vld [vmem:[#allocation13 + $0x68] sm:$0xff]
            %v4179 = vld [vmem:[#allocation13 + $0x70] sm:$0xff]
            %v4180 = vld [vmem:[#allocation13 + $0x78] sm:$0xff]
            %4181 = vmatprep.subr.mxu0 0.0
            %4182 = vmatpush1.msra.mxu0 %v4165
            %4183 = vmatprep.subr.mxu0 0.0
            %4184 = vmatpush1.msra.mxu0 %v4166
            %4185 = vmatprep.subr.mxu0 0.0
            %4186 = vmatpush1.msra.mxu0 %v4167
            %4187 = vmatprep.subr.mxu0 0.0
            %4188 = vmatpush1.msra.mxu0 %v4168
            %4189 = vmatprep.subr.mxu0 0.0
            %4190 = vmatpush1.msra.mxu0 %v4169
            %4191 = vmatprep.subr.mxu0 0.0
            %4192 = vmatpush1.msra.mxu0 %v4170
            %4193 = vmatprep.subr.mxu0 0.0
            %4194 = vmatpush1.msra.mxu0 %v4171
            %4195 = vmatprep.subr.mxu0 0.0
            %4196 = vmatpush1.msra.mxu0 %v4172
            %4197 = vmatprep.subr.mxu0 0.0
            %4198 = vmatpush1.msra.mxu0 %v4173
            %4199 = vmatprep.subr.mxu0 0.0
            %4200 = vmatpush1.msra.mxu0 %v4174
            %4201 = vmatprep.subr.mxu0 0.0
            %4202 = vmatpush1.msra.mxu0 %v4175
            %4203 = vmatprep.subr.mxu0 0.0
            %4204 = vmatpush1.msra.mxu0 %v4176
            %4205 = vmatprep.subr.mxu0 0.0
            %4206 = vmatpush1.msra.mxu0 %v4177
            %4207 = vmatprep.subr.mxu0 0.0
            %4208 = vmatpush1.msra.mxu0 %v4178
            %4209 = vmatprep.subr.mxu0 0.0
            %4210 = vmatpush1.msra.mxu0 %v4179
            %4211 = vmatprep.subr.mxu0 0.0
            %4212 = vmatpush1.msra.mxu0 %v4180
            %4213 = vmatprep.subr.mxu0 0.0
            %4214 = vmatpush1.msra.mxu0 0.0
            %4215 = vmatprep.subr.mxu0 0.0
            %4216 = vmatpush1.msra.mxu0 0.0
            %4217 = vmatprep.subr.mxu0 0.0
            %4218 = vmatpush1.msra.mxu0 0.0
            %4219 = vmatprep.subr.mxu0 0.0
            %4220 = vmatpush1.msra.mxu0 0.0
            %4221 = vmatprep.subr.mxu0 0.0
            %4222 = vmatpush1.msra.mxu0 0.0
            %4223 = vmatprep.subr.mxu0 0.0
            %4224 = vmatpush1.msra.mxu0 0.0
            %4225 = vmatprep.subr.mxu0 0.0
            %4226 = vmatpush1.msra.mxu0 0.0
            %4227 = vmatprep.subr.mxu0 0.0
            %4228 = vmatpush1.msra.mxu0 0.0
            %4229 = vmatprep.subr.mxu0 0.0
            %4230 = vmatpush1.msra.mxu0 0.0
            %4231 = vmatprep.subr.mxu0 0.0
            %4232 = vmatpush1.msra.mxu0 0.0
            %4233 = vmatprep.subr.mxu0 0.0
            %4234 = vmatpush1.msra.mxu0 0.0
            %4235 = vmatprep.subr.mxu0 0.0
            %4236 = vmatpush1.msra.mxu0 0.0
            %4237 = vmatprep.subr.mxu0 0.0
            %4238 = vmatpush1.msra.mxu0 0.0
            %4239 = vmatprep.subr.mxu0 0.0
            %4240 = vmatpush1.msra.mxu0 0.0
            %4241 = vmatprep.subr.mxu0 0.0
            %4242 = vmatpush1.msra.mxu0 0.0
            %4243 = vmatprep.subr.mxu0 0.0
            %4244 = vmatpush1.msra.mxu0 0.0
            %4245 = vmatprep.mubr.f32.mxu0 0.0
            %4246 = vmatmul.mubr.f32.gmra.mrb[0].mxu0 %v4164
            %v4247 = vpop.f32.mrb[0].mxu0
            %v4248 = vadd.f32 0.0, %v4247
            %v4249 = vpop.f32.mrb[0].mxu0
            %4250 = vdwg.mxu0
            %v4251 = vmul.f32 %v4248, 0.00048828125
            %v4252 = vmul.f32 %v4251, %v4251
            %v4254 = vrot.slane %v4252, 7
            %v4256 = vsub.f32 %v4251, %v4254
            %v4257 = vmax.f32 %v4256, 0.0
            %v4258 = vld [vmem:[%s5 + $0x6] sm:$0x1]
            %v4259 = vld [vmem:[%s5 + $0x7] sm:$0x1]
            %v4260 = vadd.f32 %v4257, 1e-05
            %v4261 = vrsqrt.pop %v4260
            %v4263 = vrot.slane %v4261, 1
            %v4265 = vmul.f32 %v4258, %v4263
            %4266 = vst [vmem:[#allocation3 + $0x3] sm:$0x1] %v4265
            %v4267 = vmul.f32 %v4251, %v4265
            %v4268 = vsub.f32 %v4259, %v4267
            %4269 = vst [vmem:[#allocation4 + $0x3] sm:$0x1] %v4268
          $region100: #{tpu_custom_call.1} parent=95 // pred_fallthru
            _
        $region96: #{tpu_custom_call.1} parent=43 // pred_fallthru
          _
        %p4270 = scmp.eq.s32.totalorder %s29, 4
        // Predicated region
        $region101: #{tpu_custom_call.1} parent=43 // pred_check
          %p4271 = pneg %p4270
        $region102: #{tpu_custom_call.1} parent=43 // pred_check_branch
          %4273 = sbr.rel (%p4271) target = $region104
        $region103: #{tpu_custom_call.1} parent=43 // pred_region
          %v4274 = vld [vmem:[%s299] sm:$0xf]
          %v4275 = vld [vmem:[%s299 + $0x4] sm:$0xf]
          %v4276 = vld [vmem:[%s299 + $0x8] sm:$0xf]
          %v4277 = vld [vmem:[%s299 + $0xc] sm:$0xf]
          %v4278 = vld [vmem:[%s299 + $0x10] sm:$0xf]
          %v4279 = vld [vmem:[%s299 + $0x14] sm:$0xf]
          %v4280 = vld [vmem:[%s299 + $0x18] sm:$0xf]
          %v4281 = vld [vmem:[%s299 + $0x1c] sm:$0xf]
          %v4282 = vld [vmem:[%s299 + $0x20] sm:$0xf]
          %v4283 = vld [vmem:[%s299 + $0x24] sm:$0xf]
          %v4284 = vld [vmem:[%s299 + $0x28] sm:$0xf]
          %v4285 = vld [vmem:[%s299 + $0x2c] sm:$0xf]
          %v4286 = vld [vmem:[%s299 + $0x30] sm:$0xf]
          %v4287 = vld [vmem:[%s299 + $0x34] sm:$0xf]
          %v4288 = vld [vmem:[%s299 + $0x38] sm:$0xf]
          %v4289 = vld [vmem:[%s299 + $0x3c] sm:$0xf]
          %v4290 = vld [vmem:[%s299 + $0x40] sm:$0xf]
          %v4291 = vld [vmem:[%s299 + $0x44] sm:$0xf]
          %v4292 = vld [vmem:[%s299 + $0x48] sm:$0xf]
          %v4293 = vld [vmem:[%s299 + $0x4c] sm:$0xf]
          %v4294 = vld [vmem:[%s299 + $0x50] sm:$0xf]
          %v4295 = vld [vmem:[%s299 + $0x54] sm:$0xf]
          %v4296 = vld [vmem:[%s299 + $0x58] sm:$0xf]
          %v4297 = vld [vmem:[%s299 + $0x5c] sm:$0xf]
          %v4298 = vld [vmem:[%s299 + $0x60] sm:$0xf]
          %v4299 = vld [vmem:[%s299 + $0x64] sm:$0xf]
          %v4300 = vld [vmem:[%s299 + $0x68] sm:$0xf]
          %v4301 = vld [vmem:[%s299 + $0x6c] sm:$0xf]
          %v4302 = vld [vmem:[%s299 + $0x70] sm:$0xf]
          %v4303 = vld [vmem:[%s299 + $0x74] sm:$0xf]
          %v4304 = vld [vmem:[%s299 + $0x78] sm:$0xf]
          %v4305 = vld [vmem:[%s299 + $0x7c] sm:$0xf]
          %v4306 = vld [vmem:[#allocation8] sm:$0xf]
          %v4307 = vld [vmem:[#allocation8 + $0x4] sm:$0xf]
          %v4308 = vld [vmem:[#allocation8 + $0x8] sm:$0xf]
          %v4309 = vld [vmem:[#allocation8 + $0xc] sm:$0xf]
          %v4310 = vld [vmem:[#allocation8 + $0x10] sm:$0xf]
          %v4311 = vld [vmem:[#allocation8 + $0x14] sm:$0xf]
          %v4312 = vld [vmem:[#allocation8 + $0x18] sm:$0xf]
          %v4313 = vld [vmem:[#allocation8 + $0x1c] sm:$0xf]
          %v4314 = vld [vmem:[#allocation8 + $0x20] sm:$0xf]
          %v4315 = vld [vmem:[#allocation8 + $0x24] sm:$0xf]
          %v4316 = vld [vmem:[#allocation8 + $0x28] sm:$0xf]
          %v4317 = vld [vmem:[#allocation8 + $0x2c] sm:$0xf]
          %v4318 = vld [vmem:[#allocation8 + $0x30] sm:$0xf]
          %v4319 = vld [vmem:[#allocation8 + $0x34] sm:$0xf]
          %v4320 = vld [vmem:[#allocation8 + $0x38] sm:$0xf]
          %v4321 = vld [vmem:[#allocation8 + $0x3c] sm:$0xf]
          %v4354 = vunpack.c.l.b16 %v4274
          %v4355 = vunpack.c.l.b16 %v4275
          %v4356 = vunpack.c.l.b16 %v4276
          %v4357 = vunpack.c.l.b16 %v4277
          %v4358 = vunpack.c.l.b16 %v4278
          %v4359 = vunpack.c.l.b16 %v4279
          %v4360 = vunpack.c.l.b16 %v4280
          %v4361 = vunpack.c.l.b16 %v4281
          %v4362 = vunpack.c.l.b16 %v4282
          %v4363 = vunpack.c.l.b16 %v4283
          %v4364 = vunpack.c.l.b16 %v4284
          %v4365 = vunpack.c.l.b16 %v4285
          %v4366 = vunpack.c.l.b16 %v4286
          %v4367 = vunpack.c.l.b16 %v4287
          %v4368 = vunpack.c.l.b16 %v4288
          %v4369 = vunpack.c.l.b16 %v4289
          %v4370 = vunpack.c.l.b16 %v4290
          %v4371 = vunpack.c.l.b16 %v4291
          %v4372 = vunpack.c.l.b16 %v4292
          %v4373 = vunpack.c.l.b16 %v4293
          %v4374 = vunpack.c.l.b16 %v4294
          %v4375 = vunpack.c.l.b16 %v4295
          %v4376 = vunpack.c.l.b16 %v4296
          %v4377 = vunpack.c.l.b16 %v4297
          %v4378 = vunpack.c.l.b16 %v4298
          %v4379 = vunpack.c.l.b16 %v4299
          %v4380 = vunpack.c.l.b16 %v4300
          %v4381 = vunpack.c.l.b16 %v4301
          %v4382 = vunpack.c.l.b16 %v4302
          %v4383 = vunpack.c.l.b16 %v4303
          %v4384 = vunpack.c.l.b16 %v4304
          %v4385 = vunpack.c.l.b16 %v4305
          %v4386 = vpack.c.b16 %v4355, %v4354
          %v4387 = vpack.c.b16 %v4357, %v4356
          %v4388 = vpack.c.b16 %v4359, %v4358
          %v4389 = vpack.c.b16 %v4361, %v4360
          %v4390 = vpack.c.b16 %v4363, %v4362
          %v4391 = vpack.c.b16 %v4365, %v4364
          %v4392 = vpack.c.b16 %v4367, %v4366
          %v4393 = vpack.c.b16 %v4369, %v4368
          %v4394 = vpack.c.b16 %v4371, %v4370
          %v4395 = vpack.c.b16 %v4373, %v4372
          %v4396 = vpack.c.b16 %v4375, %v4374
          %v4397 = vpack.c.b16 %v4377, %v4376
          %v4398 = vpack.c.b16 %v4379, %v4378
          %v4399 = vpack.c.b16 %v4381, %v4380
          %v4400 = vpack.c.b16 %v4383, %v4382
          %v4401 = vpack.c.b16 %v4385, %v4384
          %v4434 = vunpack.c.l.b16 %v4306
          %v4435 = vunpack.c.l.b16 %v4307
          %v4436 = vunpack.c.l.b16 %v4308
          %v4437 = vunpack.c.l.b16 %v4309
          %v4438 = vunpack.c.l.b16 %v4310
          %v4439 = vunpack.c.l.b16 %v4311
          %v4440 = vunpack.c.l.b16 %v4312
          %v4441 = vunpack.c.l.b16 %v4313
          %v4442 = vunpack.c.l.b16 %v4314
          %v4443 = vunpack.c.l.b16 %v4315
          %v4444 = vunpack.c.l.b16 %v4316
          %v4445 = vunpack.c.l.b16 %v4317
          %v4446 = vunpack.c.l.b16 %v4318
          %v4447 = vunpack.c.l.b16 %v4319
          %v4448 = vunpack.c.l.b16 %v4320
          %v4449 = vunpack.c.l.b16 %v4321
          %v4450 = vpack.c.b16 %v4435, %v4434
          %v4451 = vpack.c.b16 %v4437, %v4436
          %v4452 = vpack.c.b16 %v4439, %v4438
          %v4453 = vpack.c.b16 %v4441, %v4440
          %v4454 = vpack.c.b16 %v4443, %v4442
          %v4455 = vpack.c.b16 %v4445, %v4444
          %v4456 = vpack.c.b16 %v4447, %v4446
          %v4457 = vpack.c.b16 %v4449, %v4448
          %4466 = vmatprep.subr.bf16.mxu0 0
          %4467 = vmatpush1.bf16.msra.mxu0 %v4450
          %4468 = vmatprep.subr.bf16.mxu0 0
          %4469 = vmatpush1.bf16.msra.mxu0 %v4451
          %4470 = vmatprep.subr.bf16.mxu0 0
          %4471 = vmatpush1.bf16.msra.mxu0 %v4452
          %4472 = vmatprep.subr.bf16.mxu0 0
          %4473 = vmatpush1.bf16.msra.mxu0 %v4453
          %4474 = vmatprep.subr.bf16.mxu0 0
          %4475 = vmatpush1.bf16.msra.mxu0 %v4454
          %4476 = vmatprep.subr.bf16.mxu0 0
          %4477 = vmatpush1.bf16.msra.mxu0 %v4455
          %4478 = vmatprep.subr.bf16.mxu0 0
          %4479 = vmatpush1.bf16.msra.mxu0 %v4456
          %4480 = vmatprep.subr.bf16.mxu0 0
          %4481 = vmatpush1.bf16.msra.mxu0 %v4457
          %4482 = vmatprep.subr.bf16.mxu0 0
          %4483 = vmatpush1.bf16.msra.mxu0 0
          %4484 = vmatprep.subr.bf16.mxu0 0
          %4485 = vmatpush1.bf16.msra.mxu0 0
          %4486 = vmatprep.subr.bf16.mxu0 0
          %4487 = vmatpush1.bf16.msra.mxu0 0
          %4488 = vmatprep.subr.bf16.mxu0 0
          %4489 = vmatpush1.bf16.msra.mxu0 0
          %4490 = vmatprep.subr.bf16.mxu0 0
          %4491 = vmatpush1.bf16.msra.mxu0 0
          %4492 = vmatprep.subr.bf16.mxu0 0
          %4493 = vmatpush1.bf16.msra.mxu0 0
          %4494 = vmatprep.subr.bf16.mxu0 0
          %4495 = vmatpush1.bf16.msra.mxu0 0
          %4496 = vmatprep.subr.bf16.mxu0 0
          %4497 = vmatpush1.bf16.msra.mxu0 0
          %4498 = vmatprep.mubr.bf16.mxu0 0
          %4499 = vmatmul.mubr.bf16.gmra.mrb[0].mxu0 %v4386
          %v4500 = vpop.f32.mrb[0].mxu0
          %v4501 = vadd.f32 0.0, %v4500
          %v4502 = vpop.f32.mrb[0].mxu0
          %v4503 = vpop.f32.mrb[0].mxu0
          %v4504 = vadd.f32 0.0, %v4503
          %v4505 = vpop.f32.mrb[0].mxu0
          %4506 = vmatprep.mubr.bf16.mxu0 0
          %4507 = vmatmul.mubr.bf16.gmra.mrb[0].mxu0 %v4387
          %v4508 = vpop.f32.mrb[0].mxu0
          %v4509 = vadd.f32 0.0, %v4508
          %v4510 = vpop.f32.mrb[0].mxu0
          %v4511 = vpop.f32.mrb[0].mxu0
          %v4512 = vadd.f32 0.0, %v4511
          %v4513 = vpop.f32.mrb[0].mxu0
          %4514 = vmatprep.mubr.bf16.mxu0 0
          %4515 = vmatmul.mubr.bf16.gmra.mrb[0].mxu0 %v4388
          %v4516 = vpop.f32.mrb[0].mxu0
          %v4517 = vadd.f32 0.0, %v4516
          %v4518 = vpop.f32.mrb[0].mxu0
          %v4519 = vpop.f32.mrb[0].mxu0
          %v4520 = vadd.f32 0.0, %v4519
          %v4521 = vpop.f32.mrb[0].mxu0
          %4522 = vmatprep.mubr.bf16.mxu0 0
          %4523 = vmatmul.mubr.bf16.gmra.mrb[0].mxu0 %v4389
          %v4524 = vpop.f32.mrb[0].mxu0
          %v4525 = vadd.f32 0.0, %v4524
          %v4526 = vpop.f32.mrb[0].mxu0
          %v4527 = vpop.f32.mrb[0].mxu0
          %v4528 = vadd.f32 0.0, %v4527
          %v4529 = vpop.f32.mrb[0].mxu0
          %4530 = vmatprep.mubr.bf16.mxu0 0
          %4531 = vmatmul.mubr.bf16.gmra.mrb[0].mxu0 %v4390
          %v4532 = vpop.f32.mrb[0].mxu0
          %v4533 = vadd.f32 0.0, %v4532
          %v4534 = vpop.f32.mrb[0].mxu0
          %v4535 = vpop.f32.mrb[0].mxu0
          %v4536 = vadd.f32 0.0, %v4535
          %v4537 = vpop.f32.mrb[0].mxu0
          %4538 = vmatprep.mubr.bf16.mxu0 0
          %4539 = vmatmul.mubr.bf16.gmra.mrb[0].mxu0 %v4391
          %v4540 = vpop.f32.mrb[0].mxu0
          %v4541 = vadd.f32 0.0, %v4540
          %v4542 = vpop.f32.mrb[0].mxu0
          %v4543 = vpop.f32.mrb[0].mxu0
          %v4544 = vadd.f32 0.0, %v4543
          %v4545 = vpop.f32.mrb[0].mxu0
          %4546 = vmatprep.mubr.bf16.mxu0 0
          %4547 = vmatmul.mubr.bf16.gmra.mrb[0].mxu0 %v4392
          %v4548 = vpop.f32.mrb[0].mxu0
          %v4549 = vadd.f32 0.0, %v4548
          %v4550 = vpop.f32.mrb[0].mxu0
          %v4551 = vpop.f32.mrb[0].mxu0
          %v4552 = vadd.f32 0.0, %v4551
          %v4553 = vpop.f32.mrb[0].mxu0
          %4554 = vmatprep.mubr.bf16.mxu0 0
          %4555 = vmatmul.mubr.bf16.gmra.mrb[0].mxu0 %v4393
          %v4556 = vpop.f32.mrb[0].mxu0
          %v4557 = vadd.f32 0.0, %v4556
          %v4558 = vpop.f32.mrb[0].mxu0
          %v4559 = vpop.f32.mrb[0].mxu0
          %v4560 = vadd.f32 0.0, %v4559
          %v4561 = vpop.f32.mrb[0].mxu0
          %4562 = vmatprep.mubr.bf16.mxu0 0
          %4563 = vmatmul.mubr.bf16.gmra.mrb[0].mxu0 %v4394
          %v4564 = vpop.f32.mrb[0].mxu0
          %v4565 = vadd.f32 0.0, %v4564
          %v4566 = vpop.f32.mrb[0].mxu0
          %v4567 = vpop.f32.mrb[0].mxu0
          %v4568 = vadd.f32 0.0, %v4567
          %v4569 = vpop.f32.mrb[0].mxu0
          %4570 = vmatprep.mubr.bf16.mxu0 0
          %4571 = vmatmul.mubr.bf16.gmra.mrb[0].mxu0 %v4395
          %v4572 = vpop.f32.mrb[0].mxu0
          %v4573 = vadd.f32 0.0, %v4572
          %v4574 = vpop.f32.mrb[0].mxu0
          %v4575 = vpop.f32.mrb[0].mxu0
          %v4576 = vadd.f32 0.0, %v4575
          %v4577 = vpop.f32.mrb[0].mxu0
          %4578 = vmatprep.mubr.bf16.mxu0 0
          %4579 = vmatmul.mubr.bf16.gmra.mrb[0].mxu0 %v4396
          %v4580 = vpop.f32.mrb[0].mxu0
          %v4581 = vadd.f32 0.0, %v4580
          %v4582 = vpop.f32.mrb[0].mxu0
          %v4583 = vpop.f32.mrb[0].mxu0
          %v4584 = vadd.f32 0.0, %v4583
          %v4585 = vpop.f32.mrb[0].mxu0
          %4586 = vmatprep.mubr.bf16.mxu0 0
          %4587 = vmatmul.mubr.bf16.gmra.mrb[0].mxu0 %v4397
          %v4588 = vpop.f32.mrb[0].mxu0
          %v4589 = vadd.f32 0.0, %v4588
          %v4590 = vpop.f32.mrb[0].mxu0
          %v4591 = vpop.f32.mrb[0].mxu0
          %v4592 = vadd.f32 0.0, %v4591
          %v4593 = vpop.f32.mrb[0].mxu0
          %4594 = vmatprep.mubr.bf16.mxu0 0
          %4595 = vmatmul.mubr.bf16.gmra.mrb[0].mxu0 %v4398
          %v4596 = vpop.f32.mrb[0].mxu0
          %v4597 = vadd.f32 0.0, %v4596
          %v4598 = vpop.f32.mrb[0].mxu0
          %v4599 = vpop.f32.mrb[0].mxu0
          %v4600 = vadd.f32 0.0, %v4599
          %v4601 = vpop.f32.mrb[0].mxu0
          %4602 = vmatprep.mubr.bf16.mxu0 0
          %4603 = vmatmul.mubr.bf16.gmra.mrb[0].mxu0 %v4399
          %v4604 = vpop.f32.mrb[0].mxu0
          %v4605 = vadd.f32 0.0, %v4604
          %v4606 = vpop.f32.mrb[0].mxu0
          %v4607 = vpop.f32.mrb[0].mxu0
          %v4608 = vadd.f32 0.0, %v4607
          %v4609 = vpop.f32.mrb[0].mxu0
          %4610 = vmatprep.mubr.bf16.mxu0 0
          %4611 = vmatmul.mubr.bf16.gmra.mrb[0].mxu0 %v4400
          %v4612 = vpop.f32.mrb[0].mxu0
          %v4613 = vadd.f32 0.0, %v4612
          %v4614 = vpop.f32.mrb[0].mxu0
          %v4615 = vpop.f32.mrb[0].mxu0
          %v4616 = vadd.f32 0.0, %v4615
          %v4617 = vpop.f32.mrb[0].mxu0
          %4618 = vmatprep.mubr.bf16.mxu0 0
          %4619 = vmatmul.mubr.bf16.gmra.mrb[0].mxu0 %v4401
          %v4620 = vpop.f32.mrb[0].mxu0
          %v4621 = vadd.f32 0.0, %v4620
          %v4622 = vpop.f32.mrb[0].mxu0
          %v4623 = vpop.f32.mrb[0].mxu0
          %v4624 = vadd.f32 0.0, %v4623
          %v4625 = vpop.f32.mrb[0].mxu0
          %4626 = vdwg.mxu0
          %v4627 = vld [vmem:[#allocation3] sm:$0x1]
          %v4628 = vlaneseq
          %v4629 = vshrl.u32 %v4628, 7
          %v4630 = vsub.s32 0, %v4629
          %v4631 = vrot.slane %v4627, %v4630
          %v4632 = vmul.f32 %v4501, %v4631
          %v4633 = vmul.f32 %v4504, %v4631
          %v4634 = vmul.f32 %v4509, %v4631
          %v4635 = vmul.f32 %v4512, %v4631
          %v4636 = vmul.f32 %v4517, %v4631
          %v4637 = vmul.f32 %v4520, %v4631
          %v4638 = vmul.f32 %v4525, %v4631
          %v4639 = vmul.f32 %v4528, %v4631
          %v4640 = vmul.f32 %v4533, %v4631
          %v4641 = vmul.f32 %v4536, %v4631
          %v4642 = vmul.f32 %v4541, %v4631
          %v4643 = vmul.f32 %v4544, %v4631
          %v4644 = vmul.f32 %v4549, %v4631
          %v4645 = vmul.f32 %v4552, %v4631
          %v4646 = vmul.f32 %v4557, %v4631
          %v4647 = vmul.f32 %v4560, %v4631
          %v4648 = vmul.f32 %v4565, %v4631
          %v4649 = vmul.f32 %v4568, %v4631
          %v4650 = vmul.f32 %v4573, %v4631
          %v4651 = vmul.f32 %v4576, %v4631
          %v4652 = vmul.f32 %v4581, %v4631
          %v4653 = vmul.f32 %v4584, %v4631
          %v4654 = vmul.f32 %v4589, %v4631
          %v4655 = vmul.f32 %v4592, %v4631
          %v4656 = vmul.f32 %v4597, %v4631
          %v4657 = vmul.f32 %v4600, %v4631
          %v4658 = vmul.f32 %v4605, %v4631
          %v4659 = vmul.f32 %v4608, %v4631
          %v4660 = vmul.f32 %v4613, %v4631
          %v4661 = vmul.f32 %v4616, %v4631
          %v4662 = vmul.f32 %v4621, %v4631
          %v4663 = vmul.f32 %v4624, %v4631
          %v4664 = vld [vmem:[#allocation4] sm:$0x1]
          %v4665 = vlaneseq
          %v4666 = vshrl.u32 %v4665, 7
          %v4667 = vsub.s32 0, %v4666
          %v4668 = vrot.slane %v4664, %v4667
          %v4669 = vadd.f32 %v4632, %v4668
          %v4670 = vadd.f32 %v4633, %v4668
          %v4671 = vadd.f32 %v4634, %v4668
          %v4672 = vadd.f32 %v4635, %v4668
          %v4673 = vadd.f32 %v4636, %v4668
          %v4674 = vadd.f32 %v4637, %v4668
          %v4675 = vadd.f32 %v4638, %v4668
          %v4676 = vadd.f32 %v4639, %v4668
          %v4677 = vadd.f32 %v4640, %v4668
          %v4678 = vadd.f32 %v4641, %v4668
          %v4679 = vadd.f32 %v4642, %v4668
          %v4680 = vadd.f32 %v4643, %v4668
          %v4681 = vadd.f32 %v4644, %v4668
          %v4682 = vadd.f32 %v4645, %v4668
          %v4683 = vadd.f32 %v4646, %v4668
          %v4684 = vadd.f32 %v4647, %v4668
          %v4685 = vadd.f32 %v4648, %v4668
          %v4686 = vadd.f32 %v4649, %v4668
          %v4687 = vadd.f32 %v4650, %v4668
          %v4688 = vadd.f32 %v4651, %v4668
          %v4689 = vadd.f32 %v4652, %v4668
          %v4690 = vadd.f32 %v4653, %v4668
          %v4691 = vadd.f32 %v4654, %v4668
          %v4692 = vadd.f32 %v4655, %v4668
          %v4693 = vadd.f32 %v4656, %v4668
          %v4694 = vadd.f32 %v4657, %v4668
          %v4695 = vadd.f32 %v4658, %v4668
          %v4696 = vadd.f32 %v4659, %v4668
          %v4697 = vadd.f32 %v4660, %v4668
          %v4698 = vadd.f32 %v4661, %v4668
          %v4699 = vadd.f32 %v4662, %v4668
          %v4700 = vadd.f32 %v4663, %v4668
          %v4701 = vmax.f32 %v4669, 0.0
          %v4702 = vmax.f32 %v4670, 0.0
          %v4703 = vmax.f32 %v4671, 0.0
          %v4704 = vmax.f32 %v4672, 0.0
          %v4705 = vmax.f32 %v4673, 0.0
          %v4706 = vmax.f32 %v4674, 0.0
          %v4707 = vmax.f32 %v4675, 0.0
          %v4708 = vmax.f32 %v4676, 0.0
          %v4709 = vmax.f32 %v4677, 0.0
          %v4710 = vmax.f32 %v4678, 0.0
          %v4711 = vmax.f32 %v4679, 0.0
          %v4712 = vmax.f32 %v4680, 0.0
          %v4713 = vmax.f32 %v4681, 0.0
          %v4714 = vmax.f32 %v4682, 0.0
          %v4715 = vmax.f32 %v4683, 0.0
          %v4716 = vmax.f32 %v4684, 0.0
          %v4717 = vmax.f32 %v4685, 0.0
          %v4718 = vmax.f32 %v4686, 0.0
          %v4719 = vmax.f32 %v4687, 0.0
          %v4720 = vmax.f32 %v4688, 0.0
          %v4721 = vmax.f32 %v4689, 0.0
          %v4722 = vmax.f32 %v4690, 0.0
          %v4723 = vmax.f32 %v4691, 0.0
          %v4724 = vmax.f32 %v4692, 0.0
          %v4725 = vmax.f32 %v4693, 0.0
          %v4726 = vmax.f32 %v4694, 0.0
          %v4727 = vmax.f32 %v4695, 0.0
          %v4728 = vmax.f32 %v4696, 0.0
          %v4729 = vmax.f32 %v4697, 0.0
          %v4730 = vmax.f32 %v4698, 0.0
          %v4731 = vmax.f32 %v4699, 0.0
          %v4732 = vmax.f32 %v4700, 0.0
          %v4733 = vpack.c.bf16 %v4702, %v4701
          %v4734 = vpack.c.bf16 %v4704, %v4703
          %v4735 = vpack.c.bf16 %v4706, %v4705
          %v4736 = vpack.c.bf16 %v4708, %v4707
          %v4737 = vpack.c.bf16 %v4710, %v4709
          %v4738 = vpack.c.bf16 %v4712, %v4711
          %v4739 = vpack.c.bf16 %v4714, %v4713
          %v4740 = vpack.c.bf16 %v4716, %v4715
          %v4741 = vpack.c.bf16 %v4718, %v4717
          %v4742 = vpack.c.bf16 %v4720, %v4719
          %v4743 = vpack.c.bf16 %v4722, %v4721
          %v4744 = vpack.c.bf16 %v4724, %v4723
          %v4745 = vpack.c.bf16 %v4726, %v4725
          %v4746 = vpack.c.bf16 %v4728, %v4727
          %v4747 = vpack.c.bf16 %v4730, %v4729
          %v4748 = vpack.c.bf16 %v4732, %v4731
          %v4749 = vld [vmem:[#allocation10] sm:$0xf]
          %v4750 = vld [vmem:[#allocation10 + $0x4] sm:$0xf]
          %v4751 = vld [vmem:[#allocation10 + $0x8] sm:$0xf]
          %v4752 = vld [vmem:[#allocation10 + $0xc] sm:$0xf]
          %v4753 = vld [vmem:[#allocation10 + $0x10] sm:$0xf]
          %v4754 = vld [vmem:[#allocation10 + $0x14] sm:$0xf]
          %v4755 = vld [vmem:[#allocation10 + $0x18] sm:$0xf]
          %v4756 = vld [vmem:[#allocation10 + $0x1c] sm:$0xf]
          %v4757 = vld [vmem:[#allocation10 + $0x20] sm:$0xf]
          %v4758 = vld [vmem:[#allocation10 + $0x24] sm:$0xf]
          %v4759 = vld [vmem:[#allocation10 + $0x28] sm:$0xf]
          %v4760 = vld [vmem:[#allocation10 + $0x2c] sm:$0xf]
          %v4761 = vld [vmem:[#allocation10 + $0x30] sm:$0xf]
          %v4762 = vld [vmem:[#allocation10 + $0x34] sm:$0xf]
          %v4763 = vld [vmem:[#allocation10 + $0x38] sm:$0xf]
          %v4764 = vld [vmem:[#allocation10 + $0x3c] sm:$0xf]
          %v4781 = vunpack.c.l.b16 %v4749
          %v4782 = vunpack.c.l.b16 %v4750
          %v4783 = vunpack.c.l.b16 %v4751
          %v4784 = vunpack.c.l.b16 %v4752
          %v4785 = vunpack.c.l.b16 %v4753
          %v4786 = vunpack.c.l.b16 %v4754
          %v4787 = vunpack.c.l.b16 %v4755
          %v4788 = vunpack.c.l.b16 %v4756
          %v4789 = vunpack.c.l.b16 %v4757
          %v4790 = vunpack.c.l.b16 %v4758
          %v4791 = vunpack.c.l.b16 %v4759
          %v4792 = vunpack.c.l.b16 %v4760
          %v4793 = vunpack.c.l.b16 %v4761
          %v4794 = vunpack.c.l.b16 %v4762
          %v4795 = vunpack.c.l.b16 %v4763
          %v4796 = vunpack.c.l.b16 %v4764
          %v4797 = vpack.c.b16 %v4782, %v4781
          %v4798 = vpack.c.b16 %v4784, %v4783
          %v4799 = vpack.c.b16 %v4786, %v4785
          %v4800 = vpack.c.b16 %v4788, %v4787
          %v4801 = vpack.c.b16 %v4790, %v4789
          %v4802 = vpack.c.b16 %v4792, %v4791
          %v4803 = vpack.c.b16 %v4794, %v4793
          %v4804 = vpack.c.b16 %v4796, %v4795
          %4813 = vmatprep.subr.bf16.mxu0 0
          %4814 = vmatpush1.bf16.msra.mxu0 %v4797
          %4815 = vmatprep.subr.bf16.mxu0 0
          %4816 = vmatpush1.bf16.msra.mxu0 %v4798
          %4817 = vmatprep.subr.bf16.mxu0 0
          %4818 = vmatpush1.bf16.msra.mxu0 %v4799
          %4819 = vmatprep.subr.bf16.mxu0 0
          %4820 = vmatpush1.bf16.msra.mxu0 %v4800
          %4821 = vmatprep.subr.bf16.mxu0 0
          %4822 = vmatpush1.bf16.msra.mxu0 %v4801
          %4823 = vmatprep.subr.bf16.mxu0 0
          %4824 = vmatpush1.bf16.msra.mxu0 %v4802
          %4825 = vmatprep.subr.bf16.mxu0 0
          %4826 = vmatpush1.bf16.msra.mxu0 %v4803
          %4827 = vmatprep.subr.bf16.mxu0 0
          %4828 = vmatpush1.bf16.msra.mxu0 %v4804
          %4829 = vmatprep.subr.bf16.mxu0 0
          %4830 = vmatpush1.bf16.msra.mxu0 0
          %4831 = vmatprep.subr.bf16.mxu0 0
          %4832 = vmatpush1.bf16.msra.mxu0 0
          %4833 = vmatprep.subr.bf16.mxu0 0
          %4834 = vmatpush1.bf16.msra.mxu0 0
          %4835 = vmatprep.subr.bf16.mxu0 0
          %4836 = vmatpush1.bf16.msra.mxu0 0
          %4837 = vmatprep.subr.bf16.mxu0 0
          %4838 = vmatpush1.bf16.msra.mxu0 0
          %4839 = vmatprep.subr.bf16.mxu0 0
          %4840 = vmatpush1.bf16.msra.mxu0 0
          %4841 = vmatprep.subr.bf16.mxu0 0
          %4842 = vmatpush1.bf16.msra.mxu0 0
          %4843 = vmatprep.subr.bf16.mxu0 0
          %4844 = vmatpush1.bf16.msra.mxu0 0
          %4845 = vmatprep.mubr.bf16.mxu0 0
          %4846 = vmatmul.mubr.bf16.gmra.mrb[0].mxu0 %v4733
          %v4847 = vpop.f32.mrb[0].mxu0
          %v4848 = vadd.f32 0.0, %v4847
          %v4849 = vpop.f32.mrb[0].mxu0
          %v4850 = vpop.f32.mrb[0].mxu0
          %v4851 = vadd.f32 0.0, %v4850
          %v4852 = vpop.f32.mrb[0].mxu0
          %4853 = vmatprep.mubr.bf16.mxu0 0
          %4854 = vmatmul.mubr.bf16.gmra.mrb[0].mxu0 %v4734
          %v4855 = vpop.f32.mrb[0].mxu0
          %v4856 = vadd.f32 0.0, %v4855
          %v4857 = vpop.f32.mrb[0].mxu0
          %v4858 = vpop.f32.mrb[0].mxu0
          %v4859 = vadd.f32 0.0, %v4858
          %v4860 = vpop.f32.mrb[0].mxu0
          %4861 = vmatprep.mubr.bf16.mxu0 0
          %4862 = vmatmul.mubr.bf16.gmra.mrb[0].mxu0 %v4735
          %v4863 = vpop.f32.mrb[0].mxu0
          %v4864 = vadd.f32 0.0, %v4863
          %v4865 = vpop.f32.mrb[0].mxu0
          %v4866 = vpop.f32.mrb[0].mxu0
          %v4867 = vadd.f32 0.0, %v4866
          %v4868 = vpop.f32.mrb[0].mxu0
          %4869 = vmatprep.mubr.bf16.mxu0 0
          %4870 = vmatmul.mubr.bf16.gmra.mrb[0].mxu0 %v4736
          %v4871 = vpop.f32.mrb[0].mxu0
          %v4872 = vadd.f32 0.0, %v4871
          %v4873 = vpop.f32.mrb[0].mxu0
          %v4874 = vpop.f32.mrb[0].mxu0
          %v4875 = vadd.f32 0.0, %v4874
          %v4876 = vpop.f32.mrb[0].mxu0
          %4877 = vmatprep.mubr.bf16.mxu0 0
          %4878 = vmatmul.mubr.bf16.gmra.mrb[0].mxu0 %v4737
          %v4879 = vpop.f32.mrb[0].mxu0
          %v4880 = vadd.f32 0.0, %v4879
          %v4881 = vpop.f32.mrb[0].mxu0
          %v4882 = vpop.f32.mrb[0].mxu0
          %v4883 = vadd.f32 0.0, %v4882
          %v4884 = vpop.f32.mrb[0].mxu0
          %4885 = vmatprep.mubr.bf16.mxu0 0
          %4886 = vmatmul.mubr.bf16.gmra.mrb[0].mxu0 %v4738
          %v4887 = vpop.f32.mrb[0].mxu0
          %v4888 = vadd.f32 0.0, %v4887
          %v4889 = vpop.f32.mrb[0].mxu0
          %v4890 = vpop.f32.mrb[0].mxu0
          %v4891 = vadd.f32 0.0, %v4890
          %v4892 = vpop.f32.mrb[0].mxu0
          %4893 = vmatprep.mubr.bf16.mxu0 0
          %4894 = vmatmul.mubr.bf16.gmra.mrb[0].mxu0 %v4739
          %v4895 = vpop.f32.mrb[0].mxu0
          %v4896 = vadd.f32 0.0, %v4895
          %v4897 = vpop.f32.mrb[0].mxu0
          %v4898 = vpop.f32.mrb[0].mxu0
          %v4899 = vadd.f32 0.0, %v4898
          %v4900 = vpop.f32.mrb[0].mxu0
          %4901 = vmatprep.mubr.bf16.mxu0 0
          %4902 = vmatmul.mubr.bf16.gmra.mrb[0].mxu0 %v4740
          %v4903 = vpop.f32.mrb[0].mxu0
          %v4904 = vadd.f32 0.0, %v4903
          %v4905 = vpop.f32.mrb[0].mxu0
          %v4906 = vpop.f32.mrb[0].mxu0
          %v4907 = vadd.f32 0.0, %v4906
          %v4908 = vpop.f32.mrb[0].mxu0
          %4909 = vmatprep.mubr.bf16.mxu0 0
          %4910 = vmatmul.mubr.bf16.gmra.mrb[0].mxu0 %v4741
          %v4911 = vpop.f32.mrb[0].mxu0
          %v4912 = vadd.f32 0.0, %v4911
          %v4913 = vpop.f32.mrb[0].mxu0
          %v4914 = vpop.f32.mrb[0].mxu0
          %v4915 = vadd.f32 0.0, %v4914
          %v4916 = vpop.f32.mrb[0].mxu0
          %4917 = vmatprep.mubr.bf16.mxu0 0
          %4918 = vmatmul.mubr.bf16.gmra.mrb[0].mxu0 %v4742
          %v4919 = vpop.f32.mrb[0].mxu0
          %v4920 = vadd.f32 0.0, %v4919
          %v4921 = vpop.f32.mrb[0].mxu0
          %v4922 = vpop.f32.mrb[0].mxu0
          %v4923 = vadd.f32 0.0, %v4922
          %v4924 = vpop.f32.mrb[0].mxu0
          %4925 = vmatprep.mubr.bf16.mxu0 0
          %4926 = vmatmul.mubr.bf16.gmra.mrb[0].mxu0 %v4743
          %v4927 = vpop.f32.mrb[0].mxu0
          %v4928 = vadd.f32 0.0, %v4927
          %v4929 = vpop.f32.mrb[0].mxu0
          %v4930 = vpop.f32.mrb[0].mxu0
          %v4931 = vadd.f32 0.0, %v4930
          %v4932 = vpop.f32.mrb[0].mxu0
          %4933 = vmatprep.mubr.bf16.mxu0 0
          %4934 = vmatmul.mubr.bf16.gmra.mrb[0].mxu0 %v4744
          %v4935 = vpop.f32.mrb[0].mxu0
          %v4936 = vadd.f32 0.0, %v4935
          %v4937 = vpop.f32.mrb[0].mxu0
          %v4938 = vpop.f32.mrb[0].mxu0
          %v4939 = vadd.f32 0.0, %v4938
          %v4940 = vpop.f32.mrb[0].mxu0
          %4941 = vmatprep.mubr.bf16.mxu0 0
          %4942 = vmatmul.mubr.bf16.gmra.mrb[0].mxu0 %v4745
          %v4943 = vpop.f32.mrb[0].mxu0
          %v4944 = vadd.f32 0.0, %v4943
          %v4945 = vpop.f32.mrb[0].mxu0
          %v4946 = vpop.f32.mrb[0].mxu0
          %v4947 = vadd.f32 0.0, %v4946
          %v4948 = vpop.f32.mrb[0].mxu0
          %4949 = vmatprep.mubr.bf16.mxu0 0
          %4950 = vmatmul.mubr.bf16.gmra.mrb[0].mxu0 %v4746
          %v4951 = vpop.f32.mrb[0].mxu0
          %v4952 = vadd.f32 0.0, %v4951
          %v4953 = vpop.f32.mrb[0].mxu0
          %v4954 = vpop.f32.mrb[0].mxu0
          %v4955 = vadd.f32 0.0, %v4954
          %v4956 = vpop.f32.mrb[0].mxu0
          %4957 = vmatprep.mubr.bf16.mxu0 0
          %4958 = vmatmul.mubr.bf16.gmra.mrb[0].mxu0 %v4747
          %v4959 = vpop.f32.mrb[0].mxu0
          %v4960 = vadd.f32 0.0, %v4959
          %v4961 = vpop.f32.mrb[0].mxu0
          %v4962 = vpop.f32.mrb[0].mxu0
          %v4963 = vadd.f32 0.0, %v4962
          %v4964 = vpop.f32.mrb[0].mxu0
          %4965 = vmatprep.mubr.bf16.mxu0 0
          %4966 = vmatmul.mubr.bf16.gmra.mrb[0].mxu0 %v4748
          %v4967 = vpop.f32.mrb[0].mxu0
          %v4968 = vadd.f32 0.0, %v4967
          %v4969 = vpop.f32.mrb[0].mxu0
          %v4970 = vpop.f32.mrb[0].mxu0
          %v4971 = vadd.f32 0.0, %v4970
          %v4972 = vpop.f32.mrb[0].mxu0
          %4973 = vdwg.mxu0
          %v4974 = vld [vmem:[#allocation3 + $0x1] sm:$0x1]
          %v4975 = vlaneseq
          %v4976 = vshrl.u32 %v4975, 7
          %v4977 = vsub.s32 0, %v4976
          %v4978 = vrot.slane %v4974, %v4977
          %v4979 = vmul.f32 %v4848, %v4978
          %v4980 = vmul.f32 %v4851, %v4978
          %v4981 = vmul.f32 %v4856, %v4978
          %v4982 = vmul.f32 %v4859, %v4978
          %v4983 = vmul.f32 %v4864, %v4978
          %v4984 = vmul.f32 %v4867, %v4978
          %v4985 = vmul.f32 %v4872, %v4978
          %v4986 = vmul.f32 %v4875, %v4978
          %v4987 = vmul.f32 %v4880, %v4978
          %v4988 = vmul.f32 %v4883, %v4978
          %v4989 = vmul.f32 %v4888, %v4978
          %v4990 = vmul.f32 %v4891, %v4978
          %v4991 = vmul.f32 %v4896, %v4978
          %v4992 = vmul.f32 %v4899, %v4978
          %v4993 = vmul.f32 %v4904, %v4978
          %v4994 = vmul.f32 %v4907, %v4978
          %v4995 = vmul.f32 %v4912, %v4978
          %v4996 = vmul.f32 %v4915, %v4978
          %v4997 = vmul.f32 %v4920, %v4978
          %v4998 = vmul.f32 %v4923, %v4978
          %v4999 = vmul.f32 %v4928, %v4978
          %v5000 = vmul.f32 %v4931, %v4978
          %v5001 = vmul.f32 %v4936, %v4978
          %v5002 = vmul.f32 %v4939, %v4978
          %v5003 = vmul.f32 %v4944, %v4978
          %v5004 = vmul.f32 %v4947, %v4978
          %v5005 = vmul.f32 %v4952, %v4978
          %v5006 = vmul.f32 %v4955, %v4978
          %v5007 = vmul.f32 %v4960, %v4978
          %v5008 = vmul.f32 %v4963, %v4978
          %v5009 = vmul.f32 %v4968, %v4978
          %v5010 = vmul.f32 %v4971, %v4978
          %v5011 = vld [vmem:[#allocation4 + $0x1] sm:$0x1]
          %v5012 = vlaneseq
          %v5013 = vshrl.u32 %v5012, 7
          %v5014 = vsub.s32 0, %v5013
          %v5015 = vrot.slane %v5011, %v5014
          %v5016 = vadd.f32 %v4979, %v5015
          %v5017 = vadd.f32 %v4980, %v5015
          %v5018 = vadd.f32 %v4981, %v5015
          %v5019 = vadd.f32 %v4982, %v5015
          %v5020 = vadd.f32 %v4983, %v5015
          %v5021 = vadd.f32 %v4984, %v5015
          %v5022 = vadd.f32 %v4985, %v5015
          %v5023 = vadd.f32 %v4986, %v5015
          %v5024 = vadd.f32 %v4987, %v5015
          %v5025 = vadd.f32 %v4988, %v5015
          %v5026 = vadd.f32 %v4989, %v5015
          %v5027 = vadd.f32 %v4990, %v5015
          %v5028 = vadd.f32 %v4991, %v5015
          %v5029 = vadd.f32 %v4992, %v5015
          %v5030 = vadd.f32 %v4993, %v5015
          %v5031 = vadd.f32 %v4994, %v5015
          %v5032 = vadd.f32 %v4995, %v5015
          %v5033 = vadd.f32 %v4996, %v5015
          %v5034 = vadd.f32 %v4997, %v5015
          %v5035 = vadd.f32 %v4998, %v5015
          %v5036 = vadd.f32 %v4999, %v5015
          %v5037 = vadd.f32 %v5000, %v5015
          %v5038 = vadd.f32 %v5001, %v5015
          %v5039 = vadd.f32 %v5002, %v5015
          %v5040 = vadd.f32 %v5003, %v5015
          %v5041 = vadd.f32 %v5004, %v5015
          %v5042 = vadd.f32 %v5005, %v5015
          %v5043 = vadd.f32 %v5006, %v5015
          %v5044 = vadd.f32 %v5007, %v5015
          %v5045 = vadd.f32 %v5008, %v5015
          %v5046 = vadd.f32 %v5009, %v5015
          %v5047 = vadd.f32 %v5010, %v5015
          %v5048 = vmax.f32 %v5016, 0.0
          %v5049 = vmax.f32 %v5017, 0.0
          %v5050 = vmax.f32 %v5018, 0.0
          %v5051 = vmax.f32 %v5019, 0.0
          %v5052 = vmax.f32 %v5020, 0.0
          %v5053 = vmax.f32 %v5021, 0.0
          %v5054 = vmax.f32 %v5022, 0.0
          %v5055 = vmax.f32 %v5023, 0.0
          %v5056 = vmax.f32 %v5024, 0.0
          %v5057 = vmax.f32 %v5025, 0.0
          %v5058 = vmax.f32 %v5026, 0.0
          %v5059 = vmax.f32 %v5027, 0.0
          %v5060 = vmax.f32 %v5028, 0.0
          %v5061 = vmax.f32 %v5029, 0.0
          %v5062 = vmax.f32 %v5030, 0.0
          %v5063 = vmax.f32 %v5031, 0.0
          %v5064 = vmax.f32 %v5032, 0.0
          %v5065 = vmax.f32 %v5033, 0.0
          %v5066 = vmax.f32 %v5034, 0.0
          %v5067 = vmax.f32 %v5035, 0.0
          %v5068 = vmax.f32 %v5036, 0.0
          %v5069 = vmax.f32 %v5037, 0.0
          %v5070 = vmax.f32 %v5038, 0.0
          %v5071 = vmax.f32 %v5039, 0.0
          %v5072 = vmax.f32 %v5040, 0.0
          %v5073 = vmax.f32 %v5041, 0.0
          %v5074 = vmax.f32 %v5042, 0.0
          %v5075 = vmax.f32 %v5043, 0.0
          %v5076 = vmax.f32 %v5044, 0.0
          %v5077 = vmax.f32 %v5045, 0.0
          %v5078 = vmax.f32 %v5046, 0.0
          %v5079 = vmax.f32 %v5047, 0.0
          %v5080 = vld [vmem:[#allocation3 + $0x2] sm:$0x1]
          %v5081 = vlaneseq
          %v5082 = vshrl.u32 %v5081, 7
          %v5083 = vsub.s32 0, %v5082
          %v5084 = vrot.slane %v5080, %v5083
          %v5085 = vmul.f32 %v5048, %v5084
          %v5086 = vmul.f32 %v5049, %v5084
          %v5087 = vmul.f32 %v5050, %v5084
          %v5088 = vmul.f32 %v5051, %v5084
          %v5089 = vmul.f32 %v5052, %v5084
          %v5090 = vmul.f32 %v5053, %v5084
          %v5091 = vmul.f32 %v5054, %v5084
          %v5092 = vmul.f32 %v5055, %v5084
          %v5093 = vmul.f32 %v5056, %v5084
          %v5094 = vmul.f32 %v5057, %v5084
          %v5095 = vmul.f32 %v5058, %v5084
          %v5096 = vmul.f32 %v5059, %v5084
          %v5097 = vmul.f32 %v5060, %v5084
          %v5098 = vmul.f32 %v5061, %v5084
          %v5099 = vmul.f32 %v5062, %v5084
          %v5100 = vmul.f32 %v5063, %v5084
          %v5101 = vmul.f32 %v5064, %v5084
          %v5102 = vmul.f32 %v5065, %v5084
          %v5103 = vmul.f32 %v5066, %v5084
          %v5104 = vmul.f32 %v5067, %v5084
          %v5105 = vmul.f32 %v5068, %v5084
          %v5106 = vmul.f32 %v5069, %v5084
          %v5107 = vmul.f32 %v5070, %v5084
          %v5108 = vmul.f32 %v5071, %v5084
          %v5109 = vmul.f32 %v5072, %v5084
          %v5110 = vmul.f32 %v5073, %v5084
          %v5111 = vmul.f32 %v5074, %v5084
          %v5112 = vmul.f32 %v5075, %v5084
          %v5113 = vmul.f32 %v5076, %v5084
          %v5114 = vmul.f32 %v5077, %v5084
          %v5115 = vmul.f32 %v5078, %v5084
          %v5116 = vmul.f32 %v5079, %v5084
          %v5117 = vld [vmem:[#allocation4 + $0x2] sm:$0x1]
          %v5118 = vlaneseq
          %v5119 = vshrl.u32 %v5118, 7
          %v5120 = vsub.s32 0, %v5119
          %v5121 = vrot.slane %v5117, %v5120
          %v5122 = vadd.f32 %v5085, %v5121
          %v5123 = vadd.f32 %v5086, %v5121
          %v5124 = vadd.f32 %v5087, %v5121
          %v5125 = vadd.f32 %v5088, %v5121
          %v5126 = vadd.f32 %v5089, %v5121
          %v5127 = vadd.f32 %v5090, %v5121
          %v5128 = vadd.f32 %v5091, %v5121
          %v5129 = vadd.f32 %v5092, %v5121
          %v5130 = vadd.f32 %v5093, %v5121
          %v5131 = vadd.f32 %v5094, %v5121
          %v5132 = vadd.f32 %v5095, %v5121
          %v5133 = vadd.f32 %v5096, %v5121
          %v5134 = vadd.f32 %v5097, %v5121
          %v5135 = vadd.f32 %v5098, %v5121
          %v5136 = vadd.f32 %v5099, %v5121
          %v5137 = vadd.f32 %v5100, %v5121
          %v5138 = vadd.f32 %v5101, %v5121
          %v5139 = vadd.f32 %v5102, %v5121
          %v5140 = vadd.f32 %v5103, %v5121
          %v5141 = vadd.f32 %v5104, %v5121
          %v5142 = vadd.f32 %v5105, %v5121
          %v5143 = vadd.f32 %v5106, %v5121
          %v5144 = vadd.f32 %v5107, %v5121
          %v5145 = vadd.f32 %v5108, %v5121
          %v5146 = vadd.f32 %v5109, %v5121
          %v5147 = vadd.f32 %v5110, %v5121
          %v5148 = vadd.f32 %v5111, %v5121
          %v5149 = vadd.f32 %v5112, %v5121
          %v5150 = vadd.f32 %v5113, %v5121
          %v5151 = vadd.f32 %v5114, %v5121
          %v5152 = vadd.f32 %v5115, %v5121
          %v5153 = vadd.f32 %v5116, %v5121
          %v5154 = vmax.f32 %v5122, 0.0
          %v5155 = vmax.f32 %v5123, 0.0
          %v5156 = vmax.f32 %v5124, 0.0
          %v5157 = vmax.f32 %v5125, 0.0
          %v5158 = vmax.f32 %v5126, 0.0
          %v5159 = vmax.f32 %v5127, 0.0
          %v5160 = vmax.f32 %v5128, 0.0
          %v5161 = vmax.f32 %v5129, 0.0
          %v5162 = vmax.f32 %v5130, 0.0
          %v5163 = vmax.f32 %v5131, 0.0
          %v5164 = vmax.f32 %v5132, 0.0
          %v5165 = vmax.f32 %v5133, 0.0
          %v5166 = vmax.f32 %v5134, 0.0
          %v5167 = vmax.f32 %v5135, 0.0
          %v5168 = vmax.f32 %v5136, 0.0
          %v5169 = vmax.f32 %v5137, 0.0
          %v5170 = vmax.f32 %v5138, 0.0
          %v5171 = vmax.f32 %v5139, 0.0
          %v5172 = vmax.f32 %v5140, 0.0
          %v5173 = vmax.f32 %v5141, 0.0
          %v5174 = vmax.f32 %v5142, 0.0
          %v5175 = vmax.f32 %v5143, 0.0
          %v5176 = vmax.f32 %v5144, 0.0
          %v5177 = vmax.f32 %v5145, 0.0
          %v5178 = vmax.f32 %v5146, 0.0
          %v5179 = vmax.f32 %v5147, 0.0
          %v5180 = vmax.f32 %v5148, 0.0
          %v5181 = vmax.f32 %v5149, 0.0
          %v5182 = vmax.f32 %v5150, 0.0
          %v5183 = vmax.f32 %v5151, 0.0
          %v5184 = vmax.f32 %v5152, 0.0
          %v5185 = vmax.f32 %v5153, 0.0
          %v5186 = vpack.c.bf16 %v5155, %v5154
          %v5187 = vpack.c.bf16 %v5157, %v5156
          %v5188 = vpack.c.bf16 %v5159, %v5158
          %v5189 = vpack.c.bf16 %v5161, %v5160
          %v5190 = vpack.c.bf16 %v5163, %v5162
          %v5191 = vpack.c.bf16 %v5165, %v5164
          %v5192 = vpack.c.bf16 %v5167, %v5166
          %v5193 = vpack.c.bf16 %v5169, %v5168
          %v5194 = vpack.c.bf16 %v5171, %v5170
          %v5195 = vpack.c.bf16 %v5173, %v5172
          %v5196 = vpack.c.bf16 %v5175, %v5174
          %v5197 = vpack.c.bf16 %v5177, %v5176
          %v5198 = vpack.c.bf16 %v5179, %v5178
          %v5199 = vpack.c.bf16 %v5181, %v5180
          %v5200 = vpack.c.bf16 %v5183, %v5182
          %v5201 = vpack.c.bf16 %v5185, %v5184
          %v5202 = vld [vmem:[#allocation11] sm:$0xf]
          %v5203 = vld [vmem:[#allocation11 + $0x4] sm:$0xf]
          %v5204 = vld [vmem:[#allocation11 + $0x8] sm:$0xf]
          %v5205 = vld [vmem:[#allocation11 + $0xc] sm:$0xf]
          %v5206 = vld [vmem:[#allocation11 + $0x10] sm:$0xf]
          %v5207 = vld [vmem:[#allocation11 + $0x14] sm:$0xf]
          %v5208 = vld [vmem:[#allocation11 + $0x18] sm:$0xf]
          %v5209 = vld [vmem:[#allocation11 + $0x1c] sm:$0xf]
          %v5210 = vld [vmem:[#allocation11 + $0x20] sm:$0xf]
          %v5211 = vld [vmem:[#allocation11 + $0x24] sm:$0xf]
          %v5212 = vld [vmem:[#allocation11 + $0x28] sm:$0xf]
          %v5213 = vld [vmem:[#allocation11 + $0x2c] sm:$0xf]
          %v5214 = vld [vmem:[#allocation11 + $0x30] sm:$0xf]
          %v5215 = vld [vmem:[#allocation11 + $0x34] sm:$0xf]
          %v5216 = vld [vmem:[#allocation11 + $0x38] sm:$0xf]
          %v5217 = vld [vmem:[#allocation11 + $0x3c] sm:$0xf]
          %v5234 = vunpack.c.l.b16 %v5202
          %v5235 = vunpack.c.l.b16 %v5203
          %v5236 = vunpack.c.l.b16 %v5204
          %v5237 = vunpack.c.l.b16 %v5205
          %v5238 = vunpack.c.l.b16 %v5206
          %v5239 = vunpack.c.l.b16 %v5207
          %v5240 = vunpack.c.l.b16 %v5208
          %v5241 = vunpack.c.l.b16 %v5209
          %v5242 = vunpack.c.l.b16 %v5210
          %v5243 = vunpack.c.l.b16 %v5211
          %v5244 = vunpack.c.l.b16 %v5212
          %v5245 = vunpack.c.l.b16 %v5213
          %v5246 = vunpack.c.l.b16 %v5214
          %v5247 = vunpack.c.l.b16 %v5215
          %v5248 = vunpack.c.l.b16 %v5216
          %v5249 = vunpack.c.l.b16 %v5217
          %v5250 = vpack.c.b16 %v5235, %v5234
          %v5251 = vpack.c.b16 %v5237, %v5236
          %v5252 = vpack.c.b16 %v5239, %v5238
          %v5253 = vpack.c.b16 %v5241, %v5240
          %v5254 = vpack.c.b16 %v5243, %v5242
          %v5255 = vpack.c.b16 %v5245, %v5244
          %v5256 = vpack.c.b16 %v5247, %v5246
          %v5257 = vpack.c.b16 %v5249, %v5248
          %5266 = vmatprep.subr.bf16.mxu0 0
          %5267 = vmatpush1.bf16.msra.mxu0 %v5250
          %5268 = vmatprep.subr.bf16.mxu0 0
          %5269 = vmatpush1.bf16.msra.mxu0 %v5251
          %5270 = vmatprep.subr.bf16.mxu0 0
          %5271 = vmatpush1.bf16.msra.mxu0 %v5252
          %5272 = vmatprep.subr.bf16.mxu0 0
          %5273 = vmatpush1.bf16.msra.mxu0 %v5253
          %5274 = vmatprep.subr.bf16.mxu0 0
          %5275 = vmatpush1.bf16.msra.mxu0 %v5254
          %5276 = vmatprep.subr.bf16.mxu0 0
          %5277 = vmatpush1.bf16.msra.mxu0 %v5255
          %5278 = vmatprep.subr.bf16.mxu0 0
          %5279 = vmatpush1.bf16.msra.mxu0 %v5256
          %5280 = vmatprep.subr.bf16.mxu0 0
          %5281 = vmatpush1.bf16.msra.mxu0 %v5257
          %5282 = vmatprep.subr.bf16.mxu0 0
          %5283 = vmatpush1.bf16.msra.mxu0 0
          %5284 = vmatprep.subr.bf16.mxu0 0
          %5285 = vmatpush1.bf16.msra.mxu0 0
          %5286 = vmatprep.subr.bf16.mxu0 0
          %5287 = vmatpush1.bf16.msra.mxu0 0
          %5288 = vmatprep.subr.bf16.mxu0 0
          %5289 = vmatpush1.bf16.msra.mxu0 0
          %5290 = vmatprep.subr.bf16.mxu0 0
          %5291 = vmatpush1.bf16.msra.mxu0 0
          %5292 = vmatprep.subr.bf16.mxu0 0
          %5293 = vmatpush1.bf16.msra.mxu0 0
          %5294 = vmatprep.subr.bf16.mxu0 0
          %5295 = vmatpush1.bf16.msra.mxu0 0
          %5296 = vmatprep.subr.bf16.mxu0 0
          %5297 = vmatpush1.bf16.msra.mxu0 0
          %5298 = vmatprep.mubr.bf16.mxu0 0
          %5299 = vmatmul.mubr.bf16.gmra.mrb[0].mxu0 %v5186
          %v5300 = vpop.f32.mrb[0].mxu0
          %v5301 = vadd.f32 0.0, %v5300
          %v5302 = vpop.f32.mrb[0].mxu0
          %v5303 = vpop.f32.mrb[0].mxu0
          %v5304 = vadd.f32 0.0, %v5303
          %v5305 = vpop.f32.mrb[0].mxu0
          %5306 = vmatprep.mubr.bf16.mxu0 0
          %5307 = vmatmul.mubr.bf16.gmra.mrb[0].mxu0 %v5187
          %v5308 = vpop.f32.mrb[0].mxu0
          %v5309 = vadd.f32 0.0, %v5308
          %v5310 = vpop.f32.mrb[0].mxu0
          %v5311 = vpop.f32.mrb[0].mxu0
          %v5312 = vadd.f32 0.0, %v5311
          %v5313 = vpop.f32.mrb[0].mxu0
          %5314 = vmatprep.mubr.bf16.mxu0 0
          %5315 = vmatmul.mubr.bf16.gmra.mrb[0].mxu0 %v5188
          %v5316 = vpop.f32.mrb[0].mxu0
          %v5317 = vadd.f32 0.0, %v5316
          %v5318 = vpop.f32.mrb[0].mxu0
          %v5319 = vpop.f32.mrb[0].mxu0
          %v5320 = vadd.f32 0.0, %v5319
          %v5321 = vpop.f32.mrb[0].mxu0
          %5322 = vmatprep.mubr.bf16.mxu0 0
          %5323 = vmatmul.mubr.bf16.gmra.mrb[0].mxu0 %v5189
          %v5324 = vpop.f32.mrb[0].mxu0
          %v5325 = vadd.f32 0.0, %v5324
          %v5326 = vpop.f32.mrb[0].mxu0
          %v5327 = vpop.f32.mrb[0].mxu0
          %v5328 = vadd.f32 0.0, %v5327
          %v5329 = vpop.f32.mrb[0].mxu0
          %5330 = vmatprep.mubr.bf16.mxu0 0
          %5331 = vmatmul.mubr.bf16.gmra.mrb[0].mxu0 %v5190
          %v5332 = vpop.f32.mrb[0].mxu0
          %v5333 = vadd.f32 0.0, %v5332
          %v5334 = vpop.f32.mrb[0].mxu0
          %v5335 = vpop.f32.mrb[0].mxu0
          %v5336 = vadd.f32 0.0, %v5335
          %v5337 = vpop.f32.mrb[0].mxu0
          %5338 = vmatprep.mubr.bf16.mxu0 0
          %5339 = vmatmul.mubr.bf16.gmra.mrb[0].mxu0 %v5191
          %v5340 = vpop.f32.mrb[0].mxu0
          %v5341 = vadd.f32 0.0, %v5340
          %v5342 = vpop.f32.mrb[0].mxu0
          %v5343 = vpop.f32.mrb[0].mxu0
          %v5344 = vadd.f32 0.0, %v5343
          %v5345 = vpop.f32.mrb[0].mxu0
          %5346 = vmatprep.mubr.bf16.mxu0 0
          %5347 = vmatmul.mubr.bf16.gmra.mrb[0].mxu0 %v5192
          %v5348 = vpop.f32.mrb[0].mxu0
          %v5349 = vadd.f32 0.0, %v5348
          %v5350 = vpop.f32.mrb[0].mxu0
          %v5351 = vpop.f32.mrb[0].mxu0
          %v5352 = vadd.f32 0.0, %v5351
          %v5353 = vpop.f32.mrb[0].mxu0
          %5354 = vmatprep.mubr.bf16.mxu0 0
          %5355 = vmatmul.mubr.bf16.gmra.mrb[0].mxu0 %v5193
          %v5356 = vpop.f32.mrb[0].mxu0
          %v5357 = vadd.f32 0.0, %v5356
          %v5358 = vpop.f32.mrb[0].mxu0
          %v5359 = vpop.f32.mrb[0].mxu0
          %v5360 = vadd.f32 0.0, %v5359
          %v5361 = vpop.f32.mrb[0].mxu0
          %5362 = vmatprep.mubr.bf16.mxu0 0
          %5363 = vmatmul.mubr.bf16.gmra.mrb[0].mxu0 %v5194
          %v5364 = vpop.f32.mrb[0].mxu0
          %v5365 = vadd.f32 0.0, %v5364
          %v5366 = vpop.f32.mrb[0].mxu0
          %v5367 = vpop.f32.mrb[0].mxu0
          %v5368 = vadd.f32 0.0, %v5367
          %v5369 = vpop.f32.mrb[0].mxu0
          %5370 = vmatprep.mubr.bf16.mxu0 0
          %5371 = vmatmul.mubr.bf16.gmra.mrb[0].mxu0 %v5195
          %v5372 = vpop.f32.mrb[0].mxu0
          %v5373 = vadd.f32 0.0, %v5372
          %v5374 = vpop.f32.mrb[0].mxu0
          %v5375 = vpop.f32.mrb[0].mxu0
          %v5376 = vadd.f32 0.0, %v5375
          %v5377 = vpop.f32.mrb[0].mxu0
          %5378 = vmatprep.mubr.bf16.mxu0 0
          %5379 = vmatmul.mubr.bf16.gmra.mrb[0].mxu0 %v5196
          %v5380 = vpop.f32.mrb[0].mxu0
          %v5381 = vadd.f32 0.0, %v5380
          %v5382 = vpop.f32.mrb[0].mxu0
          %v5383 = vpop.f32.mrb[0].mxu0
          %v5384 = vadd.f32 0.0, %v5383
          %v5385 = vpop.f32.mrb[0].mxu0
          %5386 = vmatprep.mubr.bf16.mxu0 0
          %5387 = vmatmul.mubr.bf16.gmra.mrb[0].mxu0 %v5197
          %v5388 = vpop.f32.mrb[0].mxu0
          %v5389 = vadd.f32 0.0, %v5388
          %v5390 = vpop.f32.mrb[0].mxu0
          %v5391 = vpop.f32.mrb[0].mxu0
          %v5392 = vadd.f32 0.0, %v5391
          %v5393 = vpop.f32.mrb[0].mxu0
          %5394 = vmatprep.mubr.bf16.mxu0 0
          %5395 = vmatmul.mubr.bf16.gmra.mrb[0].mxu0 %v5198
          %v5396 = vpop.f32.mrb[0].mxu0
          %v5397 = vadd.f32 0.0, %v5396
          %v5398 = vpop.f32.mrb[0].mxu0
          %v5399 = vpop.f32.mrb[0].mxu0
          %v5400 = vadd.f32 0.0, %v5399
          %v5401 = vpop.f32.mrb[0].mxu0
          %5402 = vmatprep.mubr.bf16.mxu0 0
          %5403 = vmatmul.mubr.bf16.gmra.mrb[0].mxu0 %v5199
          %v5404 = vpop.f32.mrb[0].mxu0
          %v5405 = vadd.f32 0.0, %v5404
          %v5406 = vpop.f32.mrb[0].mxu0
          %v5407 = vpop.f32.mrb[0].mxu0
          %v5408 = vadd.f32 0.0, %v5407
          %v5409 = vpop.f32.mrb[0].mxu0
          %5410 = vmatprep.mubr.bf16.mxu0 0
          %5411 = vmatmul.mubr.bf16.gmra.mrb[0].mxu0 %v5200
          %v5412 = vpop.f32.mrb[0].mxu0
          %v5413 = vadd.f32 0.0, %v5412
          %v5414 = vpop.f32.mrb[0].mxu0
          %v5415 = vpop.f32.mrb[0].mxu0
          %v5416 = vadd.f32 0.0, %v5415
          %v5417 = vpop.f32.mrb[0].mxu0
          %5418 = vmatprep.mubr.bf16.mxu0 0
          %5419 = vmatmul.mubr.bf16.gmra.mrb[0].mxu0 %v5201
          %v5420 = vpop.f32.mrb[0].mxu0
          %v5421 = vadd.f32 0.0, %v5420
          %v5422 = vpop.f32.mrb[0].mxu0
          %v5423 = vpop.f32.mrb[0].mxu0
          %v5424 = vadd.f32 0.0, %v5423
          %v5425 = vpop.f32.mrb[0].mxu0
          %5426 = vdwg.mxu0
          %v5427 = vld [vmem:[#allocation3 + $0x3] sm:$0x1]
          %v5428 = vlaneseq
          %v5429 = vshrl.u32 %v5428, 7
          %v5430 = vsub.s32 0, %v5429
          %v5431 = vrot.slane %v5427, %v5430
          %v5432 = vmul.f32 %v5301, %v5431
          %v5433 = vmul.f32 %v5304, %v5431
          %v5434 = vmul.f32 %v5309, %v5431
          %v5435 = vmul.f32 %v5312, %v5431
          %v5436 = vmul.f32 %v5317, %v5431
          %v5437 = vmul.f32 %v5320, %v5431
          %v5438 = vmul.f32 %v5325, %v5431
          %v5439 = vmul.f32 %v5328, %v5431
          %v5440 = vmul.f32 %v5333, %v5431
          %v5441 = vmul.f32 %v5336, %v5431
          %v5442 = vmul.f32 %v5341, %v5431
          %v5443 = vmul.f32 %v5344, %v5431
          %v5444 = vmul.f32 %v5349, %v5431
          %v5445 = vmul.f32 %v5352, %v5431
          %v5446 = vmul.f32 %v5357, %v5431
          %v5447 = vmul.f32 %v5360, %v5431
          %v5448 = vmul.f32 %v5365, %v5431
          %v5449 = vmul.f32 %v5368, %v5431
          %v5450 = vmul.f32 %v5373, %v5431
          %v5451 = vmul.f32 %v5376, %v5431
          %v5452 = vmul.f32 %v5381, %v5431
          %v5453 = vmul.f32 %v5384, %v5431
          %v5454 = vmul.f32 %v5389, %v5431
          %v5455 = vmul.f32 %v5392, %v5431
          %v5456 = vmul.f32 %v5397, %v5431
          %v5457 = vmul.f32 %v5400, %v5431
          %v5458 = vmul.f32 %v5405, %v5431
          %v5459 = vmul.f32 %v5408, %v5431
          %v5460 = vmul.f32 %v5413, %v5431
          %v5461 = vmul.f32 %v5416, %v5431
          %v5462 = vmul.f32 %v5421, %v5431
          %v5463 = vmul.f32 %v5424, %v5431
          %v5464 = vld [vmem:[#allocation4 + $0x3] sm:$0x1]
          %v5465 = vlaneseq
          %v5466 = vshrl.u32 %v5465, 7
          %v5467 = vsub.s32 0, %v5466
          %v5468 = vrot.slane %v5464, %v5467
          %v5469 = vadd.f32 %v5432, %v5468
          %v5470 = vadd.f32 %v5433, %v5468
          %v5471 = vadd.f32 %v5434, %v5468
          %v5472 = vadd.f32 %v5435, %v5468
          %v5473 = vadd.f32 %v5436, %v5468
          %v5474 = vadd.f32 %v5437, %v5468
          %v5475 = vadd.f32 %v5438, %v5468
          %v5476 = vadd.f32 %v5439, %v5468
          %v5477 = vadd.f32 %v5440, %v5468
          %v5478 = vadd.f32 %v5441, %v5468
          %v5479 = vadd.f32 %v5442, %v5468
          %v5480 = vadd.f32 %v5443, %v5468
          %v5481 = vadd.f32 %v5444, %v5468
          %v5482 = vadd.f32 %v5445, %v5468
          %v5483 = vadd.f32 %v5446, %v5468
          %v5484 = vadd.f32 %v5447, %v5468
          %v5485 = vadd.f32 %v5448, %v5468
          %v5486 = vadd.f32 %v5449, %v5468
          %v5487 = vadd.f32 %v5450, %v5468
          %v5488 = vadd.f32 %v5451, %v5468
          %v5489 = vadd.f32 %v5452, %v5468
          %v5490 = vadd.f32 %v5453, %v5468
          %v5491 = vadd.f32 %v5454, %v5468
          %v5492 = vadd.f32 %v5455, %v5468
          %v5493 = vadd.f32 %v5456, %v5468
          %v5494 = vadd.f32 %v5457, %v5468
          %v5495 = vadd.f32 %v5458, %v5468
          %v5496 = vadd.f32 %v5459, %v5468
          %v5497 = vadd.f32 %v5460, %v5468
          %v5498 = vadd.f32 %v5461, %v5468
          %v5499 = vadd.f32 %v5462, %v5468
          %v5500 = vadd.f32 %v5463, %v5468
          %v5501 = vunpack.c.l.bf16 %v4274
          %v5502 = vunpack.c.l.bf16 %v4275
          %v5503 = vunpack.c.l.bf16 %v4276
          %v5504 = vunpack.c.l.bf16 %v4277
          %v5505 = vunpack.c.l.bf16 %v4278
          %v5506 = vunpack.c.l.bf16 %v4279
          %v5507 = vunpack.c.l.bf16 %v4280
          %v5508 = vunpack.c.l.bf16 %v4281
          %v5509 = vunpack.c.l.bf16 %v4282
          %v5510 = vunpack.c.l.bf16 %v4283
          %v5511 = vunpack.c.l.bf16 %v4284
          %v5512 = vunpack.c.l.bf16 %v4285
          %v5513 = vunpack.c.l.bf16 %v4286
          %v5514 = vunpack.c.l.bf16 %v4287
          %v5515 = vunpack.c.l.bf16 %v4288
          %v5516 = vunpack.c.l.bf16 %v4289
          %v5517 = vunpack.c.l.bf16 %v4290
          %v5518 = vunpack.c.l.bf16 %v4291
          %v5519 = vunpack.c.l.bf16 %v4292
          %v5520 = vunpack.c.l.bf16 %v4293
          %v5521 = vunpack.c.l.bf16 %v4294
          %v5522 = vunpack.c.l.bf16 %v4295
          %v5523 = vunpack.c.l.bf16 %v4296
          %v5524 = vunpack.c.l.bf16 %v4297
          %v5525 = vunpack.c.l.bf16 %v4298
          %v5526 = vunpack.c.l.bf16 %v4299
          %v5527 = vunpack.c.l.bf16 %v4300
          %v5528 = vunpack.c.l.bf16 %v4301
          %v5529 = vunpack.c.l.bf16 %v4302
          %v5530 = vunpack.c.l.bf16 %v4303
          %v5531 = vunpack.c.l.bf16 %v4304
          %v5532 = vunpack.c.l.bf16 %v4305
          %v5533 = vadd.f32 %v5469, %v5501
          %v5534 = vadd.f32 %v5470, %v5502
          %v5535 = vadd.f32 %v5471, %v5503
          %v5536 = vadd.f32 %v5472, %v5504
          %v5537 = vadd.f32 %v5473, %v5505
          %v5538 = vadd.f32 %v5474, %v5506
          %v5539 = vadd.f32 %v5475, %v5507
          %v5540 = vadd.f32 %v5476, %v5508
          %v5541 = vadd.f32 %v5477, %v5509
          %v5542 = vadd.f32 %v5478, %v5510
          %v5543 = vadd.f32 %v5479, %v5511
          %v5544 = vadd.f32 %v5480, %v5512
          %v5545 = vadd.f32 %v5481, %v5513
          %v5546 = vadd.f32 %v5482, %v5514
          %v5547 = vadd.f32 %v5483, %v5515
          %v5548 = vadd.f32 %v5484, %v5516
          %v5549 = vadd.f32 %v5485, %v5517
          %v5550 = vadd.f32 %v5486, %v5518
          %v5551 = vadd.f32 %v5487, %v5519
          %v5552 = vadd.f32 %v5488, %v5520
          %v5553 = vadd.f32 %v5489, %v5521
          %v5554 = vadd.f32 %v5490, %v5522
          %v5555 = vadd.f32 %v5491, %v5523
          %v5556 = vadd.f32 %v5492, %v5524
          %v5557 = vadd.f32 %v5493, %v5525
          %v5558 = vadd.f32 %v5494, %v5526
          %v5559 = vadd.f32 %v5495, %v5527
          %v5560 = vadd.f32 %v5496, %v5528
          %v5561 = vadd.f32 %v5497, %v5529
          %v5562 = vadd.f32 %v5498, %v5530
          %v5563 = vadd.f32 %v5499, %v5531
          %v5564 = vadd.f32 %v5500, %v5532
          %v5565 = vmax.f32 %v5533, 0.0
          %v5566 = vmax.f32 %v5534, 0.0
          %v5567 = vmax.f32 %v5535, 0.0
          %v5568 = vmax.f32 %v5536, 0.0
          %v5569 = vmax.f32 %v5537, 0.0
          %v5570 = vmax.f32 %v5538, 0.0
          %v5571 = vmax.f32 %v5539, 0.0
          %v5572 = vmax.f32 %v5540, 0.0
          %v5573 = vmax.f32 %v5541, 0.0
          %v5574 = vmax.f32 %v5542, 0.0
          %v5575 = vmax.f32 %v5543, 0.0
          %v5576 = vmax.f32 %v5544, 0.0
          %v5577 = vmax.f32 %v5545, 0.0
          %v5578 = vmax.f32 %v5546, 0.0
          %v5579 = vmax.f32 %v5547, 0.0
          %v5580 = vmax.f32 %v5548, 0.0
          %v5581 = vmax.f32 %v5549, 0.0
          %v5582 = vmax.f32 %v5550, 0.0
          %v5583 = vmax.f32 %v5551, 0.0
          %v5584 = vmax.f32 %v5552, 0.0
          %v5585 = vmax.f32 %v5553, 0.0
          %v5586 = vmax.f32 %v5554, 0.0
          %v5587 = vmax.f32 %v5555, 0.0
          %v5588 = vmax.f32 %v5556, 0.0
          %v5589 = vmax.f32 %v5557, 0.0
          %v5590 = vmax.f32 %v5558, 0.0
          %v5591 = vmax.f32 %v5559, 0.0
          %v5592 = vmax.f32 %v5560, 0.0
          %v5593 = vmax.f32 %v5561, 0.0
          %v5594 = vmax.f32 %v5562, 0.0
          %v5595 = vmax.f32 %v5563, 0.0
          %v5596 = vmax.f32 %v5564, 0.0
          %5597 = vst [vmem:[%s343] sm:$0xff] %v5565
          %5598 = vst [vmem:[%s343 + $0x8] sm:$0xff] %v5566
          %5599 = vst [vmem:[%s343 + $0x10] sm:$0xff] %v5567
          %5600 = vst [vmem:[%s343 + $0x18] sm:$0xff] %v5568
          %5601 = vst [vmem:[%s343 + $0x20] sm:$0xff] %v5569
          %5602 = vst [vmem:[%s343 + $0x28] sm:$0xff] %v5570
          %5603 = vst [vmem:[%s343 + $0x30] sm:$0xff] %v5571
          %5604 = vst [vmem:[%s343 + $0x38] sm:$0xff] %v5572
          %5605 = vst [vmem:[%s343 + $0x40] sm:$0xff] %v5573
          %5606 = vst [vmem:[%s343 + $0x48] sm:$0xff] %v5574
          %5607 = vst [vmem:[%s343 + $0x50] sm:$0xff] %v5575
          %5608 = vst [vmem:[%s343 + $0x58] sm:$0xff] %v5576
          %5609 = vst [vmem:[%s343 + $0x60] sm:$0xff] %v5577
          %5610 = vst [vmem:[%s343 + $0x68] sm:$0xff] %v5578
          %5611 = vst [vmem:[%s343 + $0x70] sm:$0xff] %v5579
          %5612 = vst [vmem:[%s343 + $0x78] sm:$0xff] %v5580
          %5613 = vst [vmem:[%s343 + $0x80] sm:$0xff] %v5581
          %5614 = vst [vmem:[%s343 + $0x88] sm:$0xff] %v5582
          %5615 = vst [vmem:[%s343 + $0x90] sm:$0xff] %v5583
          %5616 = vst [vmem:[%s343 + $0x98] sm:$0xff] %v5584
          %5617 = vst [vmem:[%s343 + $0xa0] sm:$0xff] %v5585
          %5618 = vst [vmem:[%s343 + $0xa8] sm:$0xff] %v5586
          %5619 = vst [vmem:[%s343 + $0xb0] sm:$0xff] %v5587
          %5620 = vst [vmem:[%s343 + $0xb8] sm:$0xff] %v5588
          %5621 = vst [vmem:[%s343 + $0xc0] sm:$0xff] %v5589
          %5622 = vst [vmem:[%s343 + $0xc8] sm:$0xff] %v5590
          %5623 = vst [vmem:[%s343 + $0xd0] sm:$0xff] %v5591
          %5624 = vst [vmem:[%s343 + $0xd8] sm:$0xff] %v5592
          %5625 = vst [vmem:[%s343 + $0xe0] sm:$0xff] %v5593
          %5626 = vst [vmem:[%s343 + $0xe8] sm:$0xff] %v5594
          %5627 = vst [vmem:[%s343 + $0xf0] sm:$0xff] %v5595
          %5628 = vst [vmem:[%s343 + $0xf8] sm:$0xff] %v5596
        $region104: #{tpu_custom_call.1} parent=43 // pred_fallthru
          _
        %s5629 = sand.u32 %s180, 1
        %s5630 = scalar_lea.sflag [#allocation7], %s5629
        %s5631 = sand.u32 %s180, 1
        %s5632 = smul.addr %s5631, 256
        %s5633 = scalar_lea.vmem [#allocation14], %s5632
        // Predicated region
        $region105: #{tpu_custom_call.1} parent=43 // pred_check
          %p5634 = pneg %p190
        $region106: #{tpu_custom_call.1} parent=43 // pred_check_branch
          %5636 = sbr.rel (%p5634) target = $region108
        $region107: #{tpu_custom_call.1} parent=43 // pred_region
          %p5637 = scmp.eq.s32.totalorder %s29, 4
          %s5638 = scalar_select %p5637, %s30, 0
          %s5639 = smul.u32 32, %s5638
          %s5641 = ssub.s32 4096, 4096
          %5642 = vsyncadd %s5630, %s5641
          %s5643 = smul.addr %s5639, 128
          %s5644 = scalar_lea.hbm %s6, %s5643
          %s5645 = sshll.u32 %s5633, 4
          %s5646 = int_to_ptr.vmem [resolvable:$true] %s5645
          %5651 = dma.vmem_to_hbm [thread:$0]  %s5646, 4096, %s5644, %s5630, 128, 128, 8
        $region108: #{tpu_custom_call.1} parent=43 // pred_fallthru
          _
      $region44: #{tpu_custom_call.1} parent=5 // pred_fallthru
        _
      %p5652 = scmp.le.s32.totalorder 2, %s20
      // Predicated region
      $region109: #{tpu_custom_call.1} parent=5 // pred_check
        %p5653 = pneg %p5652
      $region110: #{tpu_custom_call.1} parent=5 // pred_check_branch
        %5655 = sbr.rel (%p5653) target = $region112
      $region111: #{tpu_custom_call.1} parent=5 // pred_region
        %s5656 = ssub.s32 %s20, 2
        // Predicated region
        $region113: #{tpu_custom_call.1} parent=111 // pred_check
          %p5657 = pneg %p196
        $region114: #{tpu_custom_call.1} parent=111 // pred_check_branch
          %5659 = sbr.rel (%p5657) target = $region116
        $region115: #{tpu_custom_call.1} parent=111 // pred_region
          %s5660 = sand.u32 %s181, 1
          %s5661 = scalar_lea.sflag [#allocation7], %s5660
          %s5662 = sand.u32 %s181, 1
          %s5663 = smul.addr %s5662, 256
          %s5664 = scalar_lea.vmem [#allocation14], %s5663
          %5665 = dma.done %s5661, 4096
        $region116: #{tpu_custom_call.1} parent=111 // pred_fallthru
          _
      $region112: #{tpu_custom_call.1} parent=5 // pred_fallthru
        _
    $region6: #{tpu_custom_call.1} parent=1 // loop_footer
      %s24 = sadd.s32 1, %s20
    $region7: #{tpu_custom_call.1} parent=1 // loop_footer_branch
      %19 = sbr.rel target = $region3
    $region8: #{tpu_custom_call.1} parent=1 // loop_exit
      _
    %5666 = vsyncpa [#allocation6], 1
    %s5667 = scalar_lea.sflag [#allocation6], 1
    %5668 = vsyncpa %s5667, 1
    %5669 = vsyncpa [#allocation9], 1
    %5670 = vsyncpa [#allocation12], 1
    %5671 = vsyncpa [#allocation7], 1
    %s5672 = scalar_lea.sflag [#allocation7], 1
    %5673 = vsyncpa %s5672, 1

</llo_original>
